<compile_context>
chip_gen: v6e
topology: v6e:2x2x1
jax: 0.10.0
libtpu: 0.0.40
codegen_flags: <defaults>
</compile_context>

<pallas_src>
import jax
import jax.numpy as jnp
from jax import lax
from jax.experimental import pallas as pl
from jax.experimental.pallas import tpu as pltpu

KSIZE = 4          # phase decomposition hard-codes kernel=4, stride=2
STRIDE = 2
BN_EPS = 1e-5


def _elu(y):
    return jnp.where(y > 0.0, y, jnp.exp(jnp.minimum(y, 0.0)) - 1.0)


# ---------------------------------------------------------------------------
# In-kernel helpers
# ---------------------------------------------------------------------------
def _taps(xt_ref, xb_ref):
    """Four subpixel taps (t = 2a+b order) for one output block-row.

    xt_ref: padded row r   (original row r-1)   shape (Wp, Cin) bf16
    xb_ref: padded row r+1 (original row r)     shape (Wp, Cin) bf16
    Returns four (S, Cin) bf16 matrices where S = Wp - 1.
    (Slices are taken in f32 to keep the sublane-offset relayout trivial,
     then cast back to bf16 for the MXU.)
    """
    xt = xt_ref[...].astype(jnp.float32)
    xb = xb_ref[...].astype(jnp.float32)
    return (xb[1:, :].astype(jnp.bfloat16),    # (a=0, b=0): x[r,   s]
            xb[:-1, :].astype(jnp.bfloat16),   # (a=0, b=1): x[r,   s-1]
            xt[1:, :].astype(jnp.bfloat16),    # (a=1, b=0): x[r-1, s]
            xt[:-1, :].astype(jnp.bfloat16))   # (a=1, b=1): x[r-1, s-1]


def _phase_row(taps, w_ref, shift, ph):
    """One output row (phase ph): 4 accumulating matmuls -> +shift -> ELU."""
    acc = jnp.dot(taps[0], w_ref[ph, 0], preferred_element_type=jnp.float32)
    acc += jnp.dot(taps[1], w_ref[ph, 1], preferred_element_type=jnp.float32)
    acc += jnp.dot(taps[2], w_ref[ph, 2], preferred_element_type=jnp.float32)
    acc += jnp.dot(taps[3], w_ref[ph, 3], preferred_element_type=jnp.float32)
    return _elu(acc + shift)                          # (S, 2*Cout) f32


# ---------------------------------------------------------------------------
# Pallas kernels
# ---------------------------------------------------------------------------
def _deconv_block_kernel(xt_ref, xb_ref, w_ref, shift_ref, skip_ref, o_ref):
    # deconv (subpixel matmuls) -> +shift (BN+bias) -> ELU -> +skip, bf16 out.
    taps = _taps(xt_ref, xb_ref)
    shift = shift_ref[...]
    for ph in range(2):
        y = _phase_row(taps, w_ref, shift, ph)
        o_ref[ph] = (y + skip_ref[ph].astype(jnp.float32)).astype(o_ref.dtype)


def _deconv_head_fusion_kernel(xt_ref, xb_ref, w_ref, shift_ref,
                               wa_ref, ba_ref, wr_ref, br_ref, img_ref,
                               map_ref, out_ref):
    # last block + fused head: deconv/BN/ELU -> output_map,
    # then per-phase block-diagonal 1x1 heads: att = sigmoid(3*(y@wa)),
    # rgb = y@wr, out = att*image + (1-att)*rgb.
    taps = _taps(xt_ref, xb_ref)
    shift = shift_ref[...]
    wa, ba = wa_ref[...], ba_ref[...]
    wr, br = wr_ref[...], br_ref[...]
    for ph in range(2):
        y = _phase_row(taps, w_ref, shift, ph)        # (S, 2*Cout) f32
        map_ref[ph] = y
        logit = jnp.dot(y, wa, preferred_element_type=jnp.float32) + ba
        att = 1.0 / (1.0 + jnp.exp(-3.0 * logit))     # (S, 6)
        rgb = jnp.dot(y, wr, preferred_element_type=jnp.float32) + br
        out_ref[ph] = att * img_ref[ph] + (1.0 - att) * rgb


def _deconv_head_rgb_kernel(xt_ref, xb_ref, w_ref, shift_ref, wr_ref, br_ref,
                            map_ref, out_ref):
    # last block + to_rgb only (no image fusion)
    taps = _taps(xt_ref, xb_ref)
    shift = shift_ref[...]
    wr, br = wr_ref[...], br_ref[...]
    for ph in range(2):
        y = _phase_row(taps, w_ref, shift, ph)
        map_ref[ph] = y
        out_ref[ph] = jnp.dot(y, wr, preferred_element_type=jnp.float32) + br


# ---------------------------------------------------------------------------
# pallas_call wrappers
# ---------------------------------------------------------------------------
def _block_cost(N, R, S, Cin, C2, extra_flops=0, extra_bytes=0, extra_trans=0):
    flops = 16 * N * R * S * Cin * C2 + extra_flops
    bytes_accessed = (2 * N * (R + 1) * (S + 1) * Cin * 2     # xp read twice (bf16)
                      + 8 * Cin * C2 * 2 + C2 * 4             # folded weight + shift
                      + extra_bytes)
    transcendentals = 2 * N * R * S * C2 + extra_trans
    return pl.CostEstimate(flops=flops, transcendentals=transcendentals,
                           bytes_accessed=bytes_accessed)


def _run_deconv_block(xp, w, shift, skip_packed):
    """xp: (N, Hp, Wp, Cin) bf16 halo-padded input; skip_packed: (N, 2R, S, 2*Cout) bf16."""
    N, Hp, Wp, Cin = xp.shape
    R, S = Hp - 1, Wp - 1
    C2 = w.shape[-1]
    cost = _block_cost(N, R, S, Cin, C2,
                       extra_bytes=2 * N * 2 * R * S * C2 * 2)    # skip + out (bf16)
    return pl.pallas_call(
        _deconv_block_kernel,
        out_shape=jax.ShapeDtypeStruct((N, 2 * R, S, C2), jnp.bfloat16),
        grid=(N, R),
        in_specs=[
            pl.BlockSpec((None, None, Wp, Cin), lambda n, i: (n, i, 0, 0)),
            pl.BlockSpec((None, None, Wp, Cin), lambda n, i: (n, i + 1, 0, 0)),
            pl.BlockSpec((2, 4, Cin, C2), lambda n, i: (0, 0, 0, 0)),
            pl.BlockSpec((1, C2), lambda n, i: (0, 0)),
            pl.BlockSpec((None, 2, S, C2), lambda n, i: (n, i, 0, 0)),
        ],
        out_specs=pl.BlockSpec((None, 2, S, C2), lambda n, i: (n, i, 0, 0)),
        compiler_params=pltpu.CompilerParams(
            dimension_semantics=("parallel", "parallel")),
        cost_estimate=cost,
    )(xp, xp, w, shift, skip_packed)


def _run_deconv_head(xp, w, shift, wr6, br6, wa6=None, ba6=None, img_packed=None):
    """Last block + fused head.  Returns (map_packed f32, rgb_packed f32)."""
    N, Hp, Wp, Cin = xp.shape
    R, S = Hp - 1, Wp - 1
    C2 = w.shape[-1]
    fusion = img_packed is not None
    head_flops = (2 if fusion else 1) * 4 * N * R * S * C2 * 6
    head_bytes = N * 2 * R * S * (C2 * 4 + 6 * 4 + (6 * 4 if fusion else 0))
    cost = _block_cost(N, R, S, Cin, C2, extra_flops=head_flops,
                       extra_bytes=head_bytes,
                       extra_trans=N * 2 * R * S * 6)

    base_specs = [
        pl.BlockSpec((None, None, Wp, Cin), lambda n, i: (n, i, 0, 0)),
        pl.BlockSpec((None, None, Wp, Cin), lambda n, i: (n, i + 1, 0, 0)),
        pl.BlockSpec((2, 4, Cin, C2), lambda n, i: (0, 0, 0, 0)),
        pl.BlockSpec((1, C2), lambda n, i: (0, 0)),
    ]
    hw_spec = pl.BlockSpec((C2, 6), lambda n, i: (0, 0))
    hb_spec = pl.BlockSpec((1, 6), lambda n, i: (0, 0))
    img_spec = pl.BlockSpec((None, 2, S, 6), lambda n, i: (n, i, 0, 0))

    out_shape = (jax.ShapeDtypeStruct((N, 2 * R, S, C2), jnp.float32),
                 jax.ShapeDtypeStruct((N, 2 * R, S, 6), jnp.float32))
    out_specs = (pl.BlockSpec((None, 2, S, C2), lambda n, i: (n, i, 0, 0)),
                 pl.BlockSpec((None, 2, S, 6), lambda n, i: (n, i, 0, 0)))

    if fusion:
        kernel = _deconv_head_fusion_kernel
        in_specs = base_specs + [hw_spec, hb_spec, hw_spec, hb_spec, img_spec]
        args = (xp, xp, w, shift, wa6, ba6, wr6, br6, img_packed)
    else:
        kernel = _deconv_head_rgb_kernel
        in_specs = base_specs + [hw_spec, hb_spec]
        args = (xp, xp, w, shift, wr6, br6)

    return pl.pallas_call(
        kernel, out_shape=out_shape, grid=(N, R),
        in_specs=in_specs, out_specs=out_specs,
        compiler_params=pltpu.CompilerParams(
            dimension_semantics=("parallel", "parallel")),
        cost_estimate=cost,
    )(*args)


# ---------------------------------------------------------------------------
# Trace-time parameter folding & free layout reshapes
# ---------------------------------------------------------------------------
def _fold_block_params(bp):
    """Fold eval-mode BN into the deconv weight; returns (w (2,4,Cin,2Cout) bf16,
    shift (1,2Cout) f32).  Weight layout: [ph, 2a+b, ci, pw*Cout+co]."""
    Cin, Cout = bp["weight"].shape[0], bp["weight"].shape[1]
    scale = bp["gamma"] / jnp.sqrt(bp["running_var"] + BN_EPS)       # (Cout,)
    w6 = bp["weight"].reshape(Cin, Cout, 2, 2, 2, 2)                 # (ci,co,a,ph,b,pw)
    w = jnp.transpose(w6, (3, 2, 4, 0, 5, 1)).reshape(2, 4, Cin, 2 * Cout)
    w = (w * jnp.tile(scale, 2)[None, None, None, :]).astype(jnp.bfloat16)
    shift = (bp["bias"] - bp["running_mean"]) * scale + bp["beta"]
    shift = jnp.tile(shift, 2).reshape(1, 2 * Cout).astype(jnp.float32)
    return w, shift


def _pack_w(x_nhwc):
    """(N, H2, 2S, C) -> (N, H2, S, 2C): contiguity-preserving (free) reshape."""
    N, H2, W2, C = x_nhwc.shape
    return x_nhwc.reshape(N, H2, W2 // 2, 2 * C)


def _unpack_w(x_packed, C):
    """(N, H2, S, 2C) -> (N, H2, 2S, C): contiguity-preserving (free) reshape."""
    N, H2, S, _ = x_packed.shape
    return x_packed.reshape(N, H2, 2 * S, C)


# ---------------------------------------------------------------------------
# Parameters (deterministic synthetic init, mirrors DeconvDecoder.__init__)
# ---------------------------------------------------------------------------
def init_params(key, depth, encoder_blocks_channels):
    chans = list(encoder_blocks_channels)
    in_ch = chans.pop()
    out_ch = in_ch
    blocks = []
    keys = jax.random.split(key, depth + 1)
    for d in range(depth):
        out_ch = chans.pop() if chans else in_ch // 2
        kw, kb, kg, kbeta, km, kv = jax.random.split(keys[d], 6)
        blocks.append(dict(
            weight=0.1 * jax.random.normal(kw, (in_ch, out_ch, KSIZE, KSIZE), jnp.float32),
            bias=0.1 * jax.random.normal(kb, (out_ch,), jnp.float32),
            gamma=1.0 + 0.1 * jax.random.normal(kg, (out_ch,), jnp.float32),
            beta=0.1 * jax.random.normal(kbeta, (out_ch,), jnp.float32),
            running_mean=0.1 * jax.random.normal(km, (out_ch,), jnp.float32),
            running_var=1.0 + 0.1 * jax.random.uniform(kv, (out_ch,), jnp.float32),
        ))
        in_ch = out_ch
    ka, kab, kr, krb = jax.random.split(keys[depth], 4)
    return dict(
        blocks=blocks,
        to_rgb_w=0.1 * jax.random.normal(kr, (3, out_ch, 1, 1), jnp.float32),
        to_rgb_b=0.1 * jax.random.normal(krb, (3,), jnp.float32),
        conv_attention_w=0.1 * jax.random.normal(ka, (1, out_ch, 1, 1), jnp.float32),
        conv_attention_b=0.1 * jax.random.normal(kab, (1,), jnp.float32),
    )


# ---------------------------------------------------------------------------
# DeconvDecoder.forward (Pallas-backed)
# ---------------------------------------------------------------------------
def deconv_decoder_forward(params, encoder_outputs, image, image_fusion=False,
                           mask=None):
    blocks = params["blocks"]
    n_blocks = len(blocks)
    feat = jnp.transpose(encoder_outputs[0], (0, 2, 3, 1)).astype(jnp.bfloat16)
    skips = [jnp.transpose(e, (0, 2, 3, 1)) for e in encoder_outputs[1:]]

    final = out_map = None
    for idx, bp in enumerate(blocks):
        Cout = bp["weight"].shape[1]
        pad = 0 if idx == 0 else 1          # DeconvDecoder: padding=0 for d==0 else 1
        N, H, W, _ = feat.shape
        R, S = H + 1, W + 1                  # full (uncropped) output block grid
        xp = jnp.pad(feat, ((0, 0), (1, 1), (1, 1), (0, 0)))     # bf16 halo
        w, shift = _fold_block_params(bp)

        if idx < n_blocks - 1:
            skip = skips[idx].astype(jnp.bfloat16)
            if pad:
                skip = jnp.pad(skip, ((0, 0), (pad, pad), (pad, pad), (0, 0)))
            out_packed = _run_deconv_block(xp, w, shift, _pack_w(skip))
            out_nhwc = _unpack_w(out_packed, Cout)               # free reshape
            feat = out_nhwc[:, pad:2 * R - pad, pad:2 * S - pad, :]
        else:
            # per-phase block-diagonal head weights (to_rgb / conv_attention 1x1)
            eye2 = jnp.eye(2, dtype=jnp.float32)
            wr = params["to_rgb_w"].reshape(3, Cout)
            wr6 = jnp.einsum("pq,oc->pcqo", eye2, wr).reshape(2 * Cout, 6)
            br6 = jnp.tile(params["to_rgb_b"], 2).reshape(1, 6)
            if image_fusion:
                wa = params["conv_attention_w"].reshape(Cout)
                ba = params["conv_attention_b"].reshape(())
                wa6 = jnp.repeat(jnp.einsum("pq,c->pcq", eye2, wa), 3, axis=-1)
                wa6 = wa6.reshape(2 * Cout, 6)
                ba6 = jnp.full((1, 6), ba, jnp.float32)
                img = jnp.transpose(image, (0, 2, 3, 1)).astype(jnp.float32)
                if pad:
                    img = jnp.pad(img, ((0, 0), (pad, pad), (pad, pad), (0, 0)))
                map_packed, rgb_packed = _run_deconv_head(
                    xp, w, shift, wr6, br6, wa6=wa6, ba6=ba6,
                    img_packed=_pack_w(img))
            else:
                map_packed, rgb_packed = _run_deconv_head(xp, w, shift, wr6, br6)
            map_nhwc = _unpack_w(map_packed, Cout)[:, pad:2 * R - pad,
                                                   pad:2 * S - pad, :]
            rgb_nhwc = _unpack_w(rgb_packed, 3)[:, pad:2 * R - pad,
                                                pad:2 * S - pad, :]
            out_map = jnp.transpose(map_nhwc, (0, 3, 1, 2))
            final = jnp.transpose(rgb_nhwc, (0, 3, 1, 2))
    return final, out_map


# ---------------------------------------------------------------------------
# Pure-JAX reference (independent math path: lax dilated conv) for validation
# ---------------------------------------------------------------------------
def reference_forward(params, encoder_outputs, image, image_fusion):
    out = encoder_outputs[0]
    blocks = params["blocks"]
    for idx, bp in enumerate(blocks):
        pad = 0 if idx == 0 else 1
        w = bp["weight"]
        k = w.shape[2]
        w_conv = jnp.transpose(w[:, :, ::-1, ::-1], (1, 0, 2, 3))    # (Cout, Cin, k, k)
        y = lax.conv_general_dilated(
            out, w_conv, window_strides=(1, 1),
            padding=[(k - 1 - pad,) * 2] * 2,
            lhs_dilation=(STRIDE, STRIDE),
            dimension_numbers=("NCHW", "OIHW", "NCHW"))
        y = y + bp["bias"].reshape(1, -1, 1, 1)
        scale = (bp["gamma"] / jnp.sqrt(bp["running_var"] + BN_EPS)).reshape(1, -1, 1, 1)
        y = (y - bp["running_mean"].reshape(1, -1, 1, 1)) * scale + bp["beta"].reshape(1, -1, 1, 1)
        y = _elu(y)
        if idx < len(blocks) - 1:
            y = y + encoder_outputs[idx + 1]
        out = y
    output_map = out
    Cl = out.shape[1]
    rgb = jnp.einsum("nchw,oc->nohw", out, params["to_rgb_w"].reshape(3, Cl)) \
        + params["to_rgb_b"].reshape(1, 3, 1, 1)
    if image_fusion:
        att = jax.nn.sigmoid(3.0 * (jnp.einsum("nchw,oc->nohw", out,
                                               params["conv_attention_w"].reshape(1, Cl))
                                    + params["conv_attention_b"].reshape(1, 1, 1, 1)))
        final = att * image + (1.0 - att) * rgb
    else:
        final = rgb
    return final, output_map


# ---------------------------------------------------------------------------
if __name__ == "__main__":
    key = jax.random.PRNGKey(0)
    k_params, k_e0, k_e1, k_img = jax.random.split(key, 4)

    depth = 2
    encoder_blocks_channels = [8, 16]     # popped: in=16, block0 16->8, block1 8->4
    params = init_params(k_params, depth, encoder_blocks_channels)

    # encoder_outputs[0]: deepest feature; encoder_outputs[1]: skip for block0 output
    enc0 = jax.random.normal(k_e0, (2, 16, 7, 7), jnp.float32)   # -> (2,8,16,16) after block0
    enc1 = jax.random.normal(k_e1, (2, 8, 16, 16), jnp.float32)  # skip connection
    image = jax.random.normal(k_img, (2, 3, 32, 32), jnp.float32)

    fwd = jax.jit(deconv_decoder_forward, static_argnames=("image_fusion",))

    # --- image_fusion = True path ---
    out, out_map = fwd(params, [enc0, enc1], image, image_fusion=True)
    out, out_map = jax.block_until_ready((out, out_map))
    assert out.shape == (2, 3, 32, 32), out.shape
    assert out_map.shape == (2, 4, 32, 32), out_map.shape
    ref_out, ref_map = reference_forward(params, [enc0, enc1], image, True)
    assert jnp.allclose(out_map, ref_map, atol=5e-2, rtol=5e-2), "output_map mismatch"
    assert jnp.allclose(out, ref_out, atol=5e-2, rtol=5e-2), "output mismatch"

    # --- image_fusion = False path (to_rgb only) ---
    out2, map2 = fwd(params, [enc0, enc1], image, image_fusion=False)
    out2, map2 = jax.block_until_ready((out2, map2))
    ref2, refmap2 = reference_forward(params, [enc0, enc1], image, False)
    assert jnp.allclose(map2, refmap2, atol=5e-2, rtol=5e-2), "output_map mismatch (no fusion)"
    assert jnp.allclose(out2, ref2, atol=5e-2, rtol=5e-2), "output mismatch (no fusion)"

    print("KERNEL_OK")
</pallas_src>

<mosaic_0001>
module attributes {stable_mosaic.version = 11 : i64} {
  func.func @_deconv_block_kernel(%arg0: i32, %arg1: i32, %arg2: memref<1x1x9x16xbf16, #tpu.memory_space<vmem>>, %arg3: memref<1x1x9x16xbf16, #tpu.memory_space<vmem>>, %arg4: memref<2x4x16x16xbf16, #tpu.memory_space<vmem>>, %arg5: memref<1x16xf32, #tpu.memory_space<vmem>>, %arg6: memref<1x2x8x16xbf16, #tpu.memory_space<vmem>>, %arg7: memref<1x2x8x16xbf16, #tpu.memory_space<vmem>>) attributes {dimension_semantics = [#tpu.dimension_semantics<parallel>, #tpu.dimension_semantics<parallel>], iteration_bounds = array<i64: 2, 8>, scalar_prefetch = 0 : i64, scratch_operands = 0 : i64, tpu.core_type = #tpu.core_type<tc>, window_params = [{transform_indices = @transform_0, window_bounds = array<i64: 1, 1, 9, 16>}, {transform_indices = @transform_1, window_bounds = array<i64: 1, 1, 9, 16>}, {pipeline_mode = #tpu.pipeline_mode<synchronous>, transform_indices = @transform_2, window_bounds = array<i64: 2, 4, 16, 16>}, {pipeline_mode = #tpu.pipeline_mode<synchronous>, transform_indices = @transform_3, window_bounds = array<i64: 1, 16>}, {transform_indices = @transform_4, window_bounds = array<i64: 1, 2, 8, 16>}, {transform_indices = @transform_5, window_bounds = array<i64: 1, 2, 8, 16>}]} {
    %c0 = arith.constant 0 : index
    %c0_0 = arith.constant 0 : index
    %c0_1 = arith.constant 0 : index
    %c0_2 = arith.constant 0 : index
    %0 = vector.load %arg2[%c0, %c0_0, %c0_1, %c0_2] : memref<1x1x9x16xbf16, #tpu.memory_space<vmem>>, vector<1x1x9x16xbf16>
    %1 = vector.shape_cast %0 : vector<1x1x9x16xbf16> to vector<9x16xbf16>
    %2 = arith.extf %1 : vector<9x16xbf16> to vector<9x16xf32>
    %c0_3 = arith.constant 0 : index
    %c0_4 = arith.constant 0 : index
    %c0_5 = arith.constant 0 : index
    %c0_6 = arith.constant 0 : index
    %3 = vector.load %arg3[%c0_3, %c0_4, %c0_5, %c0_6] : memref<1x1x9x16xbf16, #tpu.memory_space<vmem>>, vector<1x1x9x16xbf16>
    %4 = vector.shape_cast %3 : vector<1x1x9x16xbf16> to vector<9x16xbf16>
    %5 = arith.extf %4 : vector<9x16xbf16> to vector<9x16xf32>
    %6 = vector.extract_strided_slice %5 {offsets = [1, 0], sizes = [8, 16], strides = [1, 1]} : vector<9x16xf32> to vector<8x16xf32>
    %7 = arith.truncf %6 : vector<8x16xf32> to vector<8x16xbf16>
    %8 = vector.extract_strided_slice %5 {offsets = [0, 0], sizes = [8, 16], strides = [1, 1]} : vector<9x16xf32> to vector<8x16xf32>
    %9 = arith.truncf %8 : vector<8x16xf32> to vector<8x16xbf16>
    %10 = vector.extract_strided_slice %2 {offsets = [1, 0], sizes = [8, 16], strides = [1, 1]} : vector<9x16xf32> to vector<8x16xf32>
    %11 = arith.truncf %10 : vector<8x16xf32> to vector<8x16xbf16>
    %12 = vector.extract_strided_slice %2 {offsets = [0, 0], sizes = [8, 16], strides = [1, 1]} : vector<9x16xf32> to vector<8x16xf32>
    %13 = arith.truncf %12 : vector<8x16xf32> to vector<8x16xbf16>
    %c0_7 = arith.constant 0 : index
    %c0_8 = arith.constant 0 : index
    %14 = vector.load %arg5[%c0_7, %c0_8] : memref<1x16xf32, #tpu.memory_space<vmem>>, vector<1x16xf32>
    %c0_9 = arith.constant 0 : index
    %c0_10 = arith.constant 0 : index
    %c0_11 = arith.constant 0 : index
    %c0_12 = arith.constant 0 : index
    %15 = vector.load %arg4[%c0_9, %c0_10, %c0_11, %c0_12] : memref<2x4x16x16xbf16, #tpu.memory_space<vmem>>, vector<1x1x16x16xbf16>
    %16 = vector.shape_cast %15 : vector<1x1x16x16xbf16> to vector<16x16xbf16>
    %cst = arith.constant dense<0.000000e+00> : vector<8x16xf32>
    %17 = tpu.matmul %7, %16, %cst {dimension_numbers = #tpu.dot_dimension_numbers<[1], [0], [0], [1], [0, 0, 1, 1], [], []>} : vector<8x16xbf16>, vector<16x16xbf16>, vector<8x16xf32> -> vector<8x16xf32>
    %c0_13 = arith.constant 0 : index
    %c1 = arith.constant 1 : index
    %c0_14 = arith.constant 0 : index
    %c0_15 = arith.constant 0 : index
    %18 = vector.load %arg4[%c0_13, %c1, %c0_14, %c0_15] : memref<2x4x16x16xbf16, #tpu.memory_space<vmem>>, vector<1x1x16x16xbf16>
    %19 = vector.shape_cast %18 : vector<1x1x16x16xbf16> to vector<16x16xbf16>
    %cst_16 = arith.constant dense<0.000000e+00> : vector<8x16xf32>
    %20 = tpu.matmul %9, %19, %cst_16 {dimension_numbers = #tpu.dot_dimension_numbers<[1], [0], [0], [1], [0, 0, 1, 1], [], []>} : vector<8x16xbf16>, vector<16x16xbf16>, vector<8x16xf32> -> vector<8x16xf32>
    %21 = arith.addf %17, %20 : vector<8x16xf32>
    %c0_17 = arith.constant 0 : index
    %c2 = arith.constant 2 : index
    %c0_18 = arith.constant 0 : index
    %c0_19 = arith.constant 0 : index
    %22 = vector.load %arg4[%c0_17, %c2, %c0_18, %c0_19] : memref<2x4x16x16xbf16, #tpu.memory_space<vmem>>, vector<1x1x16x16xbf16>
    %23 = vector.shape_cast %22 : vector<1x1x16x16xbf16> to vector<16x16xbf16>
    %cst_20 = arith.constant dense<0.000000e+00> : vector<8x16xf32>
    %24 = tpu.matmul %11, %23, %cst_20 {dimension_numbers = #tpu.dot_dimension_numbers<[1], [0], [0], [1], [0, 0, 1, 1], [], []>} : vector<8x16xbf16>, vector<16x16xbf16>, vector<8x16xf32> -> vector<8x16xf32>
    %25 = arith.addf %21, %24 : vector<8x16xf32>
    %c0_21 = arith.constant 0 : index
    %c3 = arith.constant 3 : index
    %c0_22 = arith.constant 0 : index
    %c0_23 = arith.constant 0 : index
    %26 = vector.load %arg4[%c0_21, %c3, %c0_22, %c0_23] : memref<2x4x16x16xbf16, #tpu.memory_space<vmem>>, vector<1x1x16x16xbf16>
    %27 = vector.shape_cast %26 : vector<1x1x16x16xbf16> to vector<16x16xbf16>
    %cst_24 = arith.constant dense<0.000000e+00> : vector<8x16xf32>
    %28 = tpu.matmul %13, %27, %cst_24 {dimension_numbers = #tpu.dot_dimension_numbers<[1], [0], [0], [1], [0, 0, 1, 1], [], []>} : vector<8x16xbf16>, vector<16x16xbf16>, vector<8x16xf32> -> vector<8x16xf32>
    %29 = arith.addf %25, %28 : vector<8x16xf32>
    %30 = vector.broadcast %14 : vector<1x16xf32> to vector<8x16xf32>
    %31 = arith.addf %29, %30 : vector<8x16xf32>
    %cst_25 = arith.constant 0.000000e+00 : f32
    %32 = vector.broadcast %cst_25 : f32 to vector<8x16xf32>
    %33 = arith.cmpf ogt, %31, %32 : vector<8x16xf32>
    %cst_26 = arith.constant 0.000000e+00 : f32
    %34 = vector.broadcast %cst_26 : f32 to vector<8x16xf32>
    %35 = arith.minimumf %31, %34 : vector<8x16xf32>
    %36 = math.exp %35 : vector<8x16xf32>
    %cst_27 = arith.constant 1.000000e+00 : f32
    %37 = vector.broadcast %cst_27 : f32 to vector<8x16xf32>
    %38 = arith.subf %36, %37 : vector<8x16xf32>
    %39 = arith.select %33, %31, %38 : vector<8x16xi1>, vector<8x16xf32>
    %c0_28 = arith.constant 0 : index
    %c0_29 = arith.constant 0 : index
    %c0_30 = arith.constant 0 : index
    %c0_31 = arith.constant 0 : index
    %40 = vector.load %arg6[%c0_28, %c0_29, %c0_30, %c0_31] : memref<1x2x8x16xbf16, #tpu.memory_space<vmem>>, vector<1x1x8x16xbf16>
    %41 = vector.shape_cast %40 : vector<1x1x8x16xbf16> to vector<8x16xbf16>
    %42 = arith.extf %41 : vector<8x16xbf16> to vector<8x16xf32>
    %43 = arith.addf %39, %42 : vector<8x16xf32>
    %44 = arith.truncf %43 : vector<8x16xf32> to vector<8x16xbf16>
    %c0_32 = arith.constant 0 : index
    %c0_33 = arith.constant 0 : index
    %c0_34 = arith.constant 0 : index
    %c0_35 = arith.constant 0 : index
    %45 = vector.load %arg7[%c0_32, %c0_33, %c0_34, %c0_35] : memref<1x2x8x16xbf16, #tpu.memory_space<vmem>>, vector<1x1x8x16xbf16>
    %46 = vector.shape_cast %45 : vector<1x1x8x16xbf16> to vector<8x16xbf16>
    %47 = vector.shape_cast %44 : vector<8x16xbf16> to vector<1x1x8x16xbf16>
    tpu.vector_store %arg7[%c0_32, %c0_33, %c0_34, %c0_35], %47 {strides = array<i32>} : memref<1x2x8x16xbf16, #tpu.memory_space<vmem>>, vector<1x1x8x16xbf16>,
    %c1_36 = arith.constant 1 : index
    %c0_37 = arith.constant 0 : index
    %c0_38 = arith.constant 0 : index
    %c0_39 = arith.constant 0 : index
    %48 = vector.load %arg4[%c1_36, %c0_37, %c0_38, %c0_39] : memref<2x4x16x16xbf16, #tpu.memory_space<vmem>>, vector<1x1x16x16xbf16>
    %49 = vector.shape_cast %48 : vector<1x1x16x16xbf16> to vector<16x16xbf16>
    %cst_40 = arith.constant dense<0.000000e+00> : vector<8x16xf32>
    %50 = tpu.matmul %7, %49, %cst_40 {dimension_numbers = #tpu.dot_dimension_numbers<[1], [0], [0], [1], [0, 0, 1, 1], [], []>} : vector<8x16xbf16>, vector<16x16xbf16>, vector<8x16xf32> -> vector<8x16xf32>
    %c1_41 = arith.constant 1 : index
    %c1_42 = arith.constant 1 : index
    %c0_43 = arith.constant 0 : index
    %c0_44 = arith.constant 0 : index
    %51 = vector.load %arg4[%c1_41, %c1_42, %c0_43, %c0_44] : memref<2x4x16x16xbf16, #tpu.memory_space<vmem>>, vector<1x1x16x16xbf16>
    %52 = vector.shape_cast %51 : vector<1x1x16x16xbf16> to vector<16x16xbf16>
    %cst_45 = arith.constant dense<0.000000e+00> : vector<8x16xf32>
    %53 = tpu.matmul %9, %52, %cst_45 {dimension_numbers = #tpu.dot_dimension_numbers<[1], [0], [0], [1], [0, 0, 1, 1], [], []>} : vector<8x16xbf16>, vector<16x16xbf16>, vector<8x16xf32> -> vector<8x16xf32>
    %54 = arith.addf %50, %53 : vector<8x16xf32>
    %c1_46 = arith.constant 1 : index
    %c2_47 = arith.constant 2 : index
    %c0_48 = arith.constant 0 : index
    %c0_49 = arith.constant 0 : index
    %55 = vector.load %arg4[%c1_46, %c2_47, %c0_48, %c0_49] : memref<2x4x16x16xbf16, #tpu.memory_space<vmem>>, vector<1x1x16x16xbf16>
    %56 = vector.shape_cast %55 : vector<1x1x16x16xbf16> to vector<16x16xbf16>
    %cst_50 = arith.constant dense<0.000000e+00> : vector<8x16xf32>
    %57 = tpu.matmul %11, %56, %cst_50 {dimension_numbers = #tpu.dot_dimension_numbers<[1], [0], [0], [1], [0, 0, 1, 1], [], []>} : vector<8x16xbf16>, vector<16x16xbf16>, vector<8x16xf32> -> vector<8x16xf32>
    %58 = arith.addf %54, %57 : vector<8x16xf32>
    %c1_51 = arith.constant 1 : index
    %c3_52 = arith.constant 3 : index
    %c0_53 = arith.constant 0 : index
    %c0_54 = arith.constant 0 : index
    %59 = vector.load %arg4[%c1_51, %c3_52, %c0_53, %c0_54] : memref<2x4x16x16xbf16, #tpu.memory_space<vmem>>, vector<1x1x16x16xbf16>
    %60 = vector.shape_cast %59 : vector<1x1x16x16xbf16> to vector<16x16xbf16>
    %cst_55 = arith.constant dense<0.000000e+00> : vector<8x16xf32>
    %61 = tpu.matmul %13, %60, %cst_55 {dimension_numbers = #tpu.dot_dimension_numbers<[1], [0], [0], [1], [0, 0, 1, 1], [], []>} : vector<8x16xbf16>, vector<16x16xbf16>, vector<8x16xf32> -> vector<8x16xf32>
    %62 = arith.addf %58, %61 : vector<8x16xf32>
    %63 = vector.broadcast %14 : vector<1x16xf32> to vector<8x16xf32>
    %64 = arith.addf %62, %63 : vector<8x16xf32>
    %cst_56 = arith.constant 0.000000e+00 : f32
    %65 = vector.broadcast %cst_56 : f32 to vector<8x16xf32>
    %66 = arith.cmpf ogt, %64, %65 : vector<8x16xf32>
    %cst_57 = arith.constant 0.000000e+00 : f32
    %67 = vector.broadcast %cst_57 : f32 to vector<8x16xf32>
    %68 = arith.minimumf %64, %67 : vector<8x16xf32>
    %69 = math.exp %68 : vector<8x16xf32>
    %cst_58 = arith.constant 1.000000e+00 : f32
    %70 = vector.broadcast %cst_58 : f32 to vector<8x16xf32>
    %71 = arith.subf %69, %70 : vector<8x16xf32>
    %72 = arith.select %66, %64, %71 : vector<8x16xi1>, vector<8x16xf32>
    %c0_59 = arith.constant 0 : index
    %c1_60 = arith.constant 1 : index
    %c0_61 = arith.constant 0 : index
    %c0_62 = arith.constant 0 : index
    %73 = vector.load %arg6[%c0_59, %c1_60, %c0_61, %c0_62] : memref<1x2x8x16xbf16, #tpu.memory_space<vmem>>, vector<1x1x8x16xbf16>
    %74 = vector.shape_cast %73 : vector<1x1x8x16xbf16> to vector<8x16xbf16>
    %75 = arith.extf %74 : vector<8x16xbf16> to vector<8x16xf32>
    %76 = arith.addf %72, %75 : vector<8x16xf32>
    %77 = arith.truncf %76 : vector<8x16xf32> to vector<8x16xbf16>
    %c0_63 = arith.constant 0 : index
    %c1_64 = arith.constant 1 : index
    %c0_65 = arith.constant 0 : index
    %c0_66 = arith.constant 0 : index
    %78 = vector.load %arg7[%c0_63, %c1_64, %c0_65, %c0_66] : memref<1x2x8x16xbf16, #tpu.memory_space<vmem>>, vector<1x1x8x16xbf16>
    %79 = vector.shape_cast %78 : vector<1x1x8x16xbf16> to vector<8x16xbf16>
    %80 = vector.shape_cast %77 : vector<8x16xbf16> to vector<1x1x8x16xbf16>
    tpu.vector_store %arg7[%c0_63, %c1_64, %c0_65, %c0_66], %80 {strides = array<i32>} : memref<1x2x8x16xbf16, #tpu.memory_space<vmem>>, vector<1x1x8x16xbf16>,
    return
  }
  func.func @transform_0(%arg0: i32, %arg1: i32) -> (i32, i32, i32, i32) {
    %c0_i32 = arith.constant 0 : i32
    %c0_i32_0 = arith.constant 0 : i32
    %c0_i32_1 = arith.constant 0 : i32
    return %arg0, %arg1, %c0_i32, %c0_i32_0 : i32, i32, i32, i32
  }
  func.func @transform_1(%arg0: i32, %arg1: i32) -> (i32, i32, i32, i32) {
    %c1_i32 = arith.constant 1 : i32
    %0 = arith.addi %arg1, %c1_i32 : i32
    %c0_i32 = arith.constant 0 : i32
    %c0_i32_0 = arith.constant 0 : i32
    %c0_i32_1 = arith.constant 0 : i32
    return %arg0, %0, %c0_i32, %c0_i32_0 : i32, i32, i32, i32
  }
  func.func @transform_2(%arg0: i32, %arg1: i32) -> (i32, i32, i32, i32) {
    %c0_i32 = arith.constant 0 : i32
    %c0_i32_0 = arith.constant 0 : i32
    %c0_i32_1 = arith.constant 0 : i32
    %c0_i32_2 = arith.constant 0 : i32
    %c0_i32_3 = arith.constant 0 : i32
    return %c0_i32, %c0_i32_0, %c0_i32_1, %c0_i32_2 : i32, i32, i32, i32
  }
  func.func @transform_3(%arg0: i32, %arg1: i32) -> (i32, i32) {
    %c0_i32 = arith.constant 0 : i32
    %c0_i32_0 = arith.constant 0 : i32
    %c0_i32_1 = arith.constant 0 : i32
    return %c0_i32, %c0_i32_0 : i32, i32
  }
  func.func @transform_4(%arg0: i32, %arg1: i32) -> (i32, i32, i32, i32) {
    %c0_i32 = arith.constant 0 : i32
    %c0_i32_0 = arith.constant 0 : i32
    %c0_i32_1 = arith.constant 0 : i32
    return %arg0, %arg1, %c0_i32, %c0_i32_0 : i32, i32, i32, i32
  }
  func.func @transform_5(%arg0: i32, %arg1: i32) -> (i32, i32, i32, i32) {
    %c0_i32 = arith.constant 0 : i32
    %c0_i32_0 = arith.constant 0 : i32
    %c0_i32_1 = arith.constant 0 : i32
    return %arg0, %arg1, %c0_i32, %c0_i32_0 : i32, i32, i32, i32
  }
}

module attributes {stable_mosaic.version = 11 : i64} {
  func.func @_deconv_head_fusion_kernel(%arg0: i32, %arg1: i32, %arg2: memref<1x1x18x8xbf16, #tpu.memory_space<vmem>>, %arg3: memref<1x1x18x8xbf16, #tpu.memory_space<vmem>>, %arg4: memref<2x4x8x8xbf16, #tpu.memory_space<vmem>>, %arg5: memref<1x8xf32, #tpu.memory_space<vmem>>, %arg6: memref<8x6xf32, #tpu.memory_space<vmem>>, %arg7: memref<1x6xf32, #tpu.memory_space<vmem>>, %arg8: memref<8x6xf32, #tpu.memory_space<vmem>>, %arg9: memref<1x6xf32, #tpu.memory_space<vmem>>, %arg10: memref<1x2x17x6xf32, #tpu.memory_space<vmem>>, %arg11: memref<1x2x17x8xf32, #tpu.memory_space<vmem>>, %arg12: memref<1x2x17x6xf32, #tpu.memory_space<vmem>>) attributes {dimension_semantics = [#tpu.dimension_semantics<parallel>, #tpu.dimension_semantics<parallel>], iteration_bounds = array<i64: 2, 17>, scalar_prefetch = 0 : i64, scratch_operands = 0 : i64, tpu.core_type = #tpu.core_type<tc>, window_params = [{transform_indices = @transform_0, window_bounds = array<i64: 1, 1, 18, 8>}, {transform_indices = @transform_1, window_bounds = array<i64: 1, 1, 18, 8>}, {pipeline_mode = #tpu.pipeline_mode<synchronous>, transform_indices = @transform_2, window_bounds = array<i64: 2, 4, 8, 8>}, {pipeline_mode = #tpu.pipeline_mode<synchronous>, transform_indices = @transform_3, window_bounds = array<i64: 1, 8>}, {pipeline_mode = #tpu.pipeline_mode<synchronous>, transform_indices = @transform_4, window_bounds = array<i64: 8, 6>}, {pipeline_mode = #tpu.pipeline_mode<synchronous>, transform_indices = @transform_5, window_bounds = array<i64: 1, 6>}, {pipeline_mode = #tpu.pipeline_mode<synchronous>, transform_indices = @transform_6, window_bounds = array<i64: 8, 6>}, {pipeline_mode = #tpu.pipeline_mode<synchronous>, transform_indices = @transform_7, window_bounds = array<i64: 1, 6>}, {transform_indices = @transform_8, window_bounds = array<i64: 1, 2, 17, 6>}, {transform_indices = @transform_9, window_bounds = array<i64: 1, 2, 17, 8>}, {transform_indices = @transform_10, window_bounds = array<i64: 1, 2, 17, 6>}]} {
    %c0 = arith.constant 0 : index
    %c0_0 = arith.constant 0 : index
    %c0_1 = arith.constant 0 : index
    %c0_2 = arith.constant 0 : index
    %0 = vector.load %arg2[%c0, %c0_0, %c0_1, %c0_2] : memref<1x1x18x8xbf16, #tpu.memory_space<vmem>>, vector<1x1x18x8xbf16>
    %1 = vector.shape_cast %0 : vector<1x1x18x8xbf16> to vector<18x8xbf16>
    %2 = arith.extf %1 : vector<18x8xbf16> to vector<18x8xf32>
    %c0_3 = arith.constant 0 : index
    %c0_4 = arith.constant 0 : index
    %c0_5 = arith.constant 0 : index
    %c0_6 = arith.constant 0 : index
    %3 = vector.load %arg3[%c0_3, %c0_4, %c0_5, %c0_6] : memref<1x1x18x8xbf16, #tpu.memory_space<vmem>>, vector<1x1x18x8xbf16>
    %4 = vector.shape_cast %3 : vector<1x1x18x8xbf16> to vector<18x8xbf16>
    %5 = arith.extf %4 : vector<18x8xbf16> to vector<18x8xf32>
    %6 = vector.extract_strided_slice %5 {offsets = [1, 0], sizes = [17, 8], strides = [1, 1]} : vector<18x8xf32> to vector<17x8xf32>
    %7 = arith.truncf %6 : vector<17x8xf32> to vector<17x8xbf16>
    %8 = vector.extract_strided_slice %5 {offsets = [0, 0], sizes = [17, 8], strides = [1, 1]} : vector<18x8xf32> to vector<17x8xf32>
    %9 = arith.truncf %8 : vector<17x8xf32> to vector<17x8xbf16>
    %10 = vector.extract_strided_slice %2 {offsets = [1, 0], sizes = [17, 8], strides = [1, 1]} : vector<18x8xf32> to vector<17x8xf32>
    %11 = arith.truncf %10 : vector<17x8xf32> to vector<17x8xbf16>
    %12 = vector.extract_strided_slice %2 {offsets = [0, 0], sizes = [17, 8], strides = [1, 1]} : vector<18x8xf32> to vector<17x8xf32>
    %13 = arith.truncf %12 : vector<17x8xf32> to vector<17x8xbf16>
    %c0_7 = arith.constant 0 : index
    %c0_8 = arith.constant 0 : index
    %14 = vector.load %arg5[%c0_7, %c0_8] : memref<1x8xf32, #tpu.memory_space<vmem>>, vector<1x8xf32>
    %c0_9 = arith.constant 0 : index
    %c0_10 = arith.constant 0 : index
    %15 = vector.load %arg6[%c0_9, %c0_10] : memref<8x6xf32, #tpu.memory_space<vmem>>, vector<8x6xf32>
    %c0_11 = arith.constant 0 : index
    %c0_12 = arith.constant 0 : index
    %16 = vector.load %arg7[%c0_11, %c0_12] : memref<1x6xf32, #tpu.memory_space<vmem>>, vector<1x6xf32>
    %c0_13 = arith.constant 0 : index
    %c0_14 = arith.constant 0 : index
    %17 = vector.load %arg8[%c0_13, %c0_14] : memref<8x6xf32, #tpu.memory_space<vmem>>, vector<8x6xf32>
    %c0_15 = arith.constant 0 : index
    %c0_16 = arith.constant 0 : index
    %18 = vector.load %arg9[%c0_15, %c0_16] : memref<1x6xf32, #tpu.memory_space<vmem>>, vector<1x6xf32>
    %c0_17 = arith.constant 0 : index
    %c0_18 = arith.constant 0 : index
    %c0_19 = arith.constant 0 : index
    %c0_20 = arith.constant 0 : index
    %19 = vector.load %arg4[%c0_17, %c0_18, %c0_19, %c0_20] : memref<2x4x8x8xbf16, #tpu.memory_space<vmem>>, vector<1x1x8x8xbf16>
    %20 = vector.shape_cast %19 : vector<1x1x8x8xbf16> to vector<8x8xbf16>
    %cst = arith.constant dense<0.000000e+00> : vector<17x8xf32>
    %21 = tpu.matmul %7, %20, %cst {dimension_numbers = #tpu.dot_dimension_numbers<[1], [0], [0], [1], [0, 0, 1, 1], [], []>} : vector<17x8xbf16>, vector<8x8xbf16>, vector<17x8xf32> -> vector<17x8xf32>
    %c0_21 = arith.constant 0 : index
    %c1 = arith.constant 1 : index
    %c0_22 = arith.constant 0 : index
    %c0_23 = arith.constant 0 : index
    %22 = vector.load %arg4[%c0_21, %c1, %c0_22, %c0_23] : memref<2x4x8x8xbf16, #tpu.memory_space<vmem>>, vector<1x1x8x8xbf16>
    %23 = vector.shape_cast %22 : vector<1x1x8x8xbf16> to vector<8x8xbf16>
    %cst_24 = arith.constant dense<0.000000e+00> : vector<17x8xf32>
    %24 = tpu.matmul %9, %23, %cst_24 {dimension_numbers = #tpu.dot_dimension_numbers<[1], [0], [0], [1], [0, 0, 1, 1], [], []>} : vector<17x8xbf16>, vector<8x8xbf16>, vector<17x8xf32> -> vector<17x8xf32>
    %25 = arith.addf %21, %24 : vector<17x8xf32>
    %c0_25 = arith.constant 0 : index
    %c2 = arith.constant 2 : index
    %c0_26 = arith.constant 0 : index
    %c0_27 = arith.constant 0 : index
    %26 = vector.load %arg4[%c0_25, %c2, %c0_26, %c0_27] : memref<2x4x8x8xbf16, #tpu.memory_space<vmem>>, vector<1x1x8x8xbf16>
    %27 = vector.shape_cast %26 : vector<1x1x8x8xbf16> to vector<8x8xbf16>
    %cst_28 = arith.constant dense<0.000000e+00> : vector<17x8xf32>
    %28 = tpu.matmul %11, %27, %cst_28 {dimension_numbers = #tpu.dot_dimension_numbers<[1], [0], [0], [1], [0, 0, 1, 1], [], []>} : vector<17x8xbf16>, vector<8x8xbf16>, vector<17x8xf32> -> vector<17x8xf32>
    %29 = arith.addf %25, %28 : vector<17x8xf32>
    %c0_29 = arith.constant 0 : index
    %c3 = arith.constant 3 : index
    %c0_30 = arith.constant 0 : index
    %c0_31 = arith.constant 0 : index
    %30 = vector.load %arg4[%c0_29, %c3, %c0_30, %c0_31] : memref<2x4x8x8xbf16, #tpu.memory_space<vmem>>, vector<1x1x8x8xbf16>
    %31 = vector.shape_cast %30 : vector<1x1x8x8xbf16> to vector<8x8xbf16>
    %cst_32 = arith.constant dense<0.000000e+00> : vector<17x8xf32>
    %32 = tpu.matmul %13, %31, %cst_32 {dimension_numbers = #tpu.dot_dimension_numbers<[1], [0], [0], [1], [0, 0, 1, 1], [], []>} : vector<17x8xbf16>, vector<8x8xbf16>, vector<17x8xf32> -> vector<17x8xf32>
    %33 = arith.addf %29, %32 : vector<17x8xf32>
    %34 = vector.broadcast %14 : vector<1x8xf32> to vector<17x8xf32>
    %35 = arith.addf %33, %34 : vector<17x8xf32>
    %cst_33 = arith.constant 0.000000e+00 : f32
    %36 = vector.broadcast %cst_33 : f32 to vector<17x8xf32>
    %37 = arith.cmpf ogt, %35, %36 : vector<17x8xf32>
    %cst_34 = arith.constant 0.000000e+00 : f32
    %38 = vector.broadcast %cst_34 : f32 to vector<17x8xf32>
    %39 = arith.minimumf %35, %38 : vector<17x8xf32>
    %40 = math.exp %39 : vector<17x8xf32>
    %cst_35 = arith.constant 1.000000e+00 : f32
    %41 = vector.broadcast %cst_35 : f32 to vector<17x8xf32>
    %42 = arith.subf %40, %41 : vector<17x8xf32>
    %43 = arith.select %37, %35, %42 : vector<17x8xi1>, vector<17x8xf32>
    %c0_36 = arith.constant 0 : index
    %c0_37 = arith.constant 0 : index
    %c0_38 = arith.constant 0 : index
    %c0_39 = arith.constant 0 : index
    %44 = vector.load %arg11[%c0_36, %c0_37, %c0_38, %c0_39] : memref<1x2x17x8xf32, #tpu.memory_space<vmem>>, vector<1x1x17x8xf32>
    %45 = vector.shape_cast %44 : vector<1x1x17x8xf32> to vector<17x8xf32>
    %46 = vector.shape_cast %43 : vector<17x8xf32> to vector<1x1x17x8xf32>
    tpu.vector_store %arg11[%c0_36, %c0_37, %c0_38, %c0_39], %46 {strides = array<i32>} : memref<1x2x17x8xf32, #tpu.memory_space<vmem>>, vector<1x1x17x8xf32>,
    %cst_40 = arith.constant dense<0.000000e+00> : vector<17x6xf32>
    %47 = tpu.matmul %43, %15, %cst_40 {dimension_numbers = #tpu.dot_dimension_numbers<[1], [0], [0], [1], [0, 0, 1, 1], [], []>} : vector<17x8xf32>, vector<8x6xf32>, vector<17x6xf32> -> vector<17x6xf32>
    %48 = vector.broadcast %16 : vector<1x6xf32> to vector<17x6xf32>
    %49 = arith.addf %47, %48 : vector<17x6xf32>
    %cst_41 = arith.constant -3.000000e+00 : f32
    %50 = vector.broadcast %cst_41 : f32 to vector<17x6xf32>
    %51 = arith.mulf %50, %49 : vector<17x6xf32>
    %52 = math.exp %51 : vector<17x6xf32>
    %cst_42 = arith.constant 1.000000e+00 : f32
    %53 = vector.broadcast %cst_42 : f32 to vector<17x6xf32>
    %54 = arith.addf %53, %52 : vector<17x6xf32>
    %cst_43 = arith.constant 1.000000e+00 : f32
    %55 = vector.broadcast %cst_43 : f32 to vector<17x6xf32>
    %56 = arith.divf %55, %54 : vector<17x6xf32>
    %cst_44 = arith.constant dense<0.000000e+00> : vector<17x6xf32>
    %57 = tpu.matmul %43, %17, %cst_44 {dimension_numbers = #tpu.dot_dimension_numbers<[1], [0], [0], [1], [0, 0, 1, 1], [], []>} : vector<17x8xf32>, vector<8x6xf32>, vector<17x6xf32> -> vector<17x6xf32>
    %58 = vector.broadcast %18 : vector<1x6xf32> to vector<17x6xf32>
    %59 = arith.addf %57, %58 : vector<17x6xf32>
    %c0_45 = arith.constant 0 : index
    %c0_46 = arith.constant 0 : index
    %c0_47 = arith.constant 0 : index
    %c0_48 = arith.constant 0 : index
    %60 = vector.load %arg10[%c0_45, %c0_46, %c0_47, %c0_48] : memref<1x2x17x6xf32, #tpu.memory_space<vmem>>, vector<1x1x17x6xf32>
    %61 = vector.shape_cast %60 : vector<1x1x17x6xf32> to vector<17x6xf32>
    %62 = arith.mulf %56, %61 : vector<17x6xf32>
    %cst_49 = arith.constant 1.000000e+00 : f32
    %63 = vector.broadcast %cst_49 : f32 to vector<17x6xf32>
    %64 = arith.subf %63, %56 : vector<17x6xf32>
    %65 = arith.mulf %64, %59 : vector<17x6xf32>
    %66 = arith.addf %62, %65 : vector<17x6xf32>
    %c0_50 = arith.constant 0 : index
    %c0_51 = arith.constant 0 : index
    %c0_52 = arith.constant 0 : index
    %c0_53 = arith.constant 0 : index
    %67 = vector.load %arg12[%c0_50, %c0_51, %c0_52, %c0_53] : memref<1x2x17x6xf32, #tpu.memory_space<vmem>>, vector<1x1x17x6xf32>
    %68 = vector.shape_cast %67 : vector<1x1x17x6xf32> to vector<17x6xf32>
    %69 = vector.shape_cast %66 : vector<17x6xf32> to vector<1x1x17x6xf32>
    tpu.vector_store %arg12[%c0_50, %c0_51, %c0_52, %c0_53], %69 {strides = array<i32>} : memref<1x2x17x6xf32, #tpu.memory_space<vmem>>, vector<1x1x17x6xf32>,
    %c1_54 = arith.constant 1 : index
    %c0_55 = arith.constant 0 : index
    %c0_56 = arith.constant 0 : index
    %c0_57 = arith.constant 0 : index
    %70 = vector.load %arg4[%c1_54, %c0_55, %c0_56, %c0_57] : memref<2x4x8x8xbf16, #tpu.memory_space<vmem>>, vector<1x1x8x8xbf16>
    %71 = vector.shape_cast %70 : vector<1x1x8x8xbf16> to vector<8x8xbf16>
    %cst_58 = arith.constant dense<0.000000e+00> : vector<17x8xf32>
    %72 = tpu.matmul %7, %71, %cst_58 {dimension_numbers = #tpu.dot_dimension_numbers<[1], [0], [0], [1], [0, 0, 1, 1], [], []>} : vector<17x8xbf16>, vector<8x8xbf16>, vector<17x8xf32> -> vector<17x8xf32>
    %c1_59 = arith.constant 1 : index
    %c1_60 = arith.constant 1 : index
    %c0_61 = arith.constant 0 : index
    %c0_62 = arith.constant 0 : index
    %73 = vector.load %arg4[%c1_59, %c1_60, %c0_61, %c0_62] : memref<2x4x8x8xbf16, #tpu.memory_space<vmem>>, vector<1x1x8x8xbf16>
    %74 = vector.shape_cast %73 : vector<1x1x8x8xbf16> to vector<8x8xbf16>
    %cst_63 = arith.constant dense<0.000000e+00> : vector<17x8xf32>
    %75 = tpu.matmul %9, %74, %cst_63 {dimension_numbers = #tpu.dot_dimension_numbers<[1], [0], [0], [1], [0, 0, 1, 1], [], []>} : vector<17x8xbf16>, vector<8x8xbf16>, vector<17x8xf32> -> vector<17x8xf32>
    %76 = arith.addf %72, %75 : vector<17x8xf32>
    %c1_64 = arith.constant 1 : index
    %c2_65 = arith.constant 2 : index
    %c0_66 = arith.constant 0 : index
    %c0_67 = arith.constant 0 : index
    %77 = vector.load %arg4[%c1_64, %c2_65, %c0_66, %c0_67] : memref<2x4x8x8xbf16, #tpu.memory_space<vmem>>, vector<1x1x8x8xbf16>
    %78 = vector.shape_cast %77 : vector<1x1x8x8xbf16> to vector<8x8xbf16>
    %cst_68 = arith.constant dense<0.000000e+00> : vector<17x8xf32>
    %79 = tpu.matmul %11, %78, %cst_68 {dimension_numbers = #tpu.dot_dimension_numbers<[1], [0], [0], [1], [0, 0, 1, 1], [], []>} : vector<17x8xbf16>, vector<8x8xbf16>, vector<17x8xf32> -> vector<17x8xf32>
    %80 = arith.addf %76, %79 : vector<17x8xf32>
    %c1_69 = arith.constant 1 : index
    %c3_70 = arith.constant 3 : index
    %c0_71 = arith.constant 0 : index
    %c0_72 = arith.constant 0 : index
    %81 = vector.load %arg4[%c1_69, %c3_70, %c0_71, %c0_72] : memref<2x4x8x8xbf16, #tpu.memory_space<vmem>>, vector<1x1x8x8xbf16>
    %82 = vector.shape_cast %81 : vector<1x1x8x8xbf16> to vector<8x8xbf16>
    %cst_73 = arith.constant dense<0.000000e+00> : vector<17x8xf32>
    %83 = tpu.matmul %13, %82, %cst_73 {dimension_numbers = #tpu.dot_dimension_numbers<[1], [0], [0], [1], [0, 0, 1, 1], [], []>} : vector<17x8xbf16>, vector<8x8xbf16>, vector<17x8xf32> -> vector<17x8xf32>
    %84 = arith.addf %80, %83 : vector<17x8xf32>
    %85 = vector.broadcast %14 : vector<1x8xf32> to vector<17x8xf32>
    %86 = arith.addf %84, %85 : vector<17x8xf32>
    %cst_74 = arith.constant 0.000000e+00 : f32
    %87 = vector.broadcast %cst_74 : f32 to vector<17x8xf32>
    %88 = arith.cmpf ogt, %86, %87 : vector<17x8xf32>
    %cst_75 = arith.constant 0.000000e+00 : f32
    %89 = vector.broadcast %cst_75 : f32 to vector<17x8xf32>
    %90 = arith.minimumf %86, %89 : vector<17x8xf32>
    %91 = math.exp %90 : vector<17x8xf32>
    %cst_76 = arith.constant 1.000000e+00 : f32
    %92 = vector.broadcast %cst_76 : f32 to vector<17x8xf32>
    %93 = arith.subf %91, %92 : vector<17x8xf32>
    %94 = arith.select %88, %86, %93 : vector<17x8xi1>, vector<17x8xf32>
    %c0_77 = arith.constant 0 : index
    %c1_78 = arith.constant 1 : index
    %c0_79 = arith.constant 0 : index
    %c0_80 = arith.constant 0 : index
    %95 = vector.load %arg11[%c0_77, %c1_78, %c0_79, %c0_80] : memref<1x2x17x8xf32, #tpu.memory_space<vmem>>, vector<1x1x17x8xf32>
    %96 = vector.shape_cast %95 : vector<1x1x17x8xf32> to vector<17x8xf32>
    %97 = vector.shape_cast %94 : vector<17x8xf32> to vector<1x1x17x8xf32>
    tpu.vector_store %arg11[%c0_77, %c1_78, %c0_79, %c0_80], %97 {strides = array<i32>} : memref<1x2x17x8xf32, #tpu.memory_space<vmem>>, vector<1x1x17x8xf32>,
    %cst_81 = arith.constant dense<0.000000e+00> : vector<17x6xf32>
    %98 = tpu.matmul %94, %15, %cst_81 {dimension_numbers = #tpu.dot_dimension_numbers<[1], [0], [0], [1], [0, 0, 1, 1], [], []>} : vector<17x8xf32>, vector<8x6xf32>, vector<17x6xf32> -> vector<17x6xf32>
    %99 = vector.broadcast %16 : vector<1x6xf32> to vector<17x6xf32>
    %100 = arith.addf %98, %99 : vector<17x6xf32>
    %cst_82 = arith.constant -3.000000e+00 : f32
    %101 = vector.broadcast %cst_82 : f32 to vector<17x6xf32>
    %102 = arith.mulf %101, %100 : vector<17x6xf32>
    %103 = math.exp %102 : vector<17x6xf32>
    %cst_83 = arith.constant 1.000000e+00 : f32
    %104 = vector.broadcast %cst_83 : f32 to vector<17x6xf32>
    %105 = arith.addf %104, %103 : vector<17x6xf32>
    %cst_84 = arith.constant 1.000000e+00 : f32
    %106 = vector.broadcast %cst_84 : f32 to vector<17x6xf32>
    %107 = arith.divf %106, %105 : vector<17x6xf32>
    %cst_85 = arith.constant dense<0.000000e+00> : vector<17x6xf32>
    %108 = tpu.matmul %94, %17, %cst_85 {dimension_numbers = #tpu.dot_dimension_numbers<[1], [0], [0], [1], [0, 0, 1, 1], [], []>} : vector<17x8xf32>, vector<8x6xf32>, vector<17x6xf32> -> vector<17x6xf32>
    %109 = vector.broadcast %18 : vector<1x6xf32> to vector<17x6xf32>
    %110 = arith.addf %108, %109 : vector<17x6xf32>
    %c0_86 = arith.constant 0 : index
    %c1_87 = arith.constant 1 : index
    %c0_88 = arith.constant 0 : index
    %c0_89 = arith.constant 0 : index
    %111 = vector.load %arg10[%c0_86, %c1_87, %c0_88, %c0_89] : memref<1x2x17x6xf32, #tpu.memory_space<vmem>>, vector<1x1x17x6xf32>
    %112 = vector.shape_cast %111 : vector<1x1x17x6xf32> to vector<17x6xf32>
    %113 = arith.mulf %107, %112 : vector<17x6xf32>
    %cst_90 = arith.constant 1.000000e+00 : f32
    %114 = vector.broadcast %cst_90 : f32 to vector<17x6xf32>
    %115 = arith.subf %114, %107 : vector<17x6xf32>
    %116 = arith.mulf %115, %110 : vector<17x6xf32>
    %117 = arith.addf %113, %116 : vector<17x6xf32>
    %c0_91 = arith.constant 0 : index
    %c1_92 = arith.constant 1 : index
    %c0_93 = arith.constant 0 : index
    %c0_94 = arith.constant 0 : index
    %118 = vector.load %arg12[%c0_91, %c1_92, %c0_93, %c0_94] : memref<1x2x17x6xf32, #tpu.memory_space<vmem>>, vector<1x1x17x6xf32>
    %119 = vector.shape_cast %118 : vector<1x1x17x6xf32> to vector<17x6xf32>
    %120 = vector.shape_cast %117 : vector<17x6xf32> to vector<1x1x17x6xf32>
    tpu.vector_store %arg12[%c0_91, %c1_92, %c0_93, %c0_94], %120 {strides = array<i32>} : memref<1x2x17x6xf32, #tpu.memory_space<vmem>>, vector<1x1x17x6xf32>,
    return
  }
  func.func @transform_0(%arg0: i32, %arg1: i32) -> (i32, i32, i32, i32) {
    %c0_i32 = arith.constant 0 : i32
    %c0_i32_0 = arith.constant 0 : i32
    %c0_i32_1 = arith.constant 0 : i32
    return %arg0, %arg1, %c0_i32, %c0_i32_0 : i32, i32, i32, i32
  }
  func.func @transform_1(%arg0: i32, %arg1: i32) -> (i32, i32, i32, i32) {
    %c1_i32 = arith.constant 1 : i32
    %0 = arith.addi %arg1, %c1_i32 : i32
    %c0_i32 = arith.constant 0 : i32
    %c0_i32_0 = arith.constant 0 : i32
    %c0_i32_1 = arith.constant 0 : i32
    return %arg0, %0, %c0_i32, %c0_i32_0 : i32, i32, i32, i32
  }
  func.func @transform_2(%arg0: i32, %arg1: i32) -> (i32, i32, i32, i32) {
    %c0_i32 = arith.constant 0 : i32
    %c0_i32_0 = arith.constant 0 : i32
    %c0_i32_1 = arith.constant 0 : i32
    %c0_i32_2 = arith.constant 0 : i32
    %c0_i32_3 = arith.constant 0 : i32
    return %c0_i32, %c0_i32_0, %c0_i32_1, %c0_i32_2 : i32, i32, i32, i32
  }
  func.func @transform_3(%arg0: i32, %arg1: i32) -> (i32, i32) {
    %c0_i32 = arith.constant 0 : i32
    %c0_i32_0 = arith.constant 0 : i32
    %c0_i32_1 = arith.constant 0 : i32
    return %c0_i32, %c0_i32_0 : i32, i32
  }
  func.func @transform_4(%arg0: i32, %arg1: i32) -> (i32, i32) {
    %c0_i32 = arith.constant 0 : i32
    %c0_i32_0 = arith.constant 0 : i32
    %c0_i32_1 = arith.constant 0 : i32
    return %c0_i32, %c0_i32_0 : i32, i32
  }
  func.func @transform_5(%arg0: i32, %arg1: i32) -> (i32, i32) {
    %c0_i32 = arith.constant 0 : i32
    %c0_i32_0 = arith.constant 0 : i32
    %c0_i32_1 = arith.constant 0 : i32
    return %c0_i32, %c0_i32_0 : i32, i32
  }
  func.func @transform_6(%arg0: i32, %arg1: i32) -> (i32, i32) {
    %c0_i32 = arith.constant 0 : i32
    %c0_i32_0 = arith.constant 0 : i32
    %c0_i32_1 = arith.constant 0 : i32
    return %c0_i32, %c0_i32_0 : i32, i32
  }
  func.func @transform_7(%arg0: i32, %arg1: i32) -> (i32, i32) {
    %c0_i32 = arith.constant 0 : i32
    %c0_i32_0 = arith.constant 0 : i32
    %c0_i32_1 = arith.constant 0 : i32
    return %c0_i32, %c0_i32_0 : i32, i32
  }
  func.func @transform_8(%arg0: i32, %arg1: i32) -> (i32, i32, i32, i32) {
    %c0_i32 = arith.constant 0 : i32
    %c0_i32_0 = arith.constant 0 : i32
    %c0_i32_1 = arith.constant 0 : i32
    return %arg0, %arg1, %c0_i32, %c0_i32_0 : i32, i32, i32, i32
  }
  func.func @transform_9(%arg0: i32, %arg1: i32) -> (i32, i32, i32, i32) {
    %c0_i32 = arith.constant 0 : i32
    %c0_i32_0 = arith.constant 0 : i32
    %c0_i32_1 = arith.constant 0 : i32
    return %arg0, %arg1, %c0_i32, %c0_i32_0 : i32, i32, i32, i32
  }
  func.func @transform_10(%arg0: i32, %arg1: i32) -> (i32, i32, i32, i32) {
    %c0_i32 = arith.constant 0 : i32
    %c0_i32_0 = arith.constant 0 : i32
    %c0_i32_1 = arith.constant 0 : i32
    return %arg0, %arg1, %c0_i32, %c0_i32_0 : i32, i32, i32, i32
  }
}

</mosaic_0001>

<llo_original>
// kernel: tile.48
$region0: #{tile.48}
  #allocation0 [shape = 's32[1]{0}', space=sflag, size = 0x4, scoped, tag = 'scoped memory for tile.48']
  %s0 = inlined_call_operand.vmem [shape: f32[3], index: 0, kind: input, shape index: {}]
  %s1 = inlined_call_operand.vmem [shape: f32[2,3], index: 1, kind: output, shape index: {}]
  // Predicated region
  $region2: #{tile.48} parent=0 // pred_check
    _
  $region3: #{tile.48} parent=0 // pred_check_branch
    %3 = sbr.rel (0) target = $region5
  $region4: #{tile.48} parent=0 // pred_region
    _
  $region5: #{tile.48} parent=0 // pred_fallthru
    _
  %v4 = vld [vmem:[%s0] ss:$0 sm:$0xff]
  %5 = vst [vmem:[%s1] sm:$0x3] %v4

// kernel: tile.49
$region0: #{tile.49}
  %s0 = inlined_call_operand.vmem [shape: f32[2,3], index: 0, kind: input, shape index: {}]
  %s1 = inlined_call_operand.vmem [shape: f32[1,6], index: 1, kind: output, shape index: {}]
  $region1: #{tile.49} parent=0
    #allocation0 [shape = 'u8[4096]{0}', space=vmem, size = 0x1000, scoped, tag = 'scoped mem for output reshape']
    #allocation1 [shape = 'u8[4096]{0}', space=vmem, size = 0x1000, scoped, tag = 'scoped mem for input reshape']
    %s3 = sshll.u32 1, 2
    %s4 = ssub.s32 %s3, 1
    %v5 = vld [vmem:[%s0] sm:%s4]
    %6 = vst [vmem:[#allocation1] sm:%s4] %v5
    %v7 = vld [vmem:[#allocation1] sm:$0x1]
    %vm8 = vcmask 23552
    %9 = vst.msk [vmem:[#allocation0] sm:$0x1] %vm8, %v7
    %s10 = scalar_lea.vmem [#allocation1], 1
    %v11 = vld [vmem:[%s10] sm:$0x1]
    %12 = vrot.lane.b32.xlu0 %v11, 3
    %v13 = vpop.permute.xlu0 %12
    %vm14 = vcmask 48152
    %15 = vst.msk [vmem:[#allocation0] sm:$0x1] %vm14, %v13
    %s17 = sshll.u32 1, 1
    %s18 = ssub.s32 %s17, 1
    %v20 = vld [vmem:[#allocation0] sm:%s18]
    %s21 = sshll.u32 1, 1
    %s22 = ssub.s32 %s21, 1
    %23 = vst [vmem:[%s1] sm:%s22] %v20

// kernel: tile.33
$region0: #{tile.33}
  #allocation0 [shape = 's32[1]{0}', space=sflag, size = 0x4, scoped, tag = 'scoped memory for tile.33']
  %s0 = inlined_call_operand.vmem [shape: f32[8], index: 0, kind: input, shape index: {}]
  %s1 = inlined_call_operand.vmem [shape: f32[2,8], index: 1, kind: output, shape index: {}]
  // Predicated region
  $region2: #{tile.33} parent=0 // pred_check
    _
  $region3: #{tile.33} parent=0 // pred_check_branch
    %3 = sbr.rel (0) target = $region5
  $region4: #{tile.33} parent=0 // pred_region
    _
  $region5: #{tile.33} parent=0 // pred_fallthru
    _
  %v4 = vld [vmem:[%s0] ss:$0 sm:$0xff]
  %5 = vst [vmem:[%s1] sm:$0x3] %v4

// kernel: mul.11
$region0: #{mul.11}
  %s0 = inlined_call_operand.vmem [shape: f32[2,8], index: 0, kind: input, shape index: {}]
  %s1 = inlined_call_operand.vmem [shape: f32[16], index: 1, kind: output, shape index: {}]
  $region1: #{mul.11} parent=0
    #allocation0 [shape = 'u8[4096]{0}', space=vmem, size = 0x1000, scoped, tag = 'scoped mem for output reshape']
    #allocation1 [shape = 'u8[4096]{0}', space=vmem, size = 0x1000, scoped, tag = 'scoped mem for input reshape']
    %s3 = sshll.u32 1, 2
    %s4 = ssub.s32 %s3, 1
    %v5 = vld [vmem:[%s0] sm:%s4]
    %6 = vst [vmem:[#allocation1] sm:%s4] %v5
    %v7 = vld [vmem:[#allocation1] sm:$0x1]
    %vm8 = vcmask 64512
    %9 = vst.msk [vmem:[#allocation0] sm:$0x1] %vm8, %v7
    %s10 = scalar_lea.vmem [#allocation1], 1
    %v11 = vld [vmem:[%s10] sm:$0x1]
    %12 = vrot.lane.b32.xlu0 %v11, 8
    %v13 = vpop.permute.xlu0 %12
    %vm14 = vcmask 130112
    %15 = vst.msk [vmem:[#allocation0] sm:$0x1] %vm14, %v13
    %s17 = sshll.u32 1, 1
    %s18 = ssub.s32 %s17, 1
    %v20 = vld [vmem:[#allocation0] sm:%s18]
    %s21 = sshll.u32 1, 1
    %s22 = ssub.s32 %s21, 1
    %23 = vst [vmem:[%s1] sm:%s22] %v20

// kernel: tile.34
$region0: #{tile.34}
  %s0 = inlined_call_operand.vmem [shape: f32[2,8], index: 0, kind: input, shape index: {}]
  %s1 = inlined_call_operand.vmem [shape: f32[1,16], index: 1, kind: output, shape index: {}]
  $region1: #{tile.34} parent=0
    #allocation0 [shape = 'u8[4096]{0}', space=vmem, size = 0x1000, scoped, tag = 'scoped mem for output reshape']
    #allocation1 [shape = 'u8[4096]{0}', space=vmem, size = 0x1000, scoped, tag = 'scoped mem for input reshape']
    %s3 = sshll.u32 1, 2
    %s4 = ssub.s32 %s3, 1
    %v5 = vld [vmem:[%s0] sm:%s4]
    %6 = vst [vmem:[#allocation1] sm:%s4] %v5
    %v7 = vld [vmem:[#allocation1] sm:$0x1]
    %vm8 = vcmask 64512
    %9 = vst.msk [vmem:[#allocation0] sm:$0x1] %vm8, %v7
    %s10 = scalar_lea.vmem [#allocation1], 1
    %v11 = vld [vmem:[%s10] sm:$0x1]
    %12 = vrot.lane.b32.xlu0 %v11, 8
    %v13 = vpop.permute.xlu0 %12
    %vm14 = vcmask 130112
    %15 = vst.msk [vmem:[#allocation0] sm:$0x1] %vm14, %v13
    %s17 = sshll.u32 1, 1
    %s18 = ssub.s32 %s17, 1
    %v20 = vld [vmem:[#allocation0] sm:%s18]
    %s21 = sshll.u32 1, 1
    %s22 = ssub.s32 %s21, 1
    %23 = vst [vmem:[%s1] sm:%s22] %v20

// kernel: tile.43
$region0: #{tile.43}
  #allocation0 [shape = 's32[1]{0}', space=sflag, size = 0x4, scoped, tag = 'scoped memory for tile.43']
  %s0 = inlined_call_operand.vmem [shape: f32[4], index: 0, kind: input, shape index: {}]
  %s1 = inlined_call_operand.vmem [shape: f32[2,4], index: 1, kind: output, shape index: {}]
  // Predicated region
  $region2: #{tile.43} parent=0 // pred_check
    _
  $region3: #{tile.43} parent=0 // pred_check_branch
    %3 = sbr.rel (0) target = $region5
  $region4: #{tile.43} parent=0 // pred_region
    _
  $region5: #{tile.43} parent=0 // pred_fallthru
    _
  %v4 = vld [vmem:[%s0] ss:$0 sm:$0xff]
  %5 = vst [vmem:[%s1] sm:$0x3] %v4

// kernel: mul.16
$region0: #{mul.16}
  %s0 = inlined_call_operand.vmem [shape: f32[2,4], index: 0, kind: input, shape index: {}]
  %s1 = inlined_call_operand.vmem [shape: f32[8], index: 1, kind: output, shape index: {}]
  $region1: #{mul.16} parent=0
    #allocation0 [shape = 'u8[4096]{0}', space=vmem, size = 0x1000, scoped, tag = 'scoped mem for output reshape']
    #allocation1 [shape = 'u8[4096]{0}', space=vmem, size = 0x1000, scoped, tag = 'scoped mem for input reshape']
    %s3 = sshll.u32 1, 2
    %s4 = ssub.s32 %s3, 1
    %v5 = vld [vmem:[%s0] sm:%s4]
    %6 = vst [vmem:[#allocation1] sm:%s4] %v5
    %v7 = vld [vmem:[#allocation1] sm:$0x1]
    %vm8 = vcmask 31744
    %9 = vst.msk [vmem:[#allocation0] sm:$0x1] %vm8, %v7
    %s10 = scalar_lea.vmem [#allocation1], 1
    %v11 = vld [vmem:[%s10] sm:$0x1]
    %12 = vrot.lane.b32.xlu0 %v11, 4
    %v13 = vpop.permute.xlu0 %12
    %vm14 = vcmask 64544
    %15 = vst.msk [vmem:[#allocation0] sm:$0x1] %vm14, %v13
    %s17 = sshll.u32 1, 1
    %s18 = ssub.s32 %s17, 1
    %v20 = vld [vmem:[#allocation0] sm:%s18]
    %s21 = sshll.u32 1, 1
    %s22 = ssub.s32 %s21, 1
    %23 = vst [vmem:[%s1] sm:%s22] %v20

// kernel: tile.44
$region0: #{tile.44}
  %s0 = inlined_call_operand.vmem [shape: f32[2,4], index: 0, kind: input, shape index: {}]
  %s1 = inlined_call_operand.vmem [shape: f32[1,8], index: 1, kind: output, shape index: {}]
  $region1: #{tile.44} parent=0
    #allocation0 [shape = 'u8[4096]{0}', space=vmem, size = 0x1000, scoped, tag = 'scoped mem for output reshape']
    #allocation1 [shape = 'u8[4096]{0}', space=vmem, size = 0x1000, scoped, tag = 'scoped mem for input reshape']
    %s3 = sshll.u32 1, 2
    %s4 = ssub.s32 %s3, 1
    %v5 = vld [vmem:[%s0] sm:%s4]
    %6 = vst [vmem:[#allocation1] sm:%s4] %v5
    %v7 = vld [vmem:[#allocation1] sm:$0x1]
    %vm8 = vcmask 31744
    %9 = vst.msk [vmem:[#allocation0] sm:$0x1] %vm8, %v7
    %s10 = scalar_lea.vmem [#allocation1], 1
    %v11 = vld [vmem:[%s10] sm:$0x1]
    %12 = vrot.lane.b32.xlu0 %v11, 4
    %v13 = vpop.permute.xlu0 %12
    %vm14 = vcmask 64544
    %15 = vst.msk [vmem:[#allocation0] sm:$0x1] %vm14, %v13
    %s17 = sshll.u32 1, 1
    %s18 = ssub.s32 %s17, 1
    %v20 = vld [vmem:[#allocation0] sm:%s18]
    %s21 = sshll.u32 1, 1
    %s22 = ssub.s32 %s21, 1
    %23 = vst [vmem:[%s1] sm:%s22] %v20

// kernel: deconv_decoder_forward.2
$region0: #{deconv_decoder_forward.2}
  #allocation0 [shape = 'u32[]', space=smem, size = 0x4, offset = 0x4, fixed_abs, tag = 'smem constant byte address 0x4 - core index']
  #allocation1 [shape = 'u32[144,128]{1,0:T(1,128)}', space=vmem, size = 0x12000, scoped, tag = 'internal scratch']
  %s0 = inlined_call_operand.vmem [shape: bf16[2,9,9,16], index: 0, kind: input, shape index: {}, may-alias: {0,1}]
  %s1 = inlined_call_operand.vmem [shape: bf16[2,9,9,16], index: 1, kind: input, shape index: {}, may-alias: {0,1}]
  %s2 = inlined_call_operand.vmem [shape: bf16[2,4,16,16], index: 2, kind: input, shape index: {}]
  %s3 = inlined_call_operand.vmem [shape: f32[1,16], index: 3, kind: input, shape index: {}]
  %s4 = inlined_call_operand.vmem [shape: bf16[2,16,8,16], index: 4, kind: input, shape index: {}]
  %s5 = inlined_call_operand.vmem [shape: bf16[2,16,8,16], index: 5, kind: output, shape index: {}]
  %s6 = sld [smem:[#allocation0]]
  $region53: #{deconv_decoder_forward.2} parent=0
    _
  %s8 = ssub.s32 1, %s6
  %s9 = scalar_select 0, %s8, %s6
  loop: start=0, step=1, limit=18
  $region2: #{deconv_decoder_forward.2} parent=0 // loop_pre_header
    _
  $region3: #{deconv_decoder_forward.2} parent=0 // loop_header
    %s11 = sphi 0, %s15
    %p12 = scmp.ge.s32.totalorder %s11, 18
    %s18 = sphi 0, %s30
    %s19 = sphi 0, %s26
    %s20 = sphi 0, %s18
    %s21 = sphi 0, %s19
    %s22 = sphi 0, %s20
    %s23 = sphi 0, %s21
    %s35 = sphi 0, %s37
    %s38 = sphi 0, %s35
    %s39 = sphi 0, %s38
    %s55 = sphi 0, %s39
    %s65 = sphi 0, %s67
    %s68 = sphi 0, %s65
    %s69 = sphi 0, %s68
    %s85 = sphi 0, %s69
    %s89 = sphi 0, %s89
    %s91 = sphi 0, %s89
    %s92 = sphi 0, %s91
    %s106 = sphi 0, %s92
    %s110 = sphi 0, %s110
    %s112 = sphi 0, %s110
    %s113 = sphi 0, %s112
    %s127 = sphi 0, %s113
    %s135 = sphi 0, %s137
    %s138 = sphi 0, %s135
    %s139 = sphi 0, %s138
    %s155 = sphi 0, %s139
    %s163 = sphi 0, %s165
    %s166 = sphi 0, %s163
    %s167 = sphi 0, %s166
    %s183 = sphi 0, %s167
  $region4: #{deconv_decoder_forward.2} parent=0 // loop_header_branch
    %14 = sbr.rel (%p12) target = $region8
  $region5: #{deconv_decoder_forward.2} parent=0 // loop_body
    %s16 = ssub.s32 %s11, 1
    %s17 = ssub.s32 %s11, 2
    %s24 = sadd.s32 1, %s19
    %p25 = scmp.ge.s32.totalorder %s24, 8
    %s26 = scalar_select %p25, 0, %s24
    %s27 = sadd.s32 1, %s18
    %s28 = scalar_select %p25, %s27, %s18
    %p29 = scmp.ge.s32.totalorder %s28, 2
    %s30 = scalar_select %p29, 0, %s28
    %s31 = ssub.s32 %s18, %s30
    %s32 = ssub.s32 %s19, %s26
    %s33 = sor.u32 %s31, %s32
    %p34 = scmp.eq.s32.totalorder %s33, 0
    %s36 = sadd.s32 %s35, 1
    %s37 = scalar_select %p34, %s35, %s36
    %p40 = pneg %p34
    %p41 = scmp.eq.s32.totalorder %s11, 15
    %p42 = por %p40, %p41
    %p43 = scmp.ne.s32.totalorder %s35, %s38
    %p44 = scmp.eq.s32.totalorder %s11, 0
    %p45 = por %p43, %p44
    %p46 = scmp.ne.s32.totalorder %s35, %s38
    %p47 = scmp.eq.s32.totalorder %s16, 15
    %p48 = por %p46, %p47
    %p49 = scmp.ne.s32.totalorder %s38, %s39
    %p50 = scmp.eq.s32.totalorder %s16, 0
    %p51 = por %p49, %p50
    %p52 = scmp.ne.s32.totalorder %s38, %s39
    %p53 = scmp.eq.s32.totalorder %s17, 15
    %p54 = por %p52, %p53
    %p56 = scmp.ne.s32.totalorder %s39, %s55
    %p57 = scmp.eq.s32.totalorder %s17, 0
    %p58 = por %p56, %p57
    %s59 = sadd.s32 %s19, 1
    %s60 = sadd.s32 %s26, 1
    %s61 = ssub.s32 %s18, %s30
    %s62 = ssub.s32 %s59, %s60
    %s63 = sor.u32 %s61, %s62
    %p64 = scmp.eq.s32.totalorder %s63, 0
    %s66 = sadd.s32 %s65, 1
    %s67 = scalar_select %p64, %s65, %s66
    %p70 = pneg %p64
    %p71 = scmp.eq.s32.totalorder %s11, 15
    %p72 = por %p70, %p71
    %p73 = scmp.ne.s32.totalorder %s65, %s68
    %p74 = scmp.eq.s32.totalorder %s11, 0
    %p75 = por %p73, %p74
    %p76 = scmp.ne.s32.totalorder %s65, %s68
    %p77 = scmp.eq.s32.totalorder %s16, 15
    %p78 = por %p76, %p77
    %p79 = scmp.ne.s32.totalorder %s68, %s69
    %p80 = scmp.eq.s32.totalorder %s16, 0
    %p81 = por %p79, %p80
    %p82 = scmp.ne.s32.totalorder %s68, %s69
    %p83 = scmp.eq.s32.totalorder %s17, 15
    %p84 = por %p82, %p83
    %p86 = scmp.ne.s32.totalorder %s69, %s85
    %p87 = scmp.eq.s32.totalorder %s17, 0
    %p88 = por %p86, %p87
    %s90 = sadd.s32 %s89, 1
    %p93 = scmp.eq.s32.totalorder %s11, 15
    %p94 = scmp.ne.s32.totalorder %s89, %s91
    %p95 = scmp.eq.s32.totalorder %s11, 0
    %p96 = por %p94, %p95
    %p97 = scmp.ne.s32.totalorder %s89, %s91
    %p98 = scmp.eq.s32.totalorder %s16, 15
    %p99 = por %p97, %p98
    %p100 = scmp.ne.s32.totalorder %s91, %s92
    %p101 = scmp.eq.s32.totalorder %s16, 0
    %p102 = por %p100, %p101
    %p103 = scmp.ne.s32.totalorder %s91, %s92
    %p104 = scmp.eq.s32.totalorder %s17, 15
    %p105 = por %p103, %p104
    %p107 = scmp.ne.s32.totalorder %s92, %s106
    %p108 = scmp.eq.s32.totalorder %s17, 0
    %p109 = por %p107, %p108
    %s111 = sadd.s32 %s110, 1
    %p114 = scmp.eq.s32.totalorder %s11, 15
    %p115 = scmp.ne.s32.totalorder %s110, %s112
    %p116 = scmp.eq.s32.totalorder %s11, 0
    %p117 = por %p115, %p116
    %p118 = scmp.ne.s32.totalorder %s110, %s112
    %p119 = scmp.eq.s32.totalorder %s16, 15
    %p120 = por %p118, %p119
    %p121 = scmp.ne.s32.totalorder %s112, %s113
    %p122 = scmp.eq.s32.totalorder %s16, 0
    %p123 = por %p121, %p122
    %p124 = scmp.ne.s32.totalorder %s112, %s113
    %p125 = scmp.eq.s32.totalorder %s17, 15
    %p126 = por %p124, %p125
    %p128 = scmp.ne.s32.totalorder %s113, %s127
    %p129 = scmp.eq.s32.totalorder %s17, 0
    %p130 = por %p128, %p129
    %s131 = ssub.s32 %s18, %s30
    %s132 = ssub.s32 %s19, %s26
    %s133 = sor.u32 %s131, %s132
    %p134 = scmp.eq.s32.totalorder %s133, 0
    %s136 = sadd.s32 %s135, 1
    %s137 = scalar_select %p134, %s135, %s136
    %p140 = pneg %p134
    %p141 = scmp.eq.s32.totalorder %s11, 15
    %p142 = por %p140, %p141
    %p143 = scmp.ne.s32.totalorder %s135, %s138
    %p144 = scmp.eq.s32.totalorder %s11, 0
    %p145 = por %p143, %p144
    %p146 = scmp.ne.s32.totalorder %s135, %s138
    %p147 = scmp.eq.s32.totalorder %s16, 15
    %p148 = por %p146, %p147
    %p149 = scmp.ne.s32.totalorder %s138, %s139
    %p150 = scmp.eq.s32.totalorder %s16, 0
    %p151 = por %p149, %p150
    %p152 = scmp.ne.s32.totalorder %s138, %s139
    %p153 = scmp.eq.s32.totalorder %s17, 15
    %p154 = por %p152, %p153
    %p156 = scmp.ne.s32.totalorder %s139, %s155
    %p157 = scmp.eq.s32.totalorder %s17, 0
    %p158 = por %p156, %p157
    %s159 = ssub.s32 %s18, %s30
    %s160 = ssub.s32 %s19, %s26
    %s161 = sor.u32 %s159, %s160
    %p162 = scmp.eq.s32.totalorder %s161, 0
    %s164 = sadd.s32 %s163, 1
    %s165 = scalar_select %p162, %s163, %s164
    %p168 = pneg %p162
    %p169 = scmp.eq.s32.totalorder %s11, 15
    %p170 = por %p168, %p169
    %p171 = scmp.ne.s32.totalorder %s163, %s166
    %p172 = scmp.eq.s32.totalorder %s11, 0
    %p173 = por %p171, %p172
    %p174 = scmp.ne.s32.totalorder %s163, %s166
    %p175 = scmp.eq.s32.totalorder %s16, 15
    %p176 = por %p174, %p175
    %p177 = scmp.ne.s32.totalorder %s166, %s167
    %p178 = scmp.eq.s32.totalorder %s16, 0
    %p179 = por %p177, %p178
    %p180 = scmp.ne.s32.totalorder %s166, %s167
    %p181 = scmp.eq.s32.totalorder %s17, 15
    %p182 = por %p180, %p181
    %p184 = scmp.ne.s32.totalorder %s167, %s183
    %p185 = scmp.eq.s32.totalorder %s17, 0
    %p186 = por %p184, %p185
    %p187 = scmp.le.s32.totalorder 1, %s11
    %p188 = scmp.lt.s32.totalorder %s11, 17
    %p189 = pnand %p187, %p188
    %p190 = pneg %p189
    // Predicated region
    $region9: #{deconv_decoder_forward.2} parent=5 // pred_check
      _
    $region10: #{deconv_decoder_forward.2} parent=5 // pred_check_branch
      %192 = sbr.rel (%p189) target = $region12
    $region11: #{deconv_decoder_forward.2} parent=5 // pred_region
      %s193 = ssub.s32 %s11, 1
      // Predicated region
      $region13: #{deconv_decoder_forward.2} parent=11 // pred_check
        %p194 = pneg %p102
      $region14: #{deconv_decoder_forward.2} parent=11 // pred_check_branch
        %196 = sbr.rel (%p194) target = $region16
      $region15: #{deconv_decoder_forward.2} parent=11 // pred_region
        _
      $region16: #{deconv_decoder_forward.2} parent=11 // pred_fallthru
        _
      // Predicated region
      $region17: #{deconv_decoder_forward.2} parent=11 // pred_check
        %p197 = pneg %p123
      $region18: #{deconv_decoder_forward.2} parent=11 // pred_check_branch
        %199 = sbr.rel (%p197) target = $region20
      $region19: #{deconv_decoder_forward.2} parent=11 // pred_region
        _
      $region20: #{deconv_decoder_forward.2} parent=11 // pred_fallthru
        _
    $region12: #{deconv_decoder_forward.2} parent=5 // pred_fallthru
      _
    %p200 = scmp.lt.s32.totalorder %s11, 16
    // Predicated region
    $region21: #{deconv_decoder_forward.2} parent=5 // pred_check
      %p201 = pneg %p200
    $region22: #{deconv_decoder_forward.2} parent=5 // pred_check_branch
      %203 = sbr.rel (%p201) target = $region24
    $region23: #{deconv_decoder_forward.2} parent=5 // pred_region
      // Predicated region
      $region25: #{deconv_decoder_forward.2} parent=23 // pred_check
        %p204 = pneg %p45
      $region26: #{deconv_decoder_forward.2} parent=23 // pred_check_branch
        %206 = sbr.rel (%p204) target = $region28
      $region27: #{deconv_decoder_forward.2} parent=23 // pred_region
        %p207 = scmp.lt.s32.totalorder %s18, 1
        %s208 = scalar_select %p207, %s18, 1
        %p209 = scmp.lt.s32.totalorder %s19, 8
        %s210 = scalar_select %p209, %s19, 8
        %s211 = smul.addr %s210, 2
        %s212 = smul.addr %s208, 18
        %s213 = sadd.s32 %s211, %s212
        %s214 = smul.addr %s213, 4
        %s215 = scalar_lea.vmem %s0, %s214
      $region28: #{deconv_decoder_forward.2} parent=23 // pred_fallthru
        _
      // Predicated region
      $region29: #{deconv_decoder_forward.2} parent=23 // pred_check
        %p216 = pneg %p75
      $region30: #{deconv_decoder_forward.2} parent=23 // pred_check_branch
        %218 = sbr.rel (%p216) target = $region32
      $region31: #{deconv_decoder_forward.2} parent=23 // pred_region
        %s219 = sadd.s32 %s19, 1
        %p220 = scmp.lt.s32.totalorder %s18, 1
        %s221 = scalar_select %p220, %s18, 1
        %p222 = scmp.lt.s32.totalorder %s219, 8
        %s223 = scalar_select %p222, %s219, 8
        %s224 = smul.addr %s223, 2
        %s225 = smul.addr %s221, 18
        %s226 = sadd.s32 %s224, %s225
        %s227 = smul.addr %s226, 4
        %s228 = scalar_lea.vmem %s1, %s227
        %s229 = sadd.s32 %s19, 1
      $region32: #{deconv_decoder_forward.2} parent=23 // pred_fallthru
        _
      // Predicated region
      $region33: #{deconv_decoder_forward.2} parent=23 // pred_check
        %p230 = pneg %p145
      $region34: #{deconv_decoder_forward.2} parent=23 // pred_check_branch
        %232 = sbr.rel (%p230) target = $region36
      $region35: #{deconv_decoder_forward.2} parent=23 // pred_region
        %s233 = smul.u32 2, %s19
        %p234 = scmp.lt.s32.totalorder %s18, 1
        %s235 = scalar_select %p234, %s18, 1
        %p236 = scmp.lt.s32.totalorder %s233, 15
        %s237 = scalar_select %p236, %s233, 15
        %s238 = smul.addr %s235, 16
        %s239 = sadd.s32 %s237, %s238
        %s240 = smul.addr %s239, 4
        %s241 = scalar_lea.vmem %s4, %s240
        %s242 = smul.u32 2, %s19
      $region36: #{deconv_decoder_forward.2} parent=23 // pred_fallthru
        _
    $region24: #{deconv_decoder_forward.2} parent=5 // pred_fallthru
      _
    %p243 = scmp.le.s32.totalorder 1, %s11
    %p244 = scmp.lt.s32.totalorder %s11, 17
    %p245 = pnand %p243, %p244
    %p246 = pneg %p245
    // Predicated region
    $region37: #{deconv_decoder_forward.2} parent=5 // pred_check
      _
    $region38: #{deconv_decoder_forward.2} parent=5 // pred_check_branch
      %248 = sbr.rel (%p245) target = $region40
    $region39: #{deconv_decoder_forward.2} parent=5 // pred_region
      %s249 = ssub.s32 %s11, 1
      %p250 = scmp.lt.s32.totalorder %s20, 1
      %s251 = scalar_select %p250, %s20, 1
      %p252 = scmp.lt.s32.totalorder %s21, 8
      %s253 = scalar_select %p252, %s21, 8
      %s254 = smul.addr %s253, 2
      %s255 = smul.addr %s251, 18
      %s256 = sadd.s32 %s254, %s255
      %s257 = smul.addr %s256, 4
      %s258 = scalar_lea.vmem %s0, %s257
      %p259 = pneg %p51
      %p260 = pneg %p48
      %s261 = sadd.s32 %s21, 1
      %p262 = scmp.lt.s32.totalorder %s20, 1
      %s263 = scalar_select %p262, %s20, 1
      %p264 = scmp.lt.s32.totalorder %s261, 8
      %s265 = scalar_select %p264, %s261, 8
      %s266 = smul.addr %s265, 2
      %s267 = smul.addr %s263, 18
      %s268 = sadd.s32 %s266, %s267
      %s269 = smul.addr %s268, 4
      %s270 = scalar_lea.vmem %s1, %s269
      %p271 = pneg %p81
      %p272 = pneg %p78
      %p273 = pneg %p102
      %p274 = pneg %p99
      %p275 = pneg %p123
      %p276 = pneg %p120
      %s277 = smul.u32 2, %s21
      %p278 = scmp.lt.s32.totalorder %s20, 1
      %s279 = scalar_select %p278, %s20, 1
      %p280 = scmp.lt.s32.totalorder %s277, 15
      %s281 = scalar_select %p280, %s277, 15
      %s282 = smul.addr %s279, 16
      %s283 = sadd.s32 %s281, %s282
      %s284 = smul.addr %s283, 4
      %s285 = scalar_lea.vmem %s4, %s284
      %p286 = pneg %p151
      %p287 = pneg %p148
      %p288 = pneg %p179
      %p289 = pneg %p176
      %s290 = smul.u32 2, %s21
      %p291 = scmp.lt.s32.totalorder %s20, 1
      %s292 = scalar_select %p291, %s20, 1
      %p293 = scmp.lt.s32.totalorder %s290, 15
      %s294 = scalar_select %p293, %s290, 15
      %s295 = smul.addr %s292, 16
      %s296 = sadd.s32 %s294, %s295
      %s297 = smul.addr %s296, 4
      %s298 = scalar_lea.vmem %s5, %s297
      %p299 = scmp.lt.s32.totalorder %s20, 1
      %s300 = scalar_select %p299, %s20, 1
      %p301 = scmp.lt.s32.totalorder %s21, 8
      %s302 = scalar_select %p301, %s21, 8
      %s303 = smul.addr %s302, 2
      %s304 = smul.addr %s300, 18
      %s305 = sadd.s32 %s303, %s304
      %s306 = smul.addr %s305, 4
      %s307 = scalar_lea.vmem %s0, %s306
      %s308 = sadd.s32 %s21, 1
      %p309 = scmp.lt.s32.totalorder %s20, 1
      %s310 = scalar_select %p309, %s20, 1
      %p311 = scmp.lt.s32.totalorder %s308, 8
      %s312 = scalar_select %p311, %s308, 8
      %s313 = smul.addr %s312, 2
      %s314 = smul.addr %s310, 18
      %s315 = sadd.s32 %s313, %s314
      %s316 = smul.addr %s315, 4
      %s317 = scalar_lea.vmem %s1, %s316
      %s318 = sadd.s32 %s21, 1
      %s319 = smul.u32 2, %s21
      %p320 = scmp.lt.s32.totalorder %s20, 1
      %s321 = scalar_select %p320, %s20, 1
      %p322 = scmp.lt.s32.totalorder %s319, 15
      %s323 = scalar_select %p322, %s319, 15
      %s324 = smul.addr %s321, 16
      %s325 = sadd.s32 %s323, %s324
      %s326 = smul.addr %s325, 4
      %s327 = scalar_lea.vmem %s4, %s326
      %s328 = smul.u32 2, %s21
      %s329 = smul.u32 2, %s21
      %p330 = scmp.lt.s32.totalorder %s20, 1
      %s331 = scalar_select %p330, %s20, 1
      %p332 = scmp.lt.s32.totalorder %s329, 15
      %s333 = scalar_select %p332, %s329, 15
      %s334 = smul.addr %s331, 16
      %s335 = sadd.s32 %s333, %s334
      %s336 = smul.addr %s335, 4
      %s337 = scalar_lea.vmem %s5, %s336
      %s338 = smul.u32 2, %s21
      %v340 = vld [vmem:[%s307] sm:$0xf]
      %v341 = vld [vmem:[%s307 + $0x4] sm:$0x1]
      %v342 = vunpack.c.l.bf16 %v340
      %v343 = vunpack.c.l.bf16 %v341
      %v344 = vld [vmem:[%s317] sm:$0xf]
      %v345 = vld [vmem:[%s317 + $0x4] sm:$0x1]
      %v346 = vunpack.c.l.bf16 %v344
      %v347 = vunpack.c.l.bf16 %v345
      %v348 = vpack.c.bf16 %v347, %v346
      %v349 = vpack.c.bf16 %v346, %v346
      %v350 = vpack.c.bf16 %v343, %v342
      %v351 = vpack.c.bf16 %v342, %v342
      %v352 = vld [vmem:[%s3] sm:$0x1]
      %v353 = vld [vmem:[%s2] sm:$0xf]
      %v354 = vld [vmem:[%s2 + $0x4] sm:$0xf]
      %s355 = scalar_lea.vmem %s2, 8
      %v356 = vld [vmem:[%s355] sm:$0xf]
      %v357 = vld [vmem:[%s355 + $0x4] sm:$0xf]
      %v360 = vunpack.c.l.b16 %v356
      %v361 = vunpack.c.l.b16 %v357
      %v362 = vpack.c.b16 %v361, %v360
      %vm364 = vcmask 130048
      %v366 = vsel %vm364, %v349, 0
      %368 = vmatprep.subr.bf16.mxu0 0
      %369 = vmatpush1.bf16.msra.mxu0 0
      %370 = vmatprep.subr.bf16.mxu0 0
      %371 = vmatpush1.bf16.msra.mxu0 0
      %372 = vmatprep.subr.bf16.mxu0 0
      %373 = vmatpush1.bf16.msra.mxu0 0
      %374 = vmatprep.subr.bf16.mxu0 0
      %375 = vmatpush1.bf16.msra.mxu0 0
      %376 = vmatprep.subr.bf16.mxu0 0
      %377 = vmatpush1.bf16.msra.mxu0 0
      %378 = vmatprep.subr.bf16.mxu0 0
      %379 = vmatpush1.bf16.msra.mxu0 0
      %380 = vmatprep.subr.bf16.mxu0 0
      %381 = vmatpush1.bf16.msra.mxu0 0
      %382 = vmatprep.subr.bf16.mxu0 0
      %383 = vmatpush1.bf16.msra.mxu0 %v362
      %384 = vmatprep.subr.bf16.mxu0 0
      %385 = vmatpush2.bf16.msra.mxu0 0
      %386 = vmatprep.subr.bf16.mxu0 0
      %387 = vmatpush2.bf16.msra.mxu0 0
      %388 = vmatprep.subr.bf16.mxu0 0
      %389 = vmatpush2.bf16.msra.mxu0 0
      %390 = vmatprep.subr.bf16.mxu0 0
      %391 = vmatpush2.bf16.msra.mxu0 0
      %392 = vmatprep.subr.bf16.mxu0 0
      %393 = vmatpush2.bf16.msra.mxu0 0
      %394 = vmatprep.subr.bf16.mxu0 0
      %395 = vmatpush2.bf16.msra.mxu0 0
      %396 = vmatprep.subr.bf16.mxu0 0
      %397 = vmatpush2.bf16.msra.mxu0 0
      %398 = vmatprep.subr.bf16.mxu0 0
      %399 = vmatpush2.bf16.msra.mxu0 0
      %400 = vmatprep.mubr.bf16.mxu0 0
      %401 = vmatmul.mubr.bf16.gmra.mxu0 %v366
      %v402 = vpop.f32.mrf.mxu0
      %v403 = vadd.f32 0.0, %v402
      %v404 = vpop.f32.mrf.mxu0
      %v405 = vpop.f32.mrf.mxu0
      %v406 = vpop.f32.mrf.mxu0
      %407 = vdwg.mxu0
      %v409 = vshrl.u32 %v348, 16
      %v411 = vshll.u32 %v348, 16
      %v413 = vrot.slane %v411, 1
      %v414 = vor.u32 %v409, %v413
      %v417 = vunpack.c.l.b16 %v353
      %v418 = vunpack.c.l.b16 %v354
      %v419 = vpack.c.b16 %v418, %v417
      %v422 = vsel %vm364, %v414, 0
      %424 = vmatprep.subr.bf16.mxu0 0
      %425 = vmatpush1.bf16.msra.mxu0 0
      %426 = vmatprep.subr.bf16.mxu0 0
      %427 = vmatpush1.bf16.msra.mxu0 0
      %428 = vmatprep.subr.bf16.mxu0 0
      %429 = vmatpush1.bf16.msra.mxu0 0
      %430 = vmatprep.subr.bf16.mxu0 0
      %431 = vmatpush1.bf16.msra.mxu0 0
      %432 = vmatprep.subr.bf16.mxu0 0
      %433 = vmatpush1.bf16.msra.mxu0 0
      %434 = vmatprep.subr.bf16.mxu0 0
      %435 = vmatpush1.bf16.msra.mxu0 0
      %436 = vmatprep.subr.bf16.mxu0 0
      %437 = vmatpush1.bf16.msra.mxu0 0
      %438 = vmatprep.subr.bf16.mxu0 0
      %439 = vmatpush1.bf16.msra.mxu0 %v419
      %440 = vmatprep.subr.bf16.mxu0 0
      %441 = vmatpush2.bf16.msra.mxu0 0
      %442 = vmatprep.subr.bf16.mxu0 0
      %443 = vmatpush2.bf16.msra.mxu0 0
      %444 = vmatprep.subr.bf16.mxu0 0
      %445 = vmatpush2.bf16.msra.mxu0 0
      %446 = vmatprep.subr.bf16.mxu0 0
      %447 = vmatpush2.bf16.msra.mxu0 0
      %448 = vmatprep.subr.bf16.mxu0 0
      %449 = vmatpush2.bf16.msra.mxu0 0
      %450 = vmatprep.subr.bf16.mxu0 0
      %451 = vmatpush2.bf16.msra.mxu0 0
      %452 = vmatprep.subr.bf16.mxu0 0
      %453 = vmatpush2.bf16.msra.mxu0 0
      %454 = vmatprep.subr.bf16.mxu0 0
      %455 = vmatpush2.bf16.msra.mxu0 0
      %456 = vmatprep.mubr.bf16.mxu0 0
      %457 = vmatmul.mubr.bf16.gmra.mxu0 %v422
      %v458 = vpop.f32.mrf.mxu0
      %v459 = vadd.f32 %v403, %v458
      %v460 = vpop.f32.mrf.mxu0
      %v461 = vpop.f32.mrf.mxu0
      %v462 = vpop.f32.mrf.mxu0
      %463 = vdwg.mxu0
      %s464 = scalar_lea.vmem %s2, 16
      %v465 = vld [vmem:[%s464] sm:$0xf]
      %v466 = vld [vmem:[%s464 + $0x4] sm:$0xf]
      %v468 = vshrl.u32 %v350, 16
      %v470 = vshll.u32 %v350, 16
      %v472 = vrot.slane %v470, 1
      %v473 = vor.u32 %v468, %v472
      %v476 = vunpack.c.l.b16 %v465
      %v477 = vunpack.c.l.b16 %v466
      %v478 = vpack.c.b16 %v477, %v476
      %v481 = vsel %vm364, %v473, 0
      %483 = vmatprep.subr.bf16.mxu0 0
      %484 = vmatpush1.bf16.msra.mxu0 0
      %485 = vmatprep.subr.bf16.mxu0 0
      %486 = vmatpush1.bf16.msra.mxu0 0
      %487 = vmatprep.subr.bf16.mxu0 0
      %488 = vmatpush1.bf16.msra.mxu0 0
      %489 = vmatprep.subr.bf16.mxu0 0
      %490 = vmatpush1.bf16.msra.mxu0 0
      %491 = vmatprep.subr.bf16.mxu0 0
      %492 = vmatpush1.bf16.msra.mxu0 0
      %493 = vmatprep.subr.bf16.mxu0 0
      %494 = vmatpush1.bf16.msra.mxu0 0
      %495 = vmatprep.subr.bf16.mxu0 0
      %496 = vmatpush1.bf16.msra.mxu0 0
      %497 = vmatprep.subr.bf16.mxu0 0
      %498 = vmatpush1.bf16.msra.mxu0 %v478
      %499 = vmatprep.subr.bf16.mxu0 0
      %500 = vmatpush2.bf16.msra.mxu0 0
      %501 = vmatprep.subr.bf16.mxu0 0
      %502 = vmatpush2.bf16.msra.mxu0 0
      %503 = vmatprep.subr.bf16.mxu0 0
      %504 = vmatpush2.bf16.msra.mxu0 0
      %505 = vmatprep.subr.bf16.mxu0 0
      %506 = vmatpush2.bf16.msra.mxu0 0
      %507 = vmatprep.subr.bf16.mxu0 0
      %508 = vmatpush2.bf16.msra.mxu0 0
      %509 = vmatprep.subr.bf16.mxu0 0
      %510 = vmatpush2.bf16.msra.mxu0 0
      %511 = vmatprep.subr.bf16.mxu0 0
      %512 = vmatpush2.bf16.msra.mxu0 0
      %513 = vmatprep.subr.bf16.mxu0 0
      %514 = vmatpush2.bf16.msra.mxu0 0
      %515 = vmatprep.mubr.bf16.mxu0 0
      %516 = vmatmul.mubr.bf16.gmra.mxu0 %v481
      %v517 = vpop.f32.mrf.mxu0
      %v518 = vadd.f32 0.0, %v517
      %v519 = vpop.f32.mrf.mxu0
      %v520 = vpop.f32.mrf.mxu0
      %v521 = vpop.f32.mrf.mxu0
      %522 = vdwg.mxu0
      %v523 = vadd.f32 %v459, %v518
      %s524 = scalar_lea.vmem %s2, 24
      %v525 = vld [vmem:[%s524] sm:$0xf]
      %v526 = vld [vmem:[%s524 + $0x4] sm:$0xf]
      %v529 = vunpack.c.l.b16 %v525
      %v530 = vunpack.c.l.b16 %v526
      %v531 = vpack.c.b16 %v530, %v529
      %v534 = vsel %vm364, %v351, 0
      %536 = vmatprep.subr.bf16.mxu0 0
      %537 = vmatpush1.bf16.msra.mxu0 0
      %538 = vmatprep.subr.bf16.mxu0 0
      %539 = vmatpush1.bf16.msra.mxu0 0
      %540 = vmatprep.subr.bf16.mxu0 0
      %541 = vmatpush1.bf16.msra.mxu0 0
      %542 = vmatprep.subr.bf16.mxu0 0
      %543 = vmatpush1.bf16.msra.mxu0 0
      %544 = vmatprep.subr.bf16.mxu0 0
      %545 = vmatpush1.bf16.msra.mxu0 0
      %546 = vmatprep.subr.bf16.mxu0 0
      %547 = vmatpush1.bf16.msra.mxu0 0
      %548 = vmatprep.subr.bf16.mxu0 0
      %549 = vmatpush1.bf16.msra.mxu0 0
      %550 = vmatprep.subr.bf16.mxu0 0
      %551 = vmatpush1.bf16.msra.mxu0 %v531
      %552 = vmatprep.subr.bf16.mxu0 0
      %553 = vmatpush2.bf16.msra.mxu0 0
      %554 = vmatprep.subr.bf16.mxu0 0
      %555 = vmatpush2.bf16.msra.mxu0 0
      %556 = vmatprep.subr.bf16.mxu0 0
      %557 = vmatpush2.bf16.msra.mxu0 0
      %558 = vmatprep.subr.bf16.mxu0 0
      %559 = vmatpush2.bf16.msra.mxu0 0
      %560 = vmatprep.subr.bf16.mxu0 0
      %561 = vmatpush2.bf16.msra.mxu0 0
      %562 = vmatprep.subr.bf16.mxu0 0
      %563 = vmatpush2.bf16.msra.mxu0 0
      %564 = vmatprep.subr.bf16.mxu0 0
      %565 = vmatpush2.bf16.msra.mxu0 0
      %566 = vmatprep.subr.bf16.mxu0 0
      %567 = vmatpush2.bf16.msra.mxu0 0
      %568 = vmatprep.mubr.bf16.mxu0 0
      %569 = vmatmul.mubr.bf16.gmra.mxu0 %v534
      %v570 = vpop.f32.mrf.mxu0
      %v571 = vadd.f32 0.0, %v570
      %v572 = vpop.f32.mrf.mxu0
      %v573 = vpop.f32.mrf.mxu0
      %v574 = vpop.f32.mrf.mxu0
      %575 = vdwg.mxu0
      %v576 = vadd.f32 %v523, %v571
      %v578 = vlaneseq
      %v579 = vshrl.u32 %v578, 7
      %v580 = vsub.s32 0, %v579
      %v581 = vrot.slane %v352, %v580
      %v583 = vadd.f32 %v576, %v581
      %vm584 = vcmp.gt.f32.partialorder %v583, 0.0
      %v585 = vmin.f32 %v583, 0.0
      %v586 = vmul.f32 %v585, 1.442695
      %v587 = vpow.pop %v586
      %v588 = vsub.f32 %v587, 1.0
      %v589 = vsel %vm584, %v583, %v588
      %v590 = vld [vmem:[%s327] sm:$0xf]
      %v591 = vunpack.c.l.bf16 %v590
      %v592 = vadd.f32 %v589, %v591
      %v593 = vpack.c.bf16 %v592, %v592
      %vm594 = vcmask 125952
      %595 = vst.msk [vmem:[%s337] sm:$0xf] %vm594, %v593
      %s596 = scalar_lea.vmem %s2, 32
      %v597 = vld [vmem:[%s596] sm:$0xf]
      %v598 = vld [vmem:[%s596 + $0x4] sm:$0xf]
      %s599 = scalar_lea.vmem %s2, 40
      %v600 = vld [vmem:[%s599] sm:$0xf]
      %v601 = vld [vmem:[%s599 + $0x4] sm:$0xf]
      %v604 = vunpack.c.l.b16 %v600
      %v605 = vunpack.c.l.b16 %v601
      %v606 = vpack.c.b16 %v605, %v604
      %608 = vmatprep.subr.bf16.mxu0 0
      %609 = vmatpush1.bf16.msra.mxu0 0
      %610 = vmatprep.subr.bf16.mxu0 0
      %611 = vmatpush1.bf16.msra.mxu0 0
      %612 = vmatprep.subr.bf16.mxu0 0
      %613 = vmatpush1.bf16.msra.mxu0 0
      %614 = vmatprep.subr.bf16.mxu0 0
      %615 = vmatpush1.bf16.msra.mxu0 0
      %616 = vmatprep.subr.bf16.mxu0 0
      %617 = vmatpush1.bf16.msra.mxu0 0
      %618 = vmatprep.subr.bf16.mxu0 0
      %619 = vmatpush1.bf16.msra.mxu0 0
      %620 = vmatprep.subr.bf16.mxu0 0
      %621 = vmatpush1.bf16.msra.mxu0 0
      %622 = vmatprep.subr.bf16.mxu0 0
      %623 = vmatpush1.bf16.msra.mxu0 %v606
      %624 = vmatprep.subr.bf16.mxu0 0
      %625 = vmatpush2.bf16.msra.mxu0 0
      %626 = vmatprep.subr.bf16.mxu0 0
      %627 = vmatpush2.bf16.msra.mxu0 0
      %628 = vmatprep.subr.bf16.mxu0 0
      %629 = vmatpush2.bf16.msra.mxu0 0
      %630 = vmatprep.subr.bf16.mxu0 0
      %631 = vmatpush2.bf16.msra.mxu0 0
      %632 = vmatprep.subr.bf16.mxu0 0
      %633 = vmatpush2.bf16.msra.mxu0 0
      %634 = vmatprep.subr.bf16.mxu0 0
      %635 = vmatpush2.bf16.msra.mxu0 0
      %636 = vmatprep.subr.bf16.mxu0 0
      %637 = vmatpush2.bf16.msra.mxu0 0
      %638 = vmatprep.subr.bf16.mxu0 0
      %639 = vmatpush2.bf16.msra.mxu0 0
      %640 = vmatprep.mubr.bf16.mxu0 0
      %641 = vmatmul.mubr.bf16.gmra.mxu0 %v366
      %v642 = vpop.f32.mrf.mxu0
      %v643 = vadd.f32 0.0, %v642
      %v644 = vpop.f32.mrf.mxu0
      %v645 = vpop.f32.mrf.mxu0
      %v646 = vpop.f32.mrf.mxu0
      %647 = vdwg.mxu0
      %v650 = vunpack.c.l.b16 %v597
      %v651 = vunpack.c.l.b16 %v598
      %v652 = vpack.c.b16 %v651, %v650
      %654 = vmatprep.subr.bf16.mxu0 0
      %655 = vmatpush1.bf16.msra.mxu0 0
      %656 = vmatprep.subr.bf16.mxu0 0
      %657 = vmatpush1.bf16.msra.mxu0 0
      %658 = vmatprep.subr.bf16.mxu0 0
      %659 = vmatpush1.bf16.msra.mxu0 0
      %660 = vmatprep.subr.bf16.mxu0 0
      %661 = vmatpush1.bf16.msra.mxu0 0
      %662 = vmatprep.subr.bf16.mxu0 0
      %663 = vmatpush1.bf16.msra.mxu0 0
      %664 = vmatprep.subr.bf16.mxu0 0
      %665 = vmatpush1.bf16.msra.mxu0 0
      %666 = vmatprep.subr.bf16.mxu0 0
      %667 = vmatpush1.bf16.msra.mxu0 0
      %668 = vmatprep.subr.bf16.mxu0 0
      %669 = vmatpush1.bf16.msra.mxu0 %v652
      %670 = vmatprep.subr.bf16.mxu0 0
      %671 = vmatpush2.bf16.msra.mxu0 0
      %672 = vmatprep.subr.bf16.mxu0 0
      %673 = vmatpush2.bf16.msra.mxu0 0
      %674 = vmatprep.subr.bf16.mxu0 0
      %675 = vmatpush2.bf16.msra.mxu0 0
      %676 = vmatprep.subr.bf16.mxu0 0
      %677 = vmatpush2.bf16.msra.mxu0 0
      %678 = vmatprep.subr.bf16.mxu0 0
      %679 = vmatpush2.bf16.msra.mxu0 0
      %680 = vmatprep.subr.bf16.mxu0 0
      %681 = vmatpush2.bf16.msra.mxu0 0
      %682 = vmatprep.subr.bf16.mxu0 0
      %683 = vmatpush2.bf16.msra.mxu0 0
      %684 = vmatprep.subr.bf16.mxu0 0
      %685 = vmatpush2.bf16.msra.mxu0 0
      %686 = vmatprep.mubr.bf16.mxu0 0
      %687 = vmatmul.mubr.bf16.gmra.mxu0 %v422
      %v688 = vpop.f32.mrf.mxu0
      %v689 = vadd.f32 %v643, %v688
      %v690 = vpop.f32.mrf.mxu0
      %v691 = vpop.f32.mrf.mxu0
      %v692 = vpop.f32.mrf.mxu0
      %693 = vdwg.mxu0
      %s694 = scalar_lea.vmem %s2, 48
      %v695 = vld [vmem:[%s694] sm:$0xf]
      %v696 = vld [vmem:[%s694 + $0x4] sm:$0xf]
      %v699 = vunpack.c.l.b16 %v695
      %v700 = vunpack.c.l.b16 %v696
      %v701 = vpack.c.b16 %v700, %v699
      %703 = vmatprep.subr.bf16.mxu0 0
      %704 = vmatpush1.bf16.msra.mxu0 0
      %705 = vmatprep.subr.bf16.mxu0 0
      %706 = vmatpush1.bf16.msra.mxu0 0
      %707 = vmatprep.subr.bf16.mxu0 0
      %708 = vmatpush1.bf16.msra.mxu0 0
      %709 = vmatprep.subr.bf16.mxu0 0
      %710 = vmatpush1.bf16.msra.mxu0 0
      %711 = vmatprep.subr.bf16.mxu0 0
      %712 = vmatpush1.bf16.msra.mxu0 0
      %713 = vmatprep.subr.bf16.mxu0 0
      %714 = vmatpush1.bf16.msra.mxu0 0
      %715 = vmatprep.subr.bf16.mxu0 0
      %716 = vmatpush1.bf16.msra.mxu0 0
      %717 = vmatprep.subr.bf16.mxu0 0
      %718 = vmatpush1.bf16.msra.mxu0 %v701
      %719 = vmatprep.subr.bf16.mxu0 0
      %720 = vmatpush2.bf16.msra.mxu0 0
      %721 = vmatprep.subr.bf16.mxu0 0
      %722 = vmatpush2.bf16.msra.mxu0 0
      %723 = vmatprep.subr.bf16.mxu0 0
      %724 = vmatpush2.bf16.msra.mxu0 0
      %725 = vmatprep.subr.bf16.mxu0 0
      %726 = vmatpush2.bf16.msra.mxu0 0
      %727 = vmatprep.subr.bf16.mxu0 0
      %728 = vmatpush2.bf16.msra.mxu0 0
      %729 = vmatprep.subr.bf16.mxu0 0
      %730 = vmatpush2.bf16.msra.mxu0 0
      %731 = vmatprep.subr.bf16.mxu0 0
      %732 = vmatpush2.bf16.msra.mxu0 0
      %733 = vmatprep.subr.bf16.mxu0 0
      %734 = vmatpush2.bf16.msra.mxu0 0
      %735 = vmatprep.mubr.bf16.mxu0 0
      %736 = vmatmul.mubr.bf16.gmra.mxu0 %v481
      %v737 = vpop.f32.mrf.mxu0
      %v738 = vadd.f32 0.0, %v737
      %v739 = vpop.f32.mrf.mxu0
      %v740 = vpop.f32.mrf.mxu0
      %v741 = vpop.f32.mrf.mxu0
      %742 = vdwg.mxu0
      %v743 = vadd.f32 %v689, %v738
      %s744 = scalar_lea.vmem %s2, 56
      %v745 = vld [vmem:[%s744] sm:$0xf]
      %v746 = vld [vmem:[%s744 + $0x4] sm:$0xf]
      %v749 = vunpack.c.l.b16 %v745
      %v750 = vunpack.c.l.b16 %v746
      %v751 = vpack.c.b16 %v750, %v749
      %753 = vmatprep.subr.bf16.mxu0 0
      %754 = vmatpush1.bf16.msra.mxu0 0
      %755 = vmatprep.subr.bf16.mxu0 0
      %756 = vmatpush1.bf16.msra.mxu0 0
      %757 = vmatprep.subr.bf16.mxu0 0
      %758 = vmatpush1.bf16.msra.mxu0 0
      %759 = vmatprep.subr.bf16.mxu0 0
      %760 = vmatpush1.bf16.msra.mxu0 0
      %761 = vmatprep.subr.bf16.mxu0 0
      %762 = vmatpush1.bf16.msra.mxu0 0
      %763 = vmatprep.subr.bf16.mxu0 0
      %764 = vmatpush1.bf16.msra.mxu0 0
      %765 = vmatprep.subr.bf16.mxu0 0
      %766 = vmatpush1.bf16.msra.mxu0 0
      %767 = vmatprep.subr.bf16.mxu0 0
      %768 = vmatpush1.bf16.msra.mxu0 %v751
      %769 = vmatprep.subr.bf16.mxu0 0
      %770 = vmatpush2.bf16.msra.mxu0 0
      %771 = vmatprep.subr.bf16.mxu0 0
      %772 = vmatpush2.bf16.msra.mxu0 0
      %773 = vmatprep.subr.bf16.mxu0 0
      %774 = vmatpush2.bf16.msra.mxu0 0
      %775 = vmatprep.subr.bf16.mxu0 0
      %776 = vmatpush2.bf16.msra.mxu0 0
      %777 = vmatprep.subr.bf16.mxu0 0
      %778 = vmatpush2.bf16.msra.mxu0 0
      %779 = vmatprep.subr.bf16.mxu0 0
      %780 = vmatpush2.bf16.msra.mxu0 0
      %781 = vmatprep.subr.bf16.mxu0 0
      %782 = vmatpush2.bf16.msra.mxu0 0
      %783 = vmatprep.subr.bf16.mxu0 0
      %784 = vmatpush2.bf16.msra.mxu0 0
      %785 = vmatprep.mubr.bf16.mxu0 0
      %786 = vmatmul.mubr.bf16.gmra.mxu0 %v534
      %v787 = vpop.f32.mrf.mxu0
      %v788 = vadd.f32 0.0, %v787
      %v789 = vpop.f32.mrf.mxu0
      %v790 = vpop.f32.mrf.mxu0
      %v791 = vpop.f32.mrf.mxu0
      %792 = vdwg.mxu0
      %v793 = vadd.f32 %v743, %v788
      %v794 = vadd.f32 %v793, %v581
      %vm795 = vcmp.gt.f32.partialorder %v794, 0.0
      %v796 = vmin.f32 %v794, 0.0
      %v797 = vmul.f32 %v796, 1.442695
      %v798 = vpow.pop %v797
      %v799 = vsub.f32 %v798, 1.0
      %v800 = vsel %vm795, %v794, %v799
      %s801 = scalar_lea.vmem %s327, 4
      %v802 = vld [vmem:[%s801] sm:$0xf]
      %v803 = vunpack.c.l.bf16 %v802
      %v804 = vadd.f32 %v800, %v803
      %v805 = vpack.c.bf16 %v804, %v804
      %s806 = scalar_lea.vmem %s337, 4
      %807 = vst.msk [vmem:[%s806] sm:$0xf] %vm594, %v805
      %s808 = smul.u32 2, %s21
      %p809 = scmp.lt.s32.totalorder %s20, 1
      %s810 = scalar_select %p809, %s20, 1
      %p811 = scmp.lt.s32.totalorder %s808, 15
      %s812 = scalar_select %p811, %s808, 15
      %s813 = smul.addr %s810, 16
      %s814 = sadd.s32 %s812, %s813
      %s815 = smul.addr %s814, 4
      %s816 = scalar_lea.vmem %s5, %s815
      // Predicated region
      $region41: #{deconv_decoder_forward.2} parent=39 // pred_check
        %p817 = pneg %p176
      $region42: #{deconv_decoder_forward.2} parent=39 // pred_check_branch
        %819 = sbr.rel (%p817) target = $region44
      $region43: #{deconv_decoder_forward.2} parent=39 // pred_region
        %s820 = smul.u32 2, %s21
      $region44: #{deconv_decoder_forward.2} parent=39 // pred_fallthru
        _
    $region40: #{deconv_decoder_forward.2} parent=5 // pred_fallthru
      _
    %p821 = scmp.le.s32.totalorder 2, %s11
    // Predicated region
    $region45: #{deconv_decoder_forward.2} parent=5 // pred_check
      %p822 = pneg %p821
    $region46: #{deconv_decoder_forward.2} parent=5 // pred_check_branch
      %824 = sbr.rel (%p822) target = $region48
    $region47: #{deconv_decoder_forward.2} parent=5 // pred_region
      %s825 = ssub.s32 %s11, 2
      // Predicated region
      $region49: #{deconv_decoder_forward.2} parent=47 // pred_check
        %p826 = pneg %p182
      $region50: #{deconv_decoder_forward.2} parent=47 // pred_check_branch
        %828 = sbr.rel (%p826) target = $region52
      $region51: #{deconv_decoder_forward.2} parent=47 // pred_region
        %s829 = smul.u32 2, %s23
        %p830 = scmp.lt.s32.totalorder %s22, 1
        %s831 = scalar_select %p830, %s22, 1
        %p832 = scmp.lt.s32.totalorder %s829, 15
        %s833 = scalar_select %p832, %s829, 15
        %s834 = smul.addr %s831, 16
        %s835 = sadd.s32 %s833, %s834
        %s836 = smul.addr %s835, 4
        %s837 = scalar_lea.vmem %s5, %s836
      $region52: #{deconv_decoder_forward.2} parent=47 // pred_fallthru
        _
    $region48: #{deconv_decoder_forward.2} parent=5 // pred_fallthru
      _
  $region6: #{deconv_decoder_forward.2} parent=0 // loop_footer
    %s15 = sadd.s32 1, %s11
  $region7: #{deconv_decoder_forward.2} parent=0 // loop_footer_branch
    %10 = sbr.rel target = $region3
  $region8: #{deconv_decoder_forward.2} parent=0 // loop_exit
    _

// kernel: deconv_decoder_forward.3
$region0: #{deconv_decoder_forward.3}
  #allocation0 [shape = 'u32[]', space=smem, size = 0x4, offset = 0x4, fixed_abs, tag = 'smem constant byte address 0x4 - core index']
  #allocation1 [shape = 'u32[144,128]{1,0:T(1,128)}', space=vmem, size = 0x12000, scoped, tag = 'internal scratch']
  %s0 = inlined_call_operand.vmem [shape: bf16[2,18,18,8], index: 0, kind: input, shape index: {}, may-alias: {0,1}]
  %s1 = inlined_call_operand.vmem [shape: bf16[2,18,18,8], index: 1, kind: input, shape index: {}, may-alias: {0,1}]
  %s2 = inlined_call_operand.vmem [shape: bf16[2,4,8,8], index: 2, kind: input, shape index: {}]
  %s3 = inlined_call_operand.vmem [shape: f32[1,8], index: 3, kind: input, shape index: {}]
  %s4 = inlined_call_operand.vmem [shape: f32[8,6], index: 4, kind: input, shape index: {}]
  %s5 = inlined_call_operand.vmem [shape: f32[1,6], index: 5, kind: input, shape index: {}]
  %s6 = inlined_call_operand.vmem [shape: f32[8,6], index: 6, kind: input, shape index: {}]
  %s7 = inlined_call_operand.vmem [shape: f32[1,6], index: 7, kind: input, shape index: {}]
  %s8 = inlined_call_operand.vmem [shape: f32[2,34,17,6], index: 8, kind: input, shape index: {}]
  %s9 = inlined_call_operand.vmem [shape: f32[2,34,17,8], index: 9, kind: output, shape index: {0}]
  %s10 = inlined_call_operand.vmem [shape: f32[2,34,17,6], index: 10, kind: output, shape index: {1}]
  %11 = xla_tuple %s9, %s10
  %s12 = sld [smem:[#allocation0]]
  $region77: #{deconv_decoder_forward.3} parent=0
    _
  %s14 = ssub.s32 1, %s12
  %s15 = scalar_select 0, %s14, %s12
  loop: start=0, step=1, limit=36
  $region2: #{deconv_decoder_forward.3} parent=0 // loop_pre_header
    _
  $region3: #{deconv_decoder_forward.3} parent=0 // loop_header
    %s17 = sphi 0, %s21
    %p18 = scmp.ge.s32.totalorder %s17, 36
    %s24 = sphi 0, %s36
    %s25 = sphi 0, %s32
    %s26 = sphi 0, %s24
    %s27 = sphi 0, %s25
    %s28 = sphi 0, %s26
    %s29 = sphi 0, %s27
    %s41 = sphi 0, %s43
    %s44 = sphi 0, %s41
    %s45 = sphi 0, %s44
    %s61 = sphi 0, %s45
    %s71 = sphi 0, %s73
    %s74 = sphi 0, %s71
    %s75 = sphi 0, %s74
    %s91 = sphi 0, %s75
    %s95 = sphi 0, %s95
    %s97 = sphi 0, %s95
    %s98 = sphi 0, %s97
    %s112 = sphi 0, %s98
    %s116 = sphi 0, %s116
    %s118 = sphi 0, %s116
    %s119 = sphi 0, %s118
    %s133 = sphi 0, %s119
    %s137 = sphi 0, %s137
    %s139 = sphi 0, %s137
    %s140 = sphi 0, %s139
    %s154 = sphi 0, %s140
    %s158 = sphi 0, %s158
    %s160 = sphi 0, %s158
    %s161 = sphi 0, %s160
    %s175 = sphi 0, %s161
    %s179 = sphi 0, %s179
    %s181 = sphi 0, %s179
    %s182 = sphi 0, %s181
    %s196 = sphi 0, %s182
    %s200 = sphi 0, %s200
    %s202 = sphi 0, %s200
    %s203 = sphi 0, %s202
    %s217 = sphi 0, %s203
    %s225 = sphi 0, %s227
    %s228 = sphi 0, %s225
    %s229 = sphi 0, %s228
    %s245 = sphi 0, %s229
    %s253 = sphi 0, %s255
    %s256 = sphi 0, %s253
    %s257 = sphi 0, %s256
    %s273 = sphi 0, %s257
    %s281 = sphi 0, %s283
    %s284 = sphi 0, %s281
    %s285 = sphi 0, %s284
    %s301 = sphi 0, %s285
  $region4: #{deconv_decoder_forward.3} parent=0 // loop_header_branch
    %20 = sbr.rel (%p18) target = $region8
  $region5: #{deconv_decoder_forward.3} parent=0 // loop_body
    %s22 = ssub.s32 %s17, 1
    %s23 = ssub.s32 %s17, 2
    %s30 = sadd.s32 1, %s25
    %p31 = scmp.ge.s32.totalorder %s30, 17
    %s32 = scalar_select %p31, 0, %s30
    %s33 = sadd.s32 1, %s24
    %s34 = scalar_select %p31, %s33, %s24
    %p35 = scmp.ge.s32.totalorder %s34, 2
    %s36 = scalar_select %p35, 0, %s34
    %s37 = ssub.s32 %s24, %s36
    %s38 = ssub.s32 %s25, %s32
    %s39 = sor.u32 %s37, %s38
    %p40 = scmp.eq.s32.totalorder %s39, 0
    %s42 = sadd.s32 %s41, 1
    %s43 = scalar_select %p40, %s41, %s42
    %p46 = pneg %p40
    %p47 = scmp.eq.s32.totalorder %s17, 33
    %p48 = por %p46, %p47
    %p49 = scmp.ne.s32.totalorder %s41, %s44
    %p50 = scmp.eq.s32.totalorder %s17, 0
    %p51 = por %p49, %p50
    %p52 = scmp.ne.s32.totalorder %s41, %s44
    %p53 = scmp.eq.s32.totalorder %s22, 33
    %p54 = por %p52, %p53
    %p55 = scmp.ne.s32.totalorder %s44, %s45
    %p56 = scmp.eq.s32.totalorder %s22, 0
    %p57 = por %p55, %p56
    %p58 = scmp.ne.s32.totalorder %s44, %s45
    %p59 = scmp.eq.s32.totalorder %s23, 33
    %p60 = por %p58, %p59
    %p62 = scmp.ne.s32.totalorder %s45, %s61
    %p63 = scmp.eq.s32.totalorder %s23, 0
    %p64 = por %p62, %p63
    %s65 = sadd.s32 %s25, 1
    %s66 = sadd.s32 %s32, 1
    %s67 = ssub.s32 %s24, %s36
    %s68 = ssub.s32 %s65, %s66
    %s69 = sor.u32 %s67, %s68
    %p70 = scmp.eq.s32.totalorder %s69, 0
    %s72 = sadd.s32 %s71, 1
    %s73 = scalar_select %p70, %s71, %s72
    %p76 = pneg %p70
    %p77 = scmp.eq.s32.totalorder %s17, 33
    %p78 = por %p76, %p77
    %p79 = scmp.ne.s32.totalorder %s71, %s74
    %p80 = scmp.eq.s32.totalorder %s17, 0
    %p81 = por %p79, %p80
    %p82 = scmp.ne.s32.totalorder %s71, %s74
    %p83 = scmp.eq.s32.totalorder %s22, 33
    %p84 = por %p82, %p83
    %p85 = scmp.ne.s32.totalorder %s74, %s75
    %p86 = scmp.eq.s32.totalorder %s22, 0
    %p87 = por %p85, %p86
    %p88 = scmp.ne.s32.totalorder %s74, %s75
    %p89 = scmp.eq.s32.totalorder %s23, 33
    %p90 = por %p88, %p89
    %p92 = scmp.ne.s32.totalorder %s75, %s91
    %p93 = scmp.eq.s32.totalorder %s23, 0
    %p94 = por %p92, %p93
    %s96 = sadd.s32 %s95, 1
    %p99 = scmp.eq.s32.totalorder %s17, 33
    %p100 = scmp.ne.s32.totalorder %s95, %s97
    %p101 = scmp.eq.s32.totalorder %s17, 0
    %p102 = por %p100, %p101
    %p103 = scmp.ne.s32.totalorder %s95, %s97
    %p104 = scmp.eq.s32.totalorder %s22, 33
    %p105 = por %p103, %p104
    %p106 = scmp.ne.s32.totalorder %s97, %s98
    %p107 = scmp.eq.s32.totalorder %s22, 0
    %p108 = por %p106, %p107
    %p109 = scmp.ne.s32.totalorder %s97, %s98
    %p110 = scmp.eq.s32.totalorder %s23, 33
    %p111 = por %p109, %p110
    %p113 = scmp.ne.s32.totalorder %s98, %s112
    %p114 = scmp.eq.s32.totalorder %s23, 0
    %p115 = por %p113, %p114
    %s117 = sadd.s32 %s116, 1
    %p120 = scmp.eq.s32.totalorder %s17, 33
    %p121 = scmp.ne.s32.totalorder %s116, %s118
    %p122 = scmp.eq.s32.totalorder %s17, 0
    %p123 = por %p121, %p122
    %p124 = scmp.ne.s32.totalorder %s116, %s118
    %p125 = scmp.eq.s32.totalorder %s22, 33
    %p126 = por %p124, %p125
    %p127 = scmp.ne.s32.totalorder %s118, %s119
    %p128 = scmp.eq.s32.totalorder %s22, 0
    %p129 = por %p127, %p128
    %p130 = scmp.ne.s32.totalorder %s118, %s119
    %p131 = scmp.eq.s32.totalorder %s23, 33
    %p132 = por %p130, %p131
    %p134 = scmp.ne.s32.totalorder %s119, %s133
    %p135 = scmp.eq.s32.totalorder %s23, 0
    %p136 = por %p134, %p135
    %s138 = sadd.s32 %s137, 1
    %p141 = scmp.eq.s32.totalorder %s17, 33
    %p142 = scmp.ne.s32.totalorder %s137, %s139
    %p143 = scmp.eq.s32.totalorder %s17, 0
    %p144 = por %p142, %p143
    %p145 = scmp.ne.s32.totalorder %s137, %s139
    %p146 = scmp.eq.s32.totalorder %s22, 33
    %p147 = por %p145, %p146
    %p148 = scmp.ne.s32.totalorder %s139, %s140
    %p149 = scmp.eq.s32.totalorder %s22, 0
    %p150 = por %p148, %p149
    %p151 = scmp.ne.s32.totalorder %s139, %s140
    %p152 = scmp.eq.s32.totalorder %s23, 33
    %p153 = por %p151, %p152
    %p155 = scmp.ne.s32.totalorder %s140, %s154
    %p156 = scmp.eq.s32.totalorder %s23, 0
    %p157 = por %p155, %p156
    %s159 = sadd.s32 %s158, 1
    %p162 = scmp.eq.s32.totalorder %s17, 33
    %p163 = scmp.ne.s32.totalorder %s158, %s160
    %p164 = scmp.eq.s32.totalorder %s17, 0
    %p165 = por %p163, %p164
    %p166 = scmp.ne.s32.totalorder %s158, %s160
    %p167 = scmp.eq.s32.totalorder %s22, 33
    %p168 = por %p166, %p167
    %p169 = scmp.ne.s32.totalorder %s160, %s161
    %p170 = scmp.eq.s32.totalorder %s22, 0
    %p171 = por %p169, %p170
    %p172 = scmp.ne.s32.totalorder %s160, %s161
    %p173 = scmp.eq.s32.totalorder %s23, 33
    %p174 = por %p172, %p173
    %p176 = scmp.ne.s32.totalorder %s161, %s175
    %p177 = scmp.eq.s32.totalorder %s23, 0
    %p178 = por %p176, %p177
    %s180 = sadd.s32 %s179, 1
    %p183 = scmp.eq.s32.totalorder %s17, 33
    %p184 = scmp.ne.s32.totalorder %s179, %s181
    %p185 = scmp.eq.s32.totalorder %s17, 0
    %p186 = por %p184, %p185
    %p187 = scmp.ne.s32.totalorder %s179, %s181
    %p188 = scmp.eq.s32.totalorder %s22, 33
    %p189 = por %p187, %p188
    %p190 = scmp.ne.s32.totalorder %s181, %s182
    %p191 = scmp.eq.s32.totalorder %s22, 0
    %p192 = por %p190, %p191
    %p193 = scmp.ne.s32.totalorder %s181, %s182
    %p194 = scmp.eq.s32.totalorder %s23, 33
    %p195 = por %p193, %p194
    %p197 = scmp.ne.s32.totalorder %s182, %s196
    %p198 = scmp.eq.s32.totalorder %s23, 0
    %p199 = por %p197, %p198
    %s201 = sadd.s32 %s200, 1
    %p204 = scmp.eq.s32.totalorder %s17, 33
    %p205 = scmp.ne.s32.totalorder %s200, %s202
    %p206 = scmp.eq.s32.totalorder %s17, 0
    %p207 = por %p205, %p206
    %p208 = scmp.ne.s32.totalorder %s200, %s202
    %p209 = scmp.eq.s32.totalorder %s22, 33
    %p210 = por %p208, %p209
    %p211 = scmp.ne.s32.totalorder %s202, %s203
    %p212 = scmp.eq.s32.totalorder %s22, 0
    %p213 = por %p211, %p212
    %p214 = scmp.ne.s32.totalorder %s202, %s203
    %p215 = scmp.eq.s32.totalorder %s23, 33
    %p216 = por %p214, %p215
    %p218 = scmp.ne.s32.totalorder %s203, %s217
    %p219 = scmp.eq.s32.totalorder %s23, 0
    %p220 = por %p218, %p219
    %s221 = ssub.s32 %s24, %s36
    %s222 = ssub.s32 %s25, %s32
    %s223 = sor.u32 %s221, %s222
    %p224 = scmp.eq.s32.totalorder %s223, 0
    %s226 = sadd.s32 %s225, 1
    %s227 = scalar_select %p224, %s225, %s226
    %p230 = pneg %p224
    %p231 = scmp.eq.s32.totalorder %s17, 33
    %p232 = por %p230, %p231
    %p233 = scmp.ne.s32.totalorder %s225, %s228
    %p234 = scmp.eq.s32.totalorder %s17, 0
    %p235 = por %p233, %p234
    %p236 = scmp.ne.s32.totalorder %s225, %s228
    %p237 = scmp.eq.s32.totalorder %s22, 33
    %p238 = por %p236, %p237
    %p239 = scmp.ne.s32.totalorder %s228, %s229
    %p240 = scmp.eq.s32.totalorder %s22, 0
    %p241 = por %p239, %p240
    %p242 = scmp.ne.s32.totalorder %s228, %s229
    %p243 = scmp.eq.s32.totalorder %s23, 33
    %p244 = por %p242, %p243
    %p246 = scmp.ne.s32.totalorder %s229, %s245
    %p247 = scmp.eq.s32.totalorder %s23, 0
    %p248 = por %p246, %p247
    %s249 = ssub.s32 %s24, %s36
    %s250 = ssub.s32 %s25, %s32
    %s251 = sor.u32 %s249, %s250
    %p252 = scmp.eq.s32.totalorder %s251, 0
    %s254 = sadd.s32 %s253, 1
    %s255 = scalar_select %p252, %s253, %s254
    %p258 = pneg %p252
    %p259 = scmp.eq.s32.totalorder %s17, 33
    %p260 = por %p258, %p259
    %p261 = scmp.ne.s32.totalorder %s253, %s256
    %p262 = scmp.eq.s32.totalorder %s17, 0
    %p263 = por %p261, %p262
    %p264 = scmp.ne.s32.totalorder %s253, %s256
    %p265 = scmp.eq.s32.totalorder %s22, 33
    %p266 = por %p264, %p265
    %p267 = scmp.ne.s32.totalorder %s256, %s257
    %p268 = scmp.eq.s32.totalorder %s22, 0
    %p269 = por %p267, %p268
    %p270 = scmp.ne.s32.totalorder %s256, %s257
    %p271 = scmp.eq.s32.totalorder %s23, 33
    %p272 = por %p270, %p271
    %p274 = scmp.ne.s32.totalorder %s257, %s273
    %p275 = scmp.eq.s32.totalorder %s23, 0
    %p276 = por %p274, %p275
    %s277 = ssub.s32 %s24, %s36
    %s278 = ssub.s32 %s25, %s32
    %s279 = sor.u32 %s277, %s278
    %p280 = scmp.eq.s32.totalorder %s279, 0
    %s282 = sadd.s32 %s281, 1
    %s283 = scalar_select %p280, %s281, %s282
    %p286 = pneg %p280
    %p287 = scmp.eq.s32.totalorder %s17, 33
    %p288 = por %p286, %p287
    %p289 = scmp.ne.s32.totalorder %s281, %s284
    %p290 = scmp.eq.s32.totalorder %s17, 0
    %p291 = por %p289, %p290
    %p292 = scmp.ne.s32.totalorder %s281, %s284
    %p293 = scmp.eq.s32.totalorder %s22, 33
    %p294 = por %p292, %p293
    %p295 = scmp.ne.s32.totalorder %s284, %s285
    %p296 = scmp.eq.s32.totalorder %s22, 0
    %p297 = por %p295, %p296
    %p298 = scmp.ne.s32.totalorder %s284, %s285
    %p299 = scmp.eq.s32.totalorder %s23, 33
    %p300 = por %p298, %p299
    %p302 = scmp.ne.s32.totalorder %s285, %s301
    %p303 = scmp.eq.s32.totalorder %s23, 0
    %p304 = por %p302, %p303
    %p305 = scmp.le.s32.totalorder 1, %s17
    %p306 = scmp.lt.s32.totalorder %s17, 35
    %p307 = pnand %p305, %p306
    %p308 = pneg %p307
    // Predicated region
    $region9: #{deconv_decoder_forward.3} parent=5 // pred_check
      _
    $region10: #{deconv_decoder_forward.3} parent=5 // pred_check_branch
      %310 = sbr.rel (%p307) target = $region12
    $region11: #{deconv_decoder_forward.3} parent=5 // pred_region
      %s311 = ssub.s32 %s17, 1
      // Predicated region
      $region13: #{deconv_decoder_forward.3} parent=11 // pred_check
        %p312 = pneg %p108
      $region14: #{deconv_decoder_forward.3} parent=11 // pred_check_branch
        %314 = sbr.rel (%p312) target = $region16
      $region15: #{deconv_decoder_forward.3} parent=11 // pred_region
        _
      $region16: #{deconv_decoder_forward.3} parent=11 // pred_fallthru
        _
      // Predicated region
      $region17: #{deconv_decoder_forward.3} parent=11 // pred_check
        %p315 = pneg %p129
      $region18: #{deconv_decoder_forward.3} parent=11 // pred_check_branch
        %317 = sbr.rel (%p315) target = $region20
      $region19: #{deconv_decoder_forward.3} parent=11 // pred_region
        _
      $region20: #{deconv_decoder_forward.3} parent=11 // pred_fallthru
        _
      // Predicated region
      $region21: #{deconv_decoder_forward.3} parent=11 // pred_check
        %p318 = pneg %p150
      $region22: #{deconv_decoder_forward.3} parent=11 // pred_check_branch
        %320 = sbr.rel (%p318) target = $region24
      $region23: #{deconv_decoder_forward.3} parent=11 // pred_region
        _
      $region24: #{deconv_decoder_forward.3} parent=11 // pred_fallthru
        _
      // Predicated region
      $region25: #{deconv_decoder_forward.3} parent=11 // pred_check
        %p321 = pneg %p171
      $region26: #{deconv_decoder_forward.3} parent=11 // pred_check_branch
        %323 = sbr.rel (%p321) target = $region28
      $region27: #{deconv_decoder_forward.3} parent=11 // pred_region
        _
      $region28: #{deconv_decoder_forward.3} parent=11 // pred_fallthru
        _
      // Predicated region
      $region29: #{deconv_decoder_forward.3} parent=11 // pred_check
        %p324 = pneg %p192
      $region30: #{deconv_decoder_forward.3} parent=11 // pred_check_branch
        %326 = sbr.rel (%p324) target = $region32
      $region31: #{deconv_decoder_forward.3} parent=11 // pred_region
        _
      $region32: #{deconv_decoder_forward.3} parent=11 // pred_fallthru
        _
      // Predicated region
      $region33: #{deconv_decoder_forward.3} parent=11 // pred_check
        %p327 = pneg %p213
      $region34: #{deconv_decoder_forward.3} parent=11 // pred_check_branch
        %329 = sbr.rel (%p327) target = $region36
      $region35: #{deconv_decoder_forward.3} parent=11 // pred_region
        _
      $region36: #{deconv_decoder_forward.3} parent=11 // pred_fallthru
        _
    $region12: #{deconv_decoder_forward.3} parent=5 // pred_fallthru
      _
    %p330 = scmp.lt.s32.totalorder %s17, 34
    // Predicated region
    $region37: #{deconv_decoder_forward.3} parent=5 // pred_check
      %p331 = pneg %p330
    $region38: #{deconv_decoder_forward.3} parent=5 // pred_check_branch
      %333 = sbr.rel (%p331) target = $region40
    $region39: #{deconv_decoder_forward.3} parent=5 // pred_region
      // Predicated region
      $region41: #{deconv_decoder_forward.3} parent=39 // pred_check
        %p334 = pneg %p51
      $region42: #{deconv_decoder_forward.3} parent=39 // pred_check_branch
        %336 = sbr.rel (%p334) target = $region44
      $region43: #{deconv_decoder_forward.3} parent=39 // pred_region
        %p337 = scmp.lt.s32.totalorder %s24, 1
        %s338 = scalar_select %p337, %s24, 1
        %p339 = scmp.lt.s32.totalorder %s25, 17
        %s340 = scalar_select %p339, %s25, 17
        %s341 = smul.addr %s340, 3
        %s342 = smul.addr %s338, 54
        %s343 = sadd.s32 %s341, %s342
        %s344 = smul.addr %s343, 4
        %s345 = scalar_lea.vmem %s0, %s344
      $region44: #{deconv_decoder_forward.3} parent=39 // pred_fallthru
        _
      // Predicated region
      $region45: #{deconv_decoder_forward.3} parent=39 // pred_check
        %p346 = pneg %p81
      $region46: #{deconv_decoder_forward.3} parent=39 // pred_check_branch
        %348 = sbr.rel (%p346) target = $region48
      $region47: #{deconv_decoder_forward.3} parent=39 // pred_region
        %s349 = sadd.s32 %s25, 1
        %p350 = scmp.lt.s32.totalorder %s24, 1
        %s351 = scalar_select %p350, %s24, 1
        %p352 = scmp.lt.s32.totalorder %s349, 17
        %s353 = scalar_select %p352, %s349, 17
        %s354 = smul.addr %s353, 3
        %s355 = smul.addr %s351, 54
        %s356 = sadd.s32 %s354, %s355
        %s357 = smul.addr %s356, 4
        %s358 = scalar_lea.vmem %s1, %s357
        %s359 = sadd.s32 %s25, 1
      $region48: #{deconv_decoder_forward.3} parent=39 // pred_fallthru
        _
      // Predicated region
      $region49: #{deconv_decoder_forward.3} parent=39 // pred_check
        %p360 = pneg %p235
      $region50: #{deconv_decoder_forward.3} parent=39 // pred_check_branch
        %362 = sbr.rel (%p360) target = $region52
      $region51: #{deconv_decoder_forward.3} parent=39 // pred_region
        %s363 = smul.u32 2, %s25
        %p364 = scmp.lt.s32.totalorder %s24, 1
        %s365 = scalar_select %p364, %s24, 1
        %p366 = scmp.lt.s32.totalorder %s363, 33
        %s367 = scalar_select %p366, %s363, 33
        %s368 = smul.addr %s367, 3
        %s369 = smul.addr %s365, 102
        %s370 = sadd.s32 %s368, %s369
        %s371 = smul.addr %s370, 8
        %s372 = scalar_lea.vmem %s8, %s371
        %s373 = smul.u32 2, %s25
      $region52: #{deconv_decoder_forward.3} parent=39 // pred_fallthru
        _
    $region40: #{deconv_decoder_forward.3} parent=5 // pred_fallthru
      _
    %p374 = scmp.le.s32.totalorder 1, %s17
    %p375 = scmp.lt.s32.totalorder %s17, 35
    %p376 = pnand %p374, %p375
    %p377 = pneg %p376
    // Predicated region
    $region53: #{deconv_decoder_forward.3} parent=5 // pred_check
      _
    $region54: #{deconv_decoder_forward.3} parent=5 // pred_check_branch
      %379 = sbr.rel (%p376) target = $region56
    $region55: #{deconv_decoder_forward.3} parent=5 // pred_region
      %s380 = ssub.s32 %s17, 1
      %p381 = scmp.lt.s32.totalorder %s26, 1
      %s382 = scalar_select %p381, %s26, 1
      %p383 = scmp.lt.s32.totalorder %s27, 17
      %s384 = scalar_select %p383, %s27, 17
      %s385 = smul.addr %s384, 3
      %s386 = smul.addr %s382, 54
      %s387 = sadd.s32 %s385, %s386
      %s388 = smul.addr %s387, 4
      %s389 = scalar_lea.vmem %s0, %s388
      %p390 = pneg %p57
      %p391 = pneg %p54
      %s392 = sadd.s32 %s27, 1
      %p393 = scmp.lt.s32.totalorder %s26, 1
      %s394 = scalar_select %p393, %s26, 1
      %p395 = scmp.lt.s32.totalorder %s392, 17
      %s396 = scalar_select %p395, %s392, 17
      %s397 = smul.addr %s396, 3
      %s398 = smul.addr %s394, 54
      %s399 = sadd.s32 %s397, %s398
      %s400 = smul.addr %s399, 4
      %s401 = scalar_lea.vmem %s1, %s400
      %p402 = pneg %p87
      %p403 = pneg %p84
      %p404 = pneg %p108
      %p405 = pneg %p105
      %p406 = pneg %p129
      %p407 = pneg %p126
      %p408 = pneg %p150
      %p409 = pneg %p147
      %p410 = pneg %p171
      %p411 = pneg %p168
      %p412 = pneg %p192
      %p413 = pneg %p189
      %p414 = pneg %p213
      %p415 = pneg %p210
      %s416 = smul.u32 2, %s27
      %p417 = scmp.lt.s32.totalorder %s26, 1
      %s418 = scalar_select %p417, %s26, 1
      %p419 = scmp.lt.s32.totalorder %s416, 33
      %s420 = scalar_select %p419, %s416, 33
      %s421 = smul.addr %s420, 3
      %s422 = smul.addr %s418, 102
      %s423 = sadd.s32 %s421, %s422
      %s424 = smul.addr %s423, 8
      %s425 = scalar_lea.vmem %s8, %s424
      %p426 = pneg %p241
      %p427 = pneg %p238
      %p428 = pneg %p269
      %p429 = pneg %p266
      %s430 = smul.u32 2, %s27
      %p431 = scmp.lt.s32.totalorder %s26, 1
      %s432 = scalar_select %p431, %s26, 1
      %p433 = scmp.lt.s32.totalorder %s430, 33
      %s434 = scalar_select %p433, %s430, 33
      %s435 = smul.addr %s434, 3
      %s436 = smul.addr %s432, 102
      %s437 = sadd.s32 %s435, %s436
      %s438 = smul.addr %s437, 8
      %s439 = scalar_lea.vmem %s9, %s438
      %p440 = pneg %p297
      %p441 = pneg %p294
      %s442 = smul.u32 2, %s27
      %p443 = scmp.lt.s32.totalorder %s26, 1
      %s444 = scalar_select %p443, %s26, 1
      %p445 = scmp.lt.s32.totalorder %s442, 33
      %s446 = scalar_select %p445, %s442, 33
      %s447 = smul.addr %s446, 3
      %s448 = smul.addr %s444, 102
      %s449 = sadd.s32 %s447, %s448
      %s450 = smul.addr %s449, 8
      %s451 = scalar_lea.vmem %s10, %s450
      %p452 = scmp.lt.s32.totalorder %s26, 1
      %s453 = scalar_select %p452, %s26, 1
      %p454 = scmp.lt.s32.totalorder %s27, 17
      %s455 = scalar_select %p454, %s27, 17
      %s456 = smul.addr %s455, 3
      %s457 = smul.addr %s453, 54
      %s458 = sadd.s32 %s456, %s457
      %s459 = smul.addr %s458, 4
      %s460 = scalar_lea.vmem %s0, %s459
      %s461 = sadd.s32 %s27, 1
      %p462 = scmp.lt.s32.totalorder %s26, 1
      %s463 = scalar_select %p462, %s26, 1
      %p464 = scmp.lt.s32.totalorder %s461, 17
      %s465 = scalar_select %p464, %s461, 17
      %s466 = smul.addr %s465, 3
      %s467 = smul.addr %s463, 54
      %s468 = sadd.s32 %s466, %s467
      %s469 = smul.addr %s468, 4
      %s470 = scalar_lea.vmem %s1, %s469
      %s471 = sadd.s32 %s27, 1
      %s472 = smul.u32 2, %s27
      %p473 = scmp.lt.s32.totalorder %s26, 1
      %s474 = scalar_select %p473, %s26, 1
      %p475 = scmp.lt.s32.totalorder %s472, 33
      %s476 = scalar_select %p475, %s472, 33
      %s477 = smul.addr %s476, 3
      %s478 = smul.addr %s474, 102
      %s479 = sadd.s32 %s477, %s478
      %s480 = smul.addr %s479, 8
      %s481 = scalar_lea.vmem %s8, %s480
      %s482 = smul.u32 2, %s27
      %s483 = smul.u32 2, %s27
      %p484 = scmp.lt.s32.totalorder %s26, 1
      %s485 = scalar_select %p484, %s26, 1
      %p486 = scmp.lt.s32.totalorder %s483, 33
      %s487 = scalar_select %p486, %s483, 33
      %s488 = smul.addr %s487, 3
      %s489 = smul.addr %s485, 102
      %s490 = sadd.s32 %s488, %s489
      %s491 = smul.addr %s490, 8
      %s492 = scalar_lea.vmem %s9, %s491
      %s493 = smul.u32 2, %s27
      %s494 = smul.u32 2, %s27
      %p495 = scmp.lt.s32.totalorder %s26, 1
      %s496 = scalar_select %p495, %s26, 1
      %p497 = scmp.lt.s32.totalorder %s494, 33
      %s498 = scalar_select %p497, %s494, 33
      %s499 = smul.addr %s498, 3
      %s500 = smul.addr %s496, 102
      %s501 = sadd.s32 %s499, %s500
      %s502 = smul.addr %s501, 8
      %s503 = scalar_lea.vmem %s10, %s502
      %s504 = smul.u32 2, %s27
      %v506 = vld [vmem:[%s460] sm:$0xf]
      %v507 = vld [vmem:[%s460 + $0x4] sm:$0xf]
      %v508 = vld [vmem:[%s460 + $0x8] sm:$0x1]
      %v509 = vunpack.c.l.bf16 %v506
      %v510 = vunpack.c.l.bf16 %v507
      %v511 = vunpack.c.l.bf16 %v508
      %v512 = vld [vmem:[%s470] sm:$0xf]
      %v513 = vld [vmem:[%s470 + $0x4] sm:$0xf]
      %v514 = vld [vmem:[%s470 + $0x8] sm:$0x1]
      %v515 = vunpack.c.l.bf16 %v512
      %v516 = vunpack.c.l.bf16 %v513
      %v517 = vunpack.c.l.bf16 %v514
      %v518 = vpack.c.bf16 %v516, %v515
      %v519 = vpack.c.bf16 %v517, %v517
      %v520 = vpack.c.bf16 %v510, %v509
      %v521 = vpack.c.bf16 %v511, %v511
      %v522 = vld [vmem:[%s3] sm:$0x1]
      %v523 = vld [vmem:[%s4] sm:$0xff]
      %v524 = vld [vmem:[%s5] sm:$0x1]
      %v525 = vld [vmem:[%s6] sm:$0xff]
      %v526 = vld [vmem:[%s7] sm:$0x1]
      %v527 = vld [vmem:[%s2] sm:$0xf]
      %s528 = scalar_lea.vmem %s2, 4
      %v529 = vld [vmem:[%s528] sm:$0xf]
      %vm530 = vcmask 64512
      %v532 = vsel %vm530, %v518, 0
      %v535 = vsel %vm530, %v519, 0
      %vm537 = vcmask 1043456
      %v539 = vsel %vm537, %v529, 0
      %541 = vmatprep.subr.bf16.mxu0 0
      %542 = vmatpush1.bf16.msra.mxu0 0
      %543 = vmatprep.subr.bf16.mxu0 0
      %544 = vmatpush1.bf16.msra.mxu0 0
      %545 = vmatprep.subr.bf16.mxu0 0
      %546 = vmatpush1.bf16.msra.mxu0 0
      %547 = vmatprep.subr.bf16.mxu0 0
      %548 = vmatpush1.bf16.msra.mxu0 0
      %549 = vmatprep.subr.bf16.mxu0 0
      %550 = vmatpush1.bf16.msra.mxu0 0
      %551 = vmatprep.subr.bf16.mxu0 0
      %552 = vmatpush1.bf16.msra.mxu0 0
      %553 = vmatprep.subr.bf16.mxu0 0
      %554 = vmatpush1.bf16.msra.mxu0 0
      %555 = vmatprep.subr.bf16.mxu0 0
      %556 = vmatpush1.bf16.msra.mxu0 %v539
      %557 = vmatprep.subr.bf16.mxu0 0
      %558 = vmatpush2.bf16.msra.mxu0 0
      %559 = vmatprep.subr.bf16.mxu0 0
      %560 = vmatpush2.bf16.msra.mxu0 0
      %561 = vmatprep.subr.bf16.mxu0 0
      %562 = vmatpush2.bf16.msra.mxu0 0
      %563 = vmatprep.subr.bf16.mxu0 0
      %564 = vmatpush2.bf16.msra.mxu0 0
      %565 = vmatprep.subr.bf16.mxu0 0
      %566 = vmatpush2.bf16.msra.mxu0 0
      %567 = vmatprep.subr.bf16.mxu0 0
      %568 = vmatpush2.bf16.msra.mxu0 0
      %569 = vmatprep.subr.bf16.mxu0 0
      %570 = vmatpush2.bf16.msra.mxu0 0
      %571 = vmatprep.subr.bf16.mxu0 0
      %572 = vmatpush2.bf16.msra.mxu0 0
      %573 = vmatprep.mubr.bf16.mxu0 0
      %574 = vmatmul.mubr.bf16.gmra.mxu0 %v532
      %v575 = vpop.f32.mrf.mxu0
      %v576 = vadd.f32 0.0, %v575
      %v577 = vpop.f32.mrf.mxu0
      %v578 = vpop.f32.mrf.mxu0
      %v579 = vadd.f32 0.0, %v578
      %v580 = vpop.f32.mrf.mxu0
      %581 = vmatprep.mubr.bf16.mxu0 0
      %582 = vmatmul.mubr.bf16.gmra.mxu0 %v535
      %v583 = vpop.f32.mrf.mxu0
      %v584 = vadd.f32 0.0, %v583
      %v585 = vpop.f32.mrf.mxu0
      %v586 = vpop.f32.mrf.mxu0
      %v587 = vpop.f32.mrf.mxu0
      %588 = vdwg.mxu0
      %vm589 = vsmask.f32 7424
      %v590 = vshrl.u32 %v518, 16
      %v592 = vshll.u32 %v518, 16
      %v594 = vrot.slane %v592, 1
      %v595 = vor.u32 %v590, %v594
      %v596 = vshll.u32 %v519, 16
      %v598 = vrot.slane %v596, 1
      %v599 = vsel %vm589, %v595, %v598
      %v600 = vshrl.u32 %v519, 16
      %v603 = vsel %vm530, %v599, 0
      %v606 = vsel %vm530, %v600, 0
      %v609 = vsel %vm537, %v527, 0
      %611 = vmatprep.subr.bf16.mxu0 0
      %612 = vmatpush1.bf16.msra.mxu0 0
      %613 = vmatprep.subr.bf16.mxu0 0
      %614 = vmatpush1.bf16.msra.mxu0 0
      %615 = vmatprep.subr.bf16.mxu0 0
      %616 = vmatpush1.bf16.msra.mxu0 0
      %617 = vmatprep.subr.bf16.mxu0 0
      %618 = vmatpush1.bf16.msra.mxu0 0
      %619 = vmatprep.subr.bf16.mxu0 0
      %620 = vmatpush1.bf16.msra.mxu0 0
      %621 = vmatprep.subr.bf16.mxu0 0
      %622 = vmatpush1.bf16.msra.mxu0 0
      %623 = vmatprep.subr.bf16.mxu0 0
      %624 = vmatpush1.bf16.msra.mxu0 0
      %625 = vmatprep.subr.bf16.mxu0 0
      %626 = vmatpush1.bf16.msra.mxu0 %v609
      %627 = vmatprep.subr.bf16.mxu0 0
      %628 = vmatpush2.bf16.msra.mxu0 0
      %629 = vmatprep.subr.bf16.mxu0 0
      %630 = vmatpush2.bf16.msra.mxu0 0
      %631 = vmatprep.subr.bf16.mxu0 0
      %632 = vmatpush2.bf16.msra.mxu0 0
      %633 = vmatprep.subr.bf16.mxu0 0
      %634 = vmatpush2.bf16.msra.mxu0 0
      %635 = vmatprep.subr.bf16.mxu0 0
      %636 = vmatpush2.bf16.msra.mxu0 0
      %637 = vmatprep.subr.bf16.mxu0 0
      %638 = vmatpush2.bf16.msra.mxu0 0
      %639 = vmatprep.subr.bf16.mxu0 0
      %640 = vmatpush2.bf16.msra.mxu0 0
      %641 = vmatprep.subr.bf16.mxu0 0
      %642 = vmatpush2.bf16.msra.mxu0 0
      %643 = vmatprep.mubr.bf16.mxu0 0
      %644 = vmatmul.mubr.bf16.gmra.mxu0 %v603
      %v645 = vpop.f32.mrf.mxu0
      %v646 = vadd.f32 %v576, %v645
      %v647 = vpop.f32.mrf.mxu0
      %v648 = vpop.f32.mrf.mxu0
      %v649 = vadd.f32 %v579, %v648
      %v650 = vpop.f32.mrf.mxu0
      %651 = vmatprep.mubr.bf16.mxu0 0
      %652 = vmatmul.mubr.bf16.gmra.mxu0 %v606
      %v653 = vpop.f32.mrf.mxu0
      %v654 = vadd.f32 %v584, %v653
      %v655 = vpop.f32.mrf.mxu0
      %v656 = vpop.f32.mrf.mxu0
      %v657 = vpop.f32.mrf.mxu0
      %658 = vdwg.mxu0
      %s659 = scalar_lea.vmem %s2, 8
      %v660 = vld [vmem:[%s659] sm:$0xf]
      %v662 = vshrl.u32 %v520, 16
      %v664 = vshll.u32 %v520, 16
      %v666 = vrot.slane %v664, 1
      %v667 = vor.u32 %v662, %v666
      %v669 = vshll.u32 %v521, 16
      %v671 = vrot.slane %v669, 1
      %v672 = vsel %vm589, %v667, %v671
      %v673 = vshrl.u32 %v521, 16
      %v676 = vsel %vm530, %v672, 0
      %v679 = vsel %vm530, %v673, 0
      %v682 = vsel %vm537, %v660, 0
      %684 = vmatprep.subr.bf16.mxu0 0
      %685 = vmatpush1.bf16.msra.mxu0 0
      %686 = vmatprep.subr.bf16.mxu0 0
      %687 = vmatpush1.bf16.msra.mxu0 0
      %688 = vmatprep.subr.bf16.mxu0 0
      %689 = vmatpush1.bf16.msra.mxu0 0
      %690 = vmatprep.subr.bf16.mxu0 0
      %691 = vmatpush1.bf16.msra.mxu0 0
      %692 = vmatprep.subr.bf16.mxu0 0
      %693 = vmatpush1.bf16.msra.mxu0 0
      %694 = vmatprep.subr.bf16.mxu0 0
      %695 = vmatpush1.bf16.msra.mxu0 0
      %696 = vmatprep.subr.bf16.mxu0 0
      %697 = vmatpush1.bf16.msra.mxu0 0
      %698 = vmatprep.subr.bf16.mxu0 0
      %699 = vmatpush1.bf16.msra.mxu0 %v682
      %700 = vmatprep.subr.bf16.mxu0 0
      %701 = vmatpush2.bf16.msra.mxu0 0
      %702 = vmatprep.subr.bf16.mxu0 0
      %703 = vmatpush2.bf16.msra.mxu0 0
      %704 = vmatprep.subr.bf16.mxu0 0
      %705 = vmatpush2.bf16.msra.mxu0 0
      %706 = vmatprep.subr.bf16.mxu0 0
      %707 = vmatpush2.bf16.msra.mxu0 0
      %708 = vmatprep.subr.bf16.mxu0 0
      %709 = vmatpush2.bf16.msra.mxu0 0
      %710 = vmatprep.subr.bf16.mxu0 0
      %711 = vmatpush2.bf16.msra.mxu0 0
      %712 = vmatprep.subr.bf16.mxu0 0
      %713 = vmatpush2.bf16.msra.mxu0 0
      %714 = vmatprep.subr.bf16.mxu0 0
      %715 = vmatpush2.bf16.msra.mxu0 0
      %716 = vmatprep.mubr.bf16.mxu0 0
      %717 = vmatmul.mubr.bf16.gmra.mxu0 %v676
      %v718 = vpop.f32.mrf.mxu0
      %v719 = vadd.f32 0.0, %v718
      %v720 = vpop.f32.mrf.mxu0
      %v721 = vpop.f32.mrf.mxu0
      %v722 = vadd.f32 0.0, %v721
      %v723 = vpop.f32.mrf.mxu0
      %724 = vmatprep.mubr.bf16.mxu0 0
      %725 = vmatmul.mubr.bf16.gmra.mxu0 %v679
      %v726 = vpop.f32.mrf.mxu0
      %v727 = vadd.f32 0.0, %v726
      %v728 = vpop.f32.mrf.mxu0
      %v729 = vpop.f32.mrf.mxu0
      %v730 = vpop.f32.mrf.mxu0
      %731 = vdwg.mxu0
      %v732 = vadd.f32 %v646, %v719
      %v733 = vadd.f32 %v649, %v722
      %v734 = vadd.f32 %v654, %v727
      %s735 = scalar_lea.vmem %s2, 12
      %v736 = vld [vmem:[%s735] sm:$0xf]
      %v737 = vsel %vm530, %v520, 0
      %v739 = vsel %vm530, %v521, 0
      %v742 = vsel %vm537, %v736, 0
      %744 = vmatprep.subr.bf16.mxu0 0
      %745 = vmatpush1.bf16.msra.mxu0 0
      %746 = vmatprep.subr.bf16.mxu0 0
      %747 = vmatpush1.bf16.msra.mxu0 0
      %748 = vmatprep.subr.bf16.mxu0 0
      %749 = vmatpush1.bf16.msra.mxu0 0
      %750 = vmatprep.subr.bf16.mxu0 0
      %751 = vmatpush1.bf16.msra.mxu0 0
      %752 = vmatprep.subr.bf16.mxu0 0
      %753 = vmatpush1.bf16.msra.mxu0 0
      %754 = vmatprep.subr.bf16.mxu0 0
      %755 = vmatpush1.bf16.msra.mxu0 0
      %756 = vmatprep.subr.bf16.mxu0 0
      %757 = vmatpush1.bf16.msra.mxu0 0
      %758 = vmatprep.subr.bf16.mxu0 0
      %759 = vmatpush1.bf16.msra.mxu0 %v742
      %760 = vmatprep.subr.bf16.mxu0 0
      %761 = vmatpush2.bf16.msra.mxu0 0
      %762 = vmatprep.subr.bf16.mxu0 0
      %763 = vmatpush2.bf16.msra.mxu0 0
      %764 = vmatprep.subr.bf16.mxu0 0
      %765 = vmatpush2.bf16.msra.mxu0 0
      %766 = vmatprep.subr.bf16.mxu0 0
      %767 = vmatpush2.bf16.msra.mxu0 0
      %768 = vmatprep.subr.bf16.mxu0 0
      %769 = vmatpush2.bf16.msra.mxu0 0
      %770 = vmatprep.subr.bf16.mxu0 0
      %771 = vmatpush2.bf16.msra.mxu0 0
      %772 = vmatprep.subr.bf16.mxu0 0
      %773 = vmatpush2.bf16.msra.mxu0 0
      %774 = vmatprep.subr.bf16.mxu0 0
      %775 = vmatpush2.bf16.msra.mxu0 0
      %776 = vmatprep.mubr.bf16.mxu0 0
      %777 = vmatmul.mubr.bf16.gmra.mxu0 %v737
      %v778 = vpop.f32.mrf.mxu0
      %v779 = vadd.f32 0.0, %v778
      %v780 = vpop.f32.mrf.mxu0
      %v781 = vpop.f32.mrf.mxu0
      %v782 = vadd.f32 0.0, %v781
      %v783 = vpop.f32.mrf.mxu0
      %784 = vmatprep.mubr.bf16.mxu0 0
      %785 = vmatmul.mubr.bf16.gmra.mxu0 %v739
      %v786 = vpop.f32.mrf.mxu0
      %v787 = vadd.f32 0.0, %v786
      %v788 = vpop.f32.mrf.mxu0
      %v789 = vpop.f32.mrf.mxu0
      %v790 = vpop.f32.mrf.mxu0
      %791 = vdwg.mxu0
      %v792 = vadd.f32 %v732, %v779
      %v793 = vadd.f32 %v733, %v782
      %v794 = vadd.f32 %v734, %v787
      %v796 = vlaneseq
      %v797 = vshrl.u32 %v796, 7
      %v798 = vsub.s32 0, %v797
      %v799 = vrot.slane %v522, %v798
      %v801 = vadd.f32 %v792, %v799
      %v802 = vadd.f32 %v793, %v799
      %v803 = vadd.f32 %v794, %v799
      %vm804 = vcmp.gt.f32.partialorder %v801, 0.0
      %vm805 = vcmp.gt.f32.partialorder %v802, 0.0
      %vm806 = vcmp.gt.f32.partialorder %v803, 0.0
      %v807 = vmin.f32 %v801, 0.0
      %v808 = vmin.f32 %v802, 0.0
      %v809 = vmin.f32 %v803, 0.0
      %v810 = vmul.f32 %v807, 1.442695
      %v811 = vpow.pop %v810
      %v812 = vmul.f32 %v808, 1.442695
      %v813 = vpow.pop %v812
      %v814 = vmul.f32 %v809, 1.442695
      %v815 = vpow.pop %v814
      %v816 = vsub.f32 %v811, 1.0
      %v817 = vsub.f32 %v813, 1.0
      %v818 = vsub.f32 %v815, 1.0
      %v819 = vsel %vm804, %v801, %v816
      %v820 = vsel %vm805, %v802, %v817
      %v821 = vsel %vm806, %v803, %v818
      %822 = vst.msk [vmem:[%s492] sm:$0xff] %vm530, %v819
      %823 = vst.msk [vmem:[%s492 + $0x8] sm:$0xff] %vm530, %v820
      %vm824 = vcmask 57344
      %825 = vst.msk [vmem:[%s492 + $0x10] sm:$0x1] %vm824, %v821
      %v827 = vlaneseq
      %v828 = vshrl.u32 %v827, 7
      %v829 = vsub.s32 0, %v828
      %v830 = vrot.slane %v524, %v829
      %v833 = vsel %vm530, %v819, 0
      %v836 = vsel %vm530, %v820, 0
      %v839 = vsel %vm530, %v821, 0
      %841 = vmatprep.subr.mxu0 0.0
      %842 = vmatpush1.msra.mxu0 0.0
      %843 = vmatprep.subr.mxu0 0.0
      %844 = vmatpush1.msra.mxu0 0.0
      %845 = vmatprep.subr.mxu0 0.0
      %846 = vmatpush1.msra.mxu0 0.0
      %847 = vmatprep.subr.mxu0 0.0
      %848 = vmatpush1.msra.mxu0 0.0
      %849 = vmatprep.subr.mxu0 0.0
      %850 = vmatpush1.msra.mxu0 0.0
      %851 = vmatprep.subr.mxu0 0.0
      %852 = vmatpush1.msra.mxu0 0.0
      %853 = vmatprep.subr.mxu0 0.0
      %854 = vmatpush1.msra.mxu0 0.0
      %855 = vmatprep.subr.mxu0 0.0
      %856 = vmatpush1.msra.mxu0 0.0
      %857 = vmatprep.subr.mxu0 0.0
      %858 = vmatpush1.msra.mxu0 0.0
      %859 = vmatprep.subr.mxu0 0.0
      %860 = vmatpush1.msra.mxu0 0.0
      %861 = vmatprep.subr.mxu0 0.0
      %862 = vmatpush1.msra.mxu0 0.0
      %863 = vmatprep.subr.mxu0 0.0
      %864 = vmatpush1.msra.mxu0 0.0
      %865 = vmatprep.subr.mxu0 0.0
      %866 = vmatpush1.msra.mxu0 0.0
      %867 = vmatprep.subr.mxu0 0.0
      %868 = vmatpush1.msra.mxu0 0.0
      %869 = vmatprep.subr.mxu0 0.0
      %870 = vmatpush1.msra.mxu0 0.0
      %871 = vmatprep.subr.mxu0 0.0
      %872 = vmatpush1.msra.mxu0 %v523
      %873 = vmatprep.subr.mxu0 0.0
      %874 = vmatpush2.msra.mxu0 0.0
      %875 = vmatprep.subr.mxu0 0.0
      %876 = vmatpush2.msra.mxu0 0.0
      %877 = vmatprep.subr.mxu0 0.0
      %878 = vmatpush2.msra.mxu0 0.0
      %879 = vmatprep.subr.mxu0 0.0
      %880 = vmatpush2.msra.mxu0 0.0
      %881 = vmatprep.subr.mxu0 0.0
      %882 = vmatpush2.msra.mxu0 0.0
      %883 = vmatprep.subr.mxu0 0.0
      %884 = vmatpush2.msra.mxu0 0.0
      %885 = vmatprep.subr.mxu0 0.0
      %886 = vmatpush2.msra.mxu0 0.0
      %887 = vmatprep.subr.mxu0 0.0
      %888 = vmatpush2.msra.mxu0 0.0
      %889 = vmatprep.subr.mxu0 0.0
      %890 = vmatpush2.msra.mxu0 0.0
      %891 = vmatprep.subr.mxu0 0.0
      %892 = vmatpush2.msra.mxu0 0.0
      %893 = vmatprep.subr.mxu0 0.0
      %894 = vmatpush2.msra.mxu0 0.0
      %895 = vmatprep.subr.mxu0 0.0
      %896 = vmatpush2.msra.mxu0 0.0
      %897 = vmatprep.subr.mxu0 0.0
      %898 = vmatpush2.msra.mxu0 0.0
      %899 = vmatprep.subr.mxu0 0.0
      %900 = vmatpush2.msra.mxu0 0.0
      %901 = vmatprep.subr.mxu0 0.0
      %902 = vmatpush2.msra.mxu0 0.0
      %903 = vmatprep.subr.mxu0 0.0
      %904 = vmatpush2.msra.mxu0 0.0
      %905 = vmatprep.mubr.f32.mxu0 0.0
      %906 = vmatmul.mubr.f32.gmra.mxu0 %v833
      %v907 = vpop.f32.mrf.mxu0
      %v908 = vadd.f32 %v830, %v907
      %v909 = vpop.f32.mrf.mxu0
      %910 = vmatprep.mubr.f32.mxu0 0.0
      %911 = vmatmul.mubr.f32.gmra.mxu0 %v836
      %v912 = vpop.f32.mrf.mxu0
      %v913 = vadd.f32 %v830, %v912
      %v914 = vpop.f32.mrf.mxu0
      %915 = vmatprep.mubr.f32.mxu0 0.0
      %916 = vmatmul.mubr.f32.gmra.mxu0 %v839
      %v917 = vpop.f32.mrf.mxu0
      %v918 = vadd.f32 %v830, %v917
      %v919 = vpop.f32.mrf.mxu0
      %920 = vdwg.mxu0
      %v921 = vmul.f32 %v908, -3.0
      %v922 = vmul.f32 %v913, -3.0
      %v923 = vmul.f32 %v918, -3.0
      %v924 = vmul.f32 %v921, 1.442695
      %v925 = vpow.pop %v924
      %v926 = vmul.f32 %v922, 1.442695
      %v927 = vpow.pop %v926
      %v928 = vmul.f32 %v923, 1.442695
      %v929 = vpow.pop %v928
      %v930 = vadd.f32 %v925, 1.0
      %v931 = vadd.f32 %v927, 1.0
      %v932 = vadd.f32 %v929, 1.0
      %v933 = vrcp.pop %v930
      %v934 = vmul.f32 1.0, %v933
      %v935 = vrcp.pop %v931
      %v936 = vmul.f32 1.0, %v935
      %v937 = vrcp.pop %v932
      %v938 = vmul.f32 1.0, %v937
      %v940 = vlaneseq
      %v941 = vshrl.u32 %v940, 7
      %v942 = vsub.s32 0, %v941
      %v943 = vrot.slane %v526, %v942
      %945 = vmatprep.subr.mxu0 0.0
      %946 = vmatpush1.msra.mxu0 0.0
      %947 = vmatprep.subr.mxu0 0.0
      %948 = vmatpush1.msra.mxu0 0.0
      %949 = vmatprep.subr.mxu0 0.0
      %950 = vmatpush1.msra.mxu0 0.0
      %951 = vmatprep.subr.mxu0 0.0
      %952 = vmatpush1.msra.mxu0 0.0
      %953 = vmatprep.subr.mxu0 0.0
      %954 = vmatpush1.msra.mxu0 0.0
      %955 = vmatprep.subr.mxu0 0.0
      %956 = vmatpush1.msra.mxu0 0.0
      %957 = vmatprep.subr.mxu0 0.0
      %958 = vmatpush1.msra.mxu0 0.0
      %959 = vmatprep.subr.mxu0 0.0
      %960 = vmatpush1.msra.mxu0 0.0
      %961 = vmatprep.subr.mxu0 0.0
      %962 = vmatpush1.msra.mxu0 0.0
      %963 = vmatprep.subr.mxu0 0.0
      %964 = vmatpush1.msra.mxu0 0.0
      %965 = vmatprep.subr.mxu0 0.0
      %966 = vmatpush1.msra.mxu0 0.0
      %967 = vmatprep.subr.mxu0 0.0
      %968 = vmatpush1.msra.mxu0 0.0
      %969 = vmatprep.subr.mxu0 0.0
      %970 = vmatpush1.msra.mxu0 0.0
      %971 = vmatprep.subr.mxu0 0.0
      %972 = vmatpush1.msra.mxu0 0.0
      %973 = vmatprep.subr.mxu0 0.0
      %974 = vmatpush1.msra.mxu0 0.0
      %975 = vmatprep.subr.mxu0 0.0
      %976 = vmatpush1.msra.mxu0 %v525
      %977 = vmatprep.subr.mxu0 0.0
      %978 = vmatpush2.msra.mxu0 0.0
      %979 = vmatprep.subr.mxu0 0.0
      %980 = vmatpush2.msra.mxu0 0.0
      %981 = vmatprep.subr.mxu0 0.0
      %982 = vmatpush2.msra.mxu0 0.0
      %983 = vmatprep.subr.mxu0 0.0
      %984 = vmatpush2.msra.mxu0 0.0
      %985 = vmatprep.subr.mxu0 0.0
      %986 = vmatpush2.msra.mxu0 0.0
      %987 = vmatprep.subr.mxu0 0.0
      %988 = vmatpush2.msra.mxu0 0.0
      %989 = vmatprep.subr.mxu0 0.0
      %990 = vmatpush2.msra.mxu0 0.0
      %991 = vmatprep.subr.mxu0 0.0
      %992 = vmatpush2.msra.mxu0 0.0
      %993 = vmatprep.subr.mxu0 0.0
      %994 = vmatpush2.msra.mxu0 0.0
      %995 = vmatprep.subr.mxu0 0.0
      %996 = vmatpush2.msra.mxu0 0.0
      %997 = vmatprep.subr.mxu0 0.0
      %998 = vmatpush2.msra.mxu0 0.0
      %999 = vmatprep.subr.mxu0 0.0
      %1000 = vmatpush2.msra.mxu0 0.0
      %1001 = vmatprep.subr.mxu0 0.0
      %1002 = vmatpush2.msra.mxu0 0.0
      %1003 = vmatprep.subr.mxu0 0.0
      %1004 = vmatpush2.msra.mxu0 0.0
      %1005 = vmatprep.subr.mxu0 0.0
      %1006 = vmatpush2.msra.mxu0 0.0
      %1007 = vmatprep.subr.mxu0 0.0
      %1008 = vmatpush2.msra.mxu0 0.0
      %1009 = vmatprep.mubr.f32.mxu0 0.0
      %1010 = vmatmul.mubr.f32.gmra.mxu0 %v833
      %v1011 = vpop.f32.mrf.mxu0
      %v1012 = vadd.f32 %v943, %v1011
      %v1013 = vpop.f32.mrf.mxu0
      %1014 = vmatprep.mubr.f32.mxu0 0.0
      %1015 = vmatmul.mubr.f32.gmra.mxu0 %v836
      %v1016 = vpop.f32.mrf.mxu0
      %v1017 = vadd.f32 %v943, %v1016
      %v1018 = vpop.f32.mrf.mxu0
      %1019 = vmatprep.mubr.f32.mxu0 0.0
      %1020 = vmatmul.mubr.f32.gmra.mxu0 %v839
      %v1021 = vpop.f32.mrf.mxu0
      %v1022 = vadd.f32 %v943, %v1021
      %v1023 = vpop.f32.mrf.mxu0
      %1024 = vdwg.mxu0
      %v1025 = vld [vmem:[%s481] sm:$0xff]
      %v1026 = vld [vmem:[%s481 + $0x8] sm:$0xff]
      %v1027 = vld [vmem:[%s481 + $0x10] sm:$0x1]
      %v1028 = vmul.f32 %v934, %v1025
      %v1029 = vmul.f32 %v936, %v1026
      %v1030 = vmul.f32 %v938, %v1027
      %v1031 = vsub.f32 1.0, %v934
      %v1032 = vsub.f32 1.0, %v936
      %v1033 = vsub.f32 1.0, %v938
      %v1034 = vmul.f32 %v1031, %v1012
      %v1035 = vmul.f32 %v1032, %v1017
      %v1036 = vmul.f32 %v1033, %v1022
      %v1037 = vadd.f32 %v1028, %v1034
      %v1038 = vadd.f32 %v1029, %v1035
      %v1039 = vadd.f32 %v1030, %v1036
      %vm1040 = vcmask 48128
      %1041 = vst.msk [vmem:[%s503] sm:$0xff] %vm1040, %v1037
      %1042 = vst.msk [vmem:[%s503 + $0x8] sm:$0xff] %vm1040, %v1038
      %vm1043 = vcmask 40960
      %1044 = vst.msk [vmem:[%s503 + $0x10] sm:$0x1] %vm1043, %v1039
      %s1045 = scalar_lea.vmem %s2, 16
      %v1046 = vld [vmem:[%s1045] sm:$0xf]
      %s1047 = scalar_lea.vmem %s2, 20
      %v1048 = vld [vmem:[%s1047] sm:$0xf]
      %v1050 = vsel %vm537, %v1048, 0
      %1052 = vmatprep.subr.bf16.mxu0 0
      %1053 = vmatpush1.bf16.msra.mxu0 0
      %1054 = vmatprep.subr.bf16.mxu0 0
      %1055 = vmatpush1.bf16.msra.mxu0 0
      %1056 = vmatprep.subr.bf16.mxu0 0
      %1057 = vmatpush1.bf16.msra.mxu0 0
      %1058 = vmatprep.subr.bf16.mxu0 0
      %1059 = vmatpush1.bf16.msra.mxu0 0
      %1060 = vmatprep.subr.bf16.mxu0 0
      %1061 = vmatpush1.bf16.msra.mxu0 0
      %1062 = vmatprep.subr.bf16.mxu0 0
      %1063 = vmatpush1.bf16.msra.mxu0 0
      %1064 = vmatprep.subr.bf16.mxu0 0
      %1065 = vmatpush1.bf16.msra.mxu0 0
      %1066 = vmatprep.subr.bf16.mxu0 0
      %1067 = vmatpush1.bf16.msra.mxu0 %v1050
      %1068 = vmatprep.subr.bf16.mxu0 0
      %1069 = vmatpush2.bf16.msra.mxu0 0
      %1070 = vmatprep.subr.bf16.mxu0 0
      %1071 = vmatpush2.bf16.msra.mxu0 0
      %1072 = vmatprep.subr.bf16.mxu0 0
      %1073 = vmatpush2.bf16.msra.mxu0 0
      %1074 = vmatprep.subr.bf16.mxu0 0
      %1075 = vmatpush2.bf16.msra.mxu0 0
      %1076 = vmatprep.subr.bf16.mxu0 0
      %1077 = vmatpush2.bf16.msra.mxu0 0
      %1078 = vmatprep.subr.bf16.mxu0 0
      %1079 = vmatpush2.bf16.msra.mxu0 0
      %1080 = vmatprep.subr.bf16.mxu0 0
      %1081 = vmatpush2.bf16.msra.mxu0 0
      %1082 = vmatprep.subr.bf16.mxu0 0
      %1083 = vmatpush2.bf16.msra.mxu0 0
      %1084 = vmatprep.mubr.bf16.mxu0 0
      %1085 = vmatmul.mubr.bf16.gmra.mxu0 %v532
      %v1086 = vpop.f32.mrf.mxu0
      %v1087 = vadd.f32 0.0, %v1086
      %v1088 = vpop.f32.mrf.mxu0
      %v1089 = vpop.f32.mrf.mxu0
      %v1090 = vadd.f32 0.0, %v1089
      %v1091 = vpop.f32.mrf.mxu0
      %1092 = vmatprep.mubr.bf16.mxu0 0
      %1093 = vmatmul.mubr.bf16.gmra.mxu0 %v535
      %v1094 = vpop.f32.mrf.mxu0
      %v1095 = vadd.f32 0.0, %v1094
      %v1096 = vpop.f32.mrf.mxu0
      %v1097 = vpop.f32.mrf.mxu0
      %v1098 = vpop.f32.mrf.mxu0
      %1099 = vdwg.mxu0
      %v1101 = vsel %vm537, %v1046, 0
      %1103 = vmatprep.subr.bf16.mxu0 0
      %1104 = vmatpush1.bf16.msra.mxu0 0
      %1105 = vmatprep.subr.bf16.mxu0 0
      %1106 = vmatpush1.bf16.msra.mxu0 0
      %1107 = vmatprep.subr.bf16.mxu0 0
      %1108 = vmatpush1.bf16.msra.mxu0 0
      %1109 = vmatprep.subr.bf16.mxu0 0
      %1110 = vmatpush1.bf16.msra.mxu0 0
      %1111 = vmatprep.subr.bf16.mxu0 0
      %1112 = vmatpush1.bf16.msra.mxu0 0
      %1113 = vmatprep.subr.bf16.mxu0 0
      %1114 = vmatpush1.bf16.msra.mxu0 0
      %1115 = vmatprep.subr.bf16.mxu0 0
      %1116 = vmatpush1.bf16.msra.mxu0 0
      %1117 = vmatprep.subr.bf16.mxu0 0
      %1118 = vmatpush1.bf16.msra.mxu0 %v1101
      %1119 = vmatprep.subr.bf16.mxu0 0
      %1120 = vmatpush2.bf16.msra.mxu0 0
      %1121 = vmatprep.subr.bf16.mxu0 0
      %1122 = vmatpush2.bf16.msra.mxu0 0
      %1123 = vmatprep.subr.bf16.mxu0 0
      %1124 = vmatpush2.bf16.msra.mxu0 0
      %1125 = vmatprep.subr.bf16.mxu0 0
      %1126 = vmatpush2.bf16.msra.mxu0 0
      %1127 = vmatprep.subr.bf16.mxu0 0
      %1128 = vmatpush2.bf16.msra.mxu0 0
      %1129 = vmatprep.subr.bf16.mxu0 0
      %1130 = vmatpush2.bf16.msra.mxu0 0
      %1131 = vmatprep.subr.bf16.mxu0 0
      %1132 = vmatpush2.bf16.msra.mxu0 0
      %1133 = vmatprep.subr.bf16.mxu0 0
      %1134 = vmatpush2.bf16.msra.mxu0 0
      %1135 = vmatprep.mubr.bf16.mxu0 0
      %1136 = vmatmul.mubr.bf16.gmra.mxu0 %v603
      %v1137 = vpop.f32.mrf.mxu0
      %v1138 = vadd.f32 %v1087, %v1137
      %v1139 = vpop.f32.mrf.mxu0
      %v1140 = vpop.f32.mrf.mxu0
      %v1141 = vadd.f32 %v1090, %v1140
      %v1142 = vpop.f32.mrf.mxu0
      %1143 = vmatprep.mubr.bf16.mxu0 0
      %1144 = vmatmul.mubr.bf16.gmra.mxu0 %v606
      %v1145 = vpop.f32.mrf.mxu0
      %v1146 = vadd.f32 %v1095, %v1145
      %v1147 = vpop.f32.mrf.mxu0
      %v1148 = vpop.f32.mrf.mxu0
      %v1149 = vpop.f32.mrf.mxu0
      %1150 = vdwg.mxu0
      %s1151 = scalar_lea.vmem %s2, 24
      %v1152 = vld [vmem:[%s1151] sm:$0xf]
      %v1154 = vsel %vm537, %v1152, 0
      %1156 = vmatprep.subr.bf16.mxu0 0
      %1157 = vmatpush1.bf16.msra.mxu0 0
      %1158 = vmatprep.subr.bf16.mxu0 0
      %1159 = vmatpush1.bf16.msra.mxu0 0
      %1160 = vmatprep.subr.bf16.mxu0 0
      %1161 = vmatpush1.bf16.msra.mxu0 0
      %1162 = vmatprep.subr.bf16.mxu0 0
      %1163 = vmatpush1.bf16.msra.mxu0 0
      %1164 = vmatprep.subr.bf16.mxu0 0
      %1165 = vmatpush1.bf16.msra.mxu0 0
      %1166 = vmatprep.subr.bf16.mxu0 0
      %1167 = vmatpush1.bf16.msra.mxu0 0
      %1168 = vmatprep.subr.bf16.mxu0 0
      %1169 = vmatpush1.bf16.msra.mxu0 0
      %1170 = vmatprep.subr.bf16.mxu0 0
      %1171 = vmatpush1.bf16.msra.mxu0 %v1154
      %1172 = vmatprep.subr.bf16.mxu0 0
      %1173 = vmatpush2.bf16.msra.mxu0 0
      %1174 = vmatprep.subr.bf16.mxu0 0
      %1175 = vmatpush2.bf16.msra.mxu0 0
      %1176 = vmatprep.subr.bf16.mxu0 0
      %1177 = vmatpush2.bf16.msra.mxu0 0
      %1178 = vmatprep.subr.bf16.mxu0 0
      %1179 = vmatpush2.bf16.msra.mxu0 0
      %1180 = vmatprep.subr.bf16.mxu0 0
      %1181 = vmatpush2.bf16.msra.mxu0 0
      %1182 = vmatprep.subr.bf16.mxu0 0
      %1183 = vmatpush2.bf16.msra.mxu0 0
      %1184 = vmatprep.subr.bf16.mxu0 0
      %1185 = vmatpush2.bf16.msra.mxu0 0
      %1186 = vmatprep.subr.bf16.mxu0 0
      %1187 = vmatpush2.bf16.msra.mxu0 0
      %1188 = vmatprep.mubr.bf16.mxu0 0
      %1189 = vmatmul.mubr.bf16.gmra.mxu0 %v676
      %v1190 = vpop.f32.mrf.mxu0
      %v1191 = vadd.f32 0.0, %v1190
      %v1192 = vpop.f32.mrf.mxu0
      %v1193 = vpop.f32.mrf.mxu0
      %v1194 = vadd.f32 0.0, %v1193
      %v1195 = vpop.f32.mrf.mxu0
      %1196 = vmatprep.mubr.bf16.mxu0 0
      %1197 = vmatmul.mubr.bf16.gmra.mxu0 %v679
      %v1198 = vpop.f32.mrf.mxu0
      %v1199 = vadd.f32 0.0, %v1198
      %v1200 = vpop.f32.mrf.mxu0
      %v1201 = vpop.f32.mrf.mxu0
      %v1202 = vpop.f32.mrf.mxu0
      %1203 = vdwg.mxu0
      %v1204 = vadd.f32 %v1138, %v1191
      %v1205 = vadd.f32 %v1141, %v1194
      %v1206 = vadd.f32 %v1146, %v1199
      %s1207 = scalar_lea.vmem %s2, 28
      %v1208 = vld [vmem:[%s1207] sm:$0xf]
      %v1210 = vsel %vm537, %v1208, 0
      %1212 = vmatprep.subr.bf16.mxu0 0
      %1213 = vmatpush1.bf16.msra.mxu0 0
      %1214 = vmatprep.subr.bf16.mxu0 0
      %1215 = vmatpush1.bf16.msra.mxu0 0
      %1216 = vmatprep.subr.bf16.mxu0 0
      %1217 = vmatpush1.bf16.msra.mxu0 0
      %1218 = vmatprep.subr.bf16.mxu0 0
      %1219 = vmatpush1.bf16.msra.mxu0 0
      %1220 = vmatprep.subr.bf16.mxu0 0
      %1221 = vmatpush1.bf16.msra.mxu0 0
      %1222 = vmatprep.subr.bf16.mxu0 0
      %1223 = vmatpush1.bf16.msra.mxu0 0
      %1224 = vmatprep.subr.bf16.mxu0 0
      %1225 = vmatpush1.bf16.msra.mxu0 0
      %1226 = vmatprep.subr.bf16.mxu0 0
      %1227 = vmatpush1.bf16.msra.mxu0 %v1210
      %1228 = vmatprep.subr.bf16.mxu0 0
      %1229 = vmatpush2.bf16.msra.mxu0 0
      %1230 = vmatprep.subr.bf16.mxu0 0
      %1231 = vmatpush2.bf16.msra.mxu0 0
      %1232 = vmatprep.subr.bf16.mxu0 0
      %1233 = vmatpush2.bf16.msra.mxu0 0
      %1234 = vmatprep.subr.bf16.mxu0 0
      %1235 = vmatpush2.bf16.msra.mxu0 0
      %1236 = vmatprep.subr.bf16.mxu0 0
      %1237 = vmatpush2.bf16.msra.mxu0 0
      %1238 = vmatprep.subr.bf16.mxu0 0
      %1239 = vmatpush2.bf16.msra.mxu0 0
      %1240 = vmatprep.subr.bf16.mxu0 0
      %1241 = vmatpush2.bf16.msra.mxu0 0
      %1242 = vmatprep.subr.bf16.mxu0 0
      %1243 = vmatpush2.bf16.msra.mxu0 0
      %1244 = vmatprep.mubr.bf16.mxu0 0
      %1245 = vmatmul.mubr.bf16.gmra.mxu0 %v737
      %v1246 = vpop.f32.mrf.mxu0
      %v1247 = vadd.f32 0.0, %v1246
      %v1248 = vpop.f32.mrf.mxu0
      %v1249 = vpop.f32.mrf.mxu0
      %v1250 = vadd.f32 0.0, %v1249
      %v1251 = vpop.f32.mrf.mxu0
      %1252 = vmatprep.mubr.bf16.mxu0 0
      %1253 = vmatmul.mubr.bf16.gmra.mxu0 %v739
      %v1254 = vpop.f32.mrf.mxu0
      %v1255 = vadd.f32 0.0, %v1254
      %v1256 = vpop.f32.mrf.mxu0
      %v1257 = vpop.f32.mrf.mxu0
      %v1258 = vpop.f32.mrf.mxu0
      %1259 = vdwg.mxu0
      %v1260 = vadd.f32 %v1204, %v1247
      %v1261 = vadd.f32 %v1205, %v1250
      %v1262 = vadd.f32 %v1206, %v1255
      %v1263 = vadd.f32 %v1260, %v799
      %v1264 = vadd.f32 %v1261, %v799
      %v1265 = vadd.f32 %v1262, %v799
      %vm1266 = vcmp.gt.f32.partialorder %v1263, 0.0
      %vm1267 = vcmp.gt.f32.partialorder %v1264, 0.0
      %vm1268 = vcmp.gt.f32.partialorder %v1265, 0.0
      %v1269 = vmin.f32 %v1263, 0.0
      %v1270 = vmin.f32 %v1264, 0.0
      %v1271 = vmin.f32 %v1265, 0.0
      %v1272 = vmul.f32 %v1269, 1.442695
      %v1273 = vpow.pop %v1272
      %v1274 = vmul.f32 %v1270, 1.442695
      %v1275 = vpow.pop %v1274
      %v1276 = vmul.f32 %v1271, 1.442695
      %v1277 = vpow.pop %v1276
      %v1278 = vsub.f32 %v1273, 1.0
      %v1279 = vsub.f32 %v1275, 1.0
      %v1280 = vsub.f32 %v1277, 1.0
      %v1281 = vsel %vm1266, %v1263, %v1278
      %v1282 = vsel %vm1267, %v1264, %v1279
      %v1283 = vsel %vm1268, %v1265, %v1280
      %s1284 = scalar_lea.vmem %s492, 24
      %1285 = vst.msk [vmem:[%s1284] sm:$0xff] %vm530, %v1281
      %1286 = vst.msk [vmem:[%s1284 + $0x8] sm:$0xff] %vm530, %v1282
      %1287 = vst.msk [vmem:[%s1284 + $0x10] sm:$0x1] %vm824, %v1283
      %v1289 = vsel %vm530, %v1281, 0
      %v1292 = vsel %vm530, %v1282, 0
      %v1295 = vsel %vm530, %v1283, 0
      %1297 = vmatprep.subr.mxu0 0.0
      %1298 = vmatpush1.msra.mxu0 0.0
      %1299 = vmatprep.subr.mxu0 0.0
      %1300 = vmatpush1.msra.mxu0 0.0
      %1301 = vmatprep.subr.mxu0 0.0
      %1302 = vmatpush1.msra.mxu0 0.0
      %1303 = vmatprep.subr.mxu0 0.0
      %1304 = vmatpush1.msra.mxu0 0.0
      %1305 = vmatprep.subr.mxu0 0.0
      %1306 = vmatpush1.msra.mxu0 0.0
      %1307 = vmatprep.subr.mxu0 0.0
      %1308 = vmatpush1.msra.mxu0 0.0
      %1309 = vmatprep.subr.mxu0 0.0
      %1310 = vmatpush1.msra.mxu0 0.0
      %1311 = vmatprep.subr.mxu0 0.0
      %1312 = vmatpush1.msra.mxu0 0.0
      %1313 = vmatprep.subr.mxu0 0.0
      %1314 = vmatpush1.msra.mxu0 0.0
      %1315 = vmatprep.subr.mxu0 0.0
      %1316 = vmatpush1.msra.mxu0 0.0
      %1317 = vmatprep.subr.mxu0 0.0
      %1318 = vmatpush1.msra.mxu0 0.0
      %1319 = vmatprep.subr.mxu0 0.0
      %1320 = vmatpush1.msra.mxu0 0.0
      %1321 = vmatprep.subr.mxu0 0.0
      %1322 = vmatpush1.msra.mxu0 0.0
      %1323 = vmatprep.subr.mxu0 0.0
      %1324 = vmatpush1.msra.mxu0 0.0
      %1325 = vmatprep.subr.mxu0 0.0
      %1326 = vmatpush1.msra.mxu0 0.0
      %1327 = vmatprep.subr.mxu0 0.0
      %1328 = vmatpush1.msra.mxu0 %v523
      %1329 = vmatprep.subr.mxu0 0.0
      %1330 = vmatpush2.msra.mxu0 0.0
      %1331 = vmatprep.subr.mxu0 0.0
      %1332 = vmatpush2.msra.mxu0 0.0
      %1333 = vmatprep.subr.mxu0 0.0
      %1334 = vmatpush2.msra.mxu0 0.0
      %1335 = vmatprep.subr.mxu0 0.0
      %1336 = vmatpush2.msra.mxu0 0.0
      %1337 = vmatprep.subr.mxu0 0.0
      %1338 = vmatpush2.msra.mxu0 0.0
      %1339 = vmatprep.subr.mxu0 0.0
      %1340 = vmatpush2.msra.mxu0 0.0
      %1341 = vmatprep.subr.mxu0 0.0
      %1342 = vmatpush2.msra.mxu0 0.0
      %1343 = vmatprep.subr.mxu0 0.0
      %1344 = vmatpush2.msra.mxu0 0.0
      %1345 = vmatprep.subr.mxu0 0.0
      %1346 = vmatpush2.msra.mxu0 0.0
      %1347 = vmatprep.subr.mxu0 0.0
      %1348 = vmatpush2.msra.mxu0 0.0
      %1349 = vmatprep.subr.mxu0 0.0
      %1350 = vmatpush2.msra.mxu0 0.0
      %1351 = vmatprep.subr.mxu0 0.0
      %1352 = vmatpush2.msra.mxu0 0.0
      %1353 = vmatprep.subr.mxu0 0.0
      %1354 = vmatpush2.msra.mxu0 0.0
      %1355 = vmatprep.subr.mxu0 0.0
      %1356 = vmatpush2.msra.mxu0 0.0
      %1357 = vmatprep.subr.mxu0 0.0
      %1358 = vmatpush2.msra.mxu0 0.0
      %1359 = vmatprep.subr.mxu0 0.0
      %1360 = vmatpush2.msra.mxu0 0.0
      %1361 = vmatprep.mubr.f32.mxu0 0.0
      %1362 = vmatmul.mubr.f32.gmra.mxu0 %v1289
      %v1363 = vpop.f32.mrf.mxu0
      %v1364 = vadd.f32 %v830, %v1363
      %v1365 = vpop.f32.mrf.mxu0
      %1366 = vmatprep.mubr.f32.mxu0 0.0
      %1367 = vmatmul.mubr.f32.gmra.mxu0 %v1292
      %v1368 = vpop.f32.mrf.mxu0
      %v1369 = vadd.f32 %v830, %v1368
      %v1370 = vpop.f32.mrf.mxu0
      %1371 = vmatprep.mubr.f32.mxu0 0.0
      %1372 = vmatmul.mubr.f32.gmra.mxu0 %v1295
      %v1373 = vpop.f32.mrf.mxu0
      %v1374 = vadd.f32 %v830, %v1373
      %v1375 = vpop.f32.mrf.mxu0
      %1376 = vdwg.mxu0
      %v1377 = vmul.f32 %v1364, -3.0
      %v1378 = vmul.f32 %v1369, -3.0
      %v1379 = vmul.f32 %v1374, -3.0
      %v1380 = vmul.f32 %v1377, 1.442695
      %v1381 = vpow.pop %v1380
      %v1382 = vmul.f32 %v1378, 1.442695
      %v1383 = vpow.pop %v1382
      %v1384 = vmul.f32 %v1379, 1.442695
      %v1385 = vpow.pop %v1384
      %v1386 = vadd.f32 %v1381, 1.0
      %v1387 = vadd.f32 %v1383, 1.0
      %v1388 = vadd.f32 %v1385, 1.0
      %v1389 = vrcp.pop %v1386
      %v1390 = vmul.f32 1.0, %v1389
      %v1391 = vrcp.pop %v1387
      %v1392 = vmul.f32 1.0, %v1391
      %v1393 = vrcp.pop %v1388
      %v1394 = vmul.f32 1.0, %v1393
      %1395 = vmatprep.subr.mxu0 0.0
      %1396 = vmatpush1.msra.mxu0 0.0
      %1397 = vmatprep.subr.mxu0 0.0
      %1398 = vmatpush1.msra.mxu0 0.0
      %1399 = vmatprep.subr.mxu0 0.0
      %1400 = vmatpush1.msra.mxu0 0.0
      %1401 = vmatprep.subr.mxu0 0.0
      %1402 = vmatpush1.msra.mxu0 0.0
      %1403 = vmatprep.subr.mxu0 0.0
      %1404 = vmatpush1.msra.mxu0 0.0
      %1405 = vmatprep.subr.mxu0 0.0
      %1406 = vmatpush1.msra.mxu0 0.0
      %1407 = vmatprep.subr.mxu0 0.0
      %1408 = vmatpush1.msra.mxu0 0.0
      %1409 = vmatprep.subr.mxu0 0.0
      %1410 = vmatpush1.msra.mxu0 0.0
      %1411 = vmatprep.subr.mxu0 0.0
      %1412 = vmatpush1.msra.mxu0 0.0
      %1413 = vmatprep.subr.mxu0 0.0
      %1414 = vmatpush1.msra.mxu0 0.0
      %1415 = vmatprep.subr.mxu0 0.0
      %1416 = vmatpush1.msra.mxu0 0.0
      %1417 = vmatprep.subr.mxu0 0.0
      %1418 = vmatpush1.msra.mxu0 0.0
      %1419 = vmatprep.subr.mxu0 0.0
      %1420 = vmatpush1.msra.mxu0 0.0
      %1421 = vmatprep.subr.mxu0 0.0
      %1422 = vmatpush1.msra.mxu0 0.0
      %1423 = vmatprep.subr.mxu0 0.0
      %1424 = vmatpush1.msra.mxu0 0.0
      %1425 = vmatprep.subr.mxu0 0.0
      %1426 = vmatpush1.msra.mxu0 %v525
      %1427 = vmatprep.subr.mxu0 0.0
      %1428 = vmatpush2.msra.mxu0 0.0
      %1429 = vmatprep.subr.mxu0 0.0
      %1430 = vmatpush2.msra.mxu0 0.0
      %1431 = vmatprep.subr.mxu0 0.0
      %1432 = vmatpush2.msra.mxu0 0.0
      %1433 = vmatprep.subr.mxu0 0.0
      %1434 = vmatpush2.msra.mxu0 0.0
      %1435 = vmatprep.subr.mxu0 0.0
      %1436 = vmatpush2.msra.mxu0 0.0
      %1437 = vmatprep.subr.mxu0 0.0
      %1438 = vmatpush2.msra.mxu0 0.0
      %1439 = vmatprep.subr.mxu0 0.0
      %1440 = vmatpush2.msra.mxu0 0.0
      %1441 = vmatprep.subr.mxu0 0.0
      %1442 = vmatpush2.msra.mxu0 0.0
      %1443 = vmatprep.subr.mxu0 0.0
      %1444 = vmatpush2.msra.mxu0 0.0
      %1445 = vmatprep.subr.mxu0 0.0
      %1446 = vmatpush2.msra.mxu0 0.0
      %1447 = vmatprep.subr.mxu0 0.0
      %1448 = vmatpush2.msra.mxu0 0.0
      %1449 = vmatprep.subr.mxu0 0.0
      %1450 = vmatpush2.msra.mxu0 0.0
      %1451 = vmatprep.subr.mxu0 0.0
      %1452 = vmatpush2.msra.mxu0 0.0
      %1453 = vmatprep.subr.mxu0 0.0
      %1454 = vmatpush2.msra.mxu0 0.0
      %1455 = vmatprep.subr.mxu0 0.0
      %1456 = vmatpush2.msra.mxu0 0.0
      %1457 = vmatprep.subr.mxu0 0.0
      %1458 = vmatpush2.msra.mxu0 0.0
      %1459 = vmatprep.mubr.f32.mxu0 0.0
      %1460 = vmatmul.mubr.f32.gmra.mxu0 %v1289
      %v1461 = vpop.f32.mrf.mxu0
      %v1462 = vadd.f32 %v943, %v1461
      %v1463 = vpop.f32.mrf.mxu0
      %1464 = vmatprep.mubr.f32.mxu0 0.0
      %1465 = vmatmul.mubr.f32.gmra.mxu0 %v1292
      %v1466 = vpop.f32.mrf.mxu0
      %v1467 = vadd.f32 %v943, %v1466
      %v1468 = vpop.f32.mrf.mxu0
      %1469 = vmatprep.mubr.f32.mxu0 0.0
      %1470 = vmatmul.mubr.f32.gmra.mxu0 %v1295
      %v1471 = vpop.f32.mrf.mxu0
      %v1472 = vadd.f32 %v943, %v1471
      %v1473 = vpop.f32.mrf.mxu0
      %1474 = vdwg.mxu0
      %s1475 = scalar_lea.vmem %s481, 24
      %v1476 = vld [vmem:[%s1475] sm:$0xff]
      %v1477 = vld [vmem:[%s1475 + $0x8] sm:$0xff]
      %v1478 = vld [vmem:[%s1475 + $0x10] sm:$0x1]
      %v1479 = vmul.f32 %v1390, %v1476
      %v1480 = vmul.f32 %v1392, %v1477
      %v1481 = vmul.f32 %v1394, %v1478
      %v1482 = vsub.f32 1.0, %v1390
      %v1483 = vsub.f32 1.0, %v1392
      %v1484 = vsub.f32 1.0, %v1394
      %v1485 = vmul.f32 %v1482, %v1462
      %v1486 = vmul.f32 %v1483, %v1467
      %v1487 = vmul.f32 %v1484, %v1472
      %v1488 = vadd.f32 %v1479, %v1485
      %v1489 = vadd.f32 %v1480, %v1486
      %v1490 = vadd.f32 %v1481, %v1487
      %s1491 = scalar_lea.vmem %s503, 24
      %1492 = vst.msk [vmem:[%s1491] sm:$0xff] %vm1040, %v1488
      %1493 = vst.msk [vmem:[%s1491 + $0x8] sm:$0xff] %vm1040, %v1489
      %1494 = vst.msk [vmem:[%s1491 + $0x10] sm:$0x1] %vm1043, %v1490
      %s1495 = smul.u32 2, %s27
      %p1496 = scmp.lt.s32.totalorder %s26, 1
      %s1497 = scalar_select %p1496, %s26, 1
      %p1498 = scmp.lt.s32.totalorder %s1495, 33
      %s1499 = scalar_select %p1498, %s1495, 33
      %s1500 = smul.addr %s1499, 3
      %s1501 = smul.addr %s1497, 102
      %s1502 = sadd.s32 %s1500, %s1501
      %s1503 = smul.addr %s1502, 8
      %s1504 = scalar_lea.vmem %s9, %s1503
      %s1505 = smul.u32 2, %s27
      %p1506 = scmp.lt.s32.totalorder %s26, 1
      %s1507 = scalar_select %p1506, %s26, 1
      %p1508 = scmp.lt.s32.totalorder %s1505, 33
      %s1509 = scalar_select %p1508, %s1505, 33
      %s1510 = smul.addr %s1509, 3
      %s1511 = smul.addr %s1507, 102
      %s1512 = sadd.s32 %s1510, %s1511
      %s1513 = smul.addr %s1512, 8
      %s1514 = scalar_lea.vmem %s10, %s1513
      // Predicated region
      $region57: #{deconv_decoder_forward.3} parent=55 // pred_check
        %p1515 = pneg %p266
      $region58: #{deconv_decoder_forward.3} parent=55 // pred_check_branch
        %1517 = sbr.rel (%p1515) target = $region60
      $region59: #{deconv_decoder_forward.3} parent=55 // pred_region
        %s1518 = smul.u32 2, %s27
      $region60: #{deconv_decoder_forward.3} parent=55 // pred_fallthru
        _
      // Predicated region
      $region61: #{deconv_decoder_forward.3} parent=55 // pred_check
        %p1519 = pneg %p294
      $region62: #{deconv_decoder_forward.3} parent=55 // pred_check_branch
        %1521 = sbr.rel (%p1519) target = $region64
      $region63: #{deconv_decoder_forward.3} parent=55 // pred_region
        %s1522 = smul.u32 2, %s27
      $region64: #{deconv_decoder_forward.3} parent=55 // pred_fallthru
        _
    $region56: #{deconv_decoder_forward.3} parent=5 // pred_fallthru
      _
    %p1523 = scmp.le.s32.totalorder 2, %s17
    // Predicated region
    $region65: #{deconv_decoder_forward.3} parent=5 // pred_check
      %p1524 = pneg %p1523
    $region66: #{deconv_decoder_forward.3} parent=5 // pred_check_branch
      %1526 = sbr.rel (%p1524) target = $region68
    $region67: #{deconv_decoder_forward.3} parent=5 // pred_region
      %s1527 = ssub.s32 %s17, 2
      // Predicated region
      $region69: #{deconv_decoder_forward.3} parent=67 // pred_check
        %p1528 = pneg %p272
      $region70: #{deconv_decoder_forward.3} parent=67 // pred_check_branch
        %1530 = sbr.rel (%p1528) target = $region72
      $region71: #{deconv_decoder_forward.3} parent=67 // pred_region
        %s1531 = smul.u32 2, %s29
        %p1532 = scmp.lt.s32.totalorder %s28, 1
        %s1533 = scalar_select %p1532, %s28, 1
        %p1534 = scmp.lt.s32.totalorder %s1531, 33
        %s1535 = scalar_select %p1534, %s1531, 33
        %s1536 = smul.addr %s1535, 3
        %s1537 = smul.addr %s1533, 102
        %s1538 = sadd.s32 %s1536, %s1537
        %s1539 = smul.addr %s1538, 8
        %s1540 = scalar_lea.vmem %s9, %s1539
      $region72: #{deconv_decoder_forward.3} parent=67 // pred_fallthru
        _
      // Predicated region
      $region73: #{deconv_decoder_forward.3} parent=67 // pred_check
        %p1541 = pneg %p300
      $region74: #{deconv_decoder_forward.3} parent=67 // pred_check_branch
        %1543 = sbr.rel (%p1541) target = $region76
      $region75: #{deconv_decoder_forward.3} parent=67 // pred_region
        %s1544 = smul.u32 2, %s29
        %p1545 = scmp.lt.s32.totalorder %s28, 1
        %s1546 = scalar_select %p1545, %s28, 1
        %p1547 = scmp.lt.s32.totalorder %s1544, 33
        %s1548 = scalar_select %p1547, %s1544, 33
        %s1549 = smul.addr %s1548, 3
        %s1550 = smul.addr %s1546, 102
        %s1551 = sadd.s32 %s1549, %s1550
        %s1552 = smul.addr %s1551, 8
        %s1553 = scalar_lea.vmem %s10, %s1552
      $region76: #{deconv_decoder_forward.3} parent=67 // pred_fallthru
        _
    $region68: #{deconv_decoder_forward.3} parent=5 // pred_fallthru
      _
  $region6: #{deconv_decoder_forward.3} parent=0 // loop_footer
    %s21 = sadd.s32 1, %s17
  $region7: #{deconv_decoder_forward.3} parent=0 // loop_footer_branch
    %16 = sbr.rel target = $region3
  $region8: #{deconv_decoder_forward.3} parent=0 // loop_exit
    _

</llo_original>
